<compile_context>
chip_gen: v7x
topology: tpu7x:2x2x1
jax: 0.10.0
libtpu: 0.0.40
codegen_flags: <defaults>
</compile_context>

<pallas_src>
import functools
import math

import jax
import jax.numpy as jnp
from jax.experimental import pallas as pl
from jax.experimental.pallas import tpu as pltpu

OUT_PAD = 128          # lane-dense padded width of the final 2-wide output
LN_EPS = 1e-5          # torch.nn.LayerNorm default


def _round_up(x, m):
    return ((x + m - 1) // m) * m


# ---------------------------------------------------------------------------
# Constants / shared math
# ---------------------------------------------------------------------------
def positional_encoding(T, d_model):
    position = jnp.arange(T, dtype=jnp.float32)[:, None]
    div_term = jnp.exp(jnp.arange(0, d_model, 2, dtype=jnp.float32) *
                       (-math.log(10000.0) / d_model))
    ang = position * div_term
    pe = jnp.zeros((T, d_model), jnp.float32)
    pe = pe.at[:, 0::2].set(jnp.sin(ang))
    pe = pe.at[:, 1::2].set(jnp.cos(ang))
    return pe


def _layer_norm(x, w, b, eps=LN_EPS):
    mean = jnp.mean(x, axis=-1, keepdims=True)
    var = jnp.mean(jnp.square(x - mean), axis=-1, keepdims=True)
    return (x - mean) * jax.lax.rsqrt(var + eps) * w + b


# ---------------------------------------------------------------------------
# Parameter init (canonical f32 params, mirrors the PyTorch module)
# ---------------------------------------------------------------------------
def _linear_params(key, fan_in, fan_out, *, bias=True):
    bound = 1.0 / math.sqrt(fan_in)
    kw, kb = jax.random.split(key)
    w = jax.random.uniform(kw, (fan_in, fan_out), jnp.float32, -bound, bound)
    if not bias:
        return w
    b = jax.random.uniform(kb, (1, fan_out), jnp.float32, -bound, bound)
    return w, b


def init_concat_squash(key, dim_in, dim_out, dim_ctx):
    k1, k2, k3 = jax.random.split(key, 3)
    wl, bl = _linear_params(k1, dim_in, dim_out)
    wg, bg = _linear_params(k2, dim_ctx, dim_out)
    wb = _linear_params(k3, dim_ctx, dim_out, bias=False)   # hyper_bias: no bias
    return dict(wl=wl, bl=bl, wg=wg, bg=bg, wb=wb)


def init_encoder_layer(key, d_model, dim_ff):
    k = jax.random.split(key, 4)
    wqkv, bqkv = _linear_params(k[0], d_model, 3 * d_model)
    wo, bo = _linear_params(k[1], d_model, d_model)
    w1, b1 = _linear_params(k[2], d_model, dim_ff)
    w2, b2 = _linear_params(k[3], dim_ff, d_model)
    ones = jnp.ones((1, d_model), jnp.float32)
    zeros = jnp.zeros((1, d_model), jnp.float32)
    return dict(wqkv=wqkv, bqkv=bqkv, wo=wo, bo=bo,
                ln1w=ones, ln1b=zeros, w1=w1, b1=b1, w2=w2, b2=b2,
                ln2w=ones, ln2b=zeros)


def init_model(key, point_dim, context_dim, tf_layer):
    d_model = 2 * context_dim
    ctx_dim = context_dim + 3
    keys = jax.random.split(key, 4 + tf_layer)
    return dict(
        concat1=init_concat_squash(keys[0], point_dim, d_model, ctx_dim),
        concat3=init_concat_squash(keys[1], d_model, context_dim, ctx_dim),
        concat4=init_concat_squash(keys[2], context_dim, context_dim // 2, ctx_dim),
        linear=init_concat_squash(keys[3], context_dim // 2, point_dim, ctx_dim),
        encoder=[init_encoder_layer(keys[4 + i], d_model, 4 * context_dim)
                 for i in range(tf_layer)],
    )


# ---------------------------------------------------------------------------
# One-time parameter preparation (bf16 cast, head-aligned packing, stacking)
# ---------------------------------------------------------------------------
def _pack_qkv_heads(wqkv, bqkv, nhead, hp):
    """(D,3D)/(1,3D) -> (D, nhead*3*hp)/(1, nhead*3*hp); per head [Qh|Kh|Vh],
    each zero-padded from hd to hp (128-aligned) lanes."""
    D = wqkv.shape[0]
    hd = D // nhead
    ws, bs = [], []
    for h in range(nhead):
        for part in range(3):                     # q, k, v of head h
            c0 = part * D + h * hd
            ws.append(jnp.pad(wqkv[:, c0:c0 + hd], ((0, 0), (0, hp - hd))))
            bs.append(jnp.pad(bqkv[:, c0:c0 + hd], ((0, 0), (0, hp - hd))))
    return jnp.concatenate(ws, axis=1), jnp.concatenate(bs, axis=1)


def _pack_wo_heads(wo, nhead, hp):
    """(D,D) -> (nhead*hp, D): per-head row blocks zero-padded to hp rows."""
    D = wo.shape[0]
    hd = D // nhead
    blocks = [jnp.pad(wo[h * hd:(h + 1) * hd, :], ((0, hp - hd), (0, 0)))
              for h in range(nhead)]
    return jnp.concatenate(blocks, axis=0)


def prepare_params(params, *, nhead=4, matmul_dtype=jnp.bfloat16):
    md = matmul_dtype
    d_model = params["concat1"]["wl"].shape[1]
    ctx_dim = params["concat1"]["wg"].shape[0]
    point_dim = params["concat1"]["wl"].shape[0]
    hd = d_model // nhead
    hp = _round_up(hd, 128)

    def cs(p, pad_to=None):
        out = {}
        for k in ("wl", "bl", "wg", "bg", "wb"):
            a = p[k].astype(jnp.float32)
            if pad_to is not None:
                a = jnp.pad(a, ((0, 0), (0, pad_to - a.shape[1])))
            out[k] = a.astype(md) if k in ("wl", "wg", "wb") else a
        return out

    keys = ("wqkv", "bqkv", "wo", "bo", "ln1w", "ln1b",
            "w1", "b1", "w2", "b2", "ln2w", "ln2b")
    stacked = {k: [] for k in keys}
    for lp in params["encoder"]:
        wqkv_p, bqkv_p = _pack_qkv_heads(lp["wqkv"], lp["bqkv"], nhead, hp)
        stacked["wqkv"].append(wqkv_p.astype(md))
        stacked["bqkv"].append(bqkv_p.astype(jnp.float32))
        stacked["wo"].append(_pack_wo_heads(lp["wo"], nhead, hp).astype(md))
        stacked["bo"].append(lp["bo"].astype(jnp.float32))
        stacked["ln1w"].append(lp["ln1w"])
        stacked["ln1b"].append(lp["ln1b"])
        stacked["w1"].append(lp["w1"].astype(md))
        stacked["b1"].append(lp["b1"].astype(jnp.float32))
        stacked["w2"].append(lp["w2"].astype(md))
        stacked["b2"].append(lp["b2"].astype(jnp.float32))
        stacked["ln2w"].append(lp["ln2w"])
        stacked["ln2b"].append(lp["ln2b"])
    encoder = {k: jnp.stack(v, axis=0) for k, v in stacked.items()}

    return dict(
        concat1=cs(params["concat1"]),
        concat3=cs(params["concat3"]),
        concat4=cs(params["concat4"]),
        linear=cs(params["linear"], pad_to=OUT_PAD),
        encoder=encoder,
        d_model=d_model, ctx_dim=ctx_dim, point_dim=point_dim,
        nhead=nhead, hd=hd, hp=hp,
        num_layers=len(params["encoder"]),
        matmul_dtype=md,
    )


# ---------------------------------------------------------------------------
# Fully fused forward kernel: grid=(tf_layer,), activation resident in VMEM
# ---------------------------------------------------------------------------
def _fused_forward_kernel(nhead, hp, hd, n_valid, m_pad, matmul_dtype, *refs):
    (x_ref, ctx_ref, pe_ref,
     c1_wl, c1_bl, c1_wg, c1_bg, c1_wb,
     c3_wl, c3_bl, c3_wg, c3_bg, c3_wb,
     c4_wl, c4_bl, c4_wg, c4_bg, c4_wb,
     c5_wl, c5_bl, c5_wg, c5_bg, c5_wb,
     wqkv_ref, bqkv_ref, wo_ref, bo_ref, ln1w_ref, ln1b_ref,
     w1_ref, b1_ref, w2_ref, b2_ref, ln2w_ref, ln2b_ref,
     out_ref, h_ref) = refs

    md = matmul_dtype
    l = pl.program_id(0)

    def cs(x, ctx, wl, bl, wg, bg, wb):
        # (x @ Wl + bl) * sigmoid(ctx @ Wg + bg) + ctx @ Wb   (f32 elementwise)
        xw = jnp.dot(x.astype(md), wl[...],
                     preferred_element_type=jnp.float32) + bl[...]
        gate = jax.nn.sigmoid(
            jnp.dot(ctx.astype(md), wg[...],
                    preferred_element_type=jnp.float32) + bg[...])
        hyper_bias = jnp.dot(ctx.astype(md), wb[...],
                             preferred_element_type=jnp.float32)
        return xw * gate + hyper_bias

    ctx = ctx_ref[...]                               # (Mp, Cctx) f32

    # --- first grid step: concat1 + positional encoding -> resident h ------
    @pl.when(l == 0)
    def _():
        h_ref[...] = cs(x_ref[...], ctx,
                        c1_wl, c1_bl, c1_wg, c1_bg, c1_wb) + pe_ref[...]

    # --- one post-norm transformer encoder layer (weights of layer l) ------
    x = h_ref[...]                                   # (Mp, D) f32
    qkv = jnp.dot(x.astype(md), wqkv_ref[...],
                  preferred_element_type=jnp.float32) + bqkv_ref[...]

    scale = 1.0 / math.sqrt(hd)
    if m_pad != n_valid:                             # static: mask padded keys
        col = jax.lax.broadcasted_iota(jnp.int32, (1, m_pad), 1)
        key_bias = jnp.where(col < n_valid, 0.0, -1e9).astype(jnp.float32)
    else:
        key_bias = None

    heads = []
    for h in range(nhead):                           # 128-lane-aligned slices
        base = 3 * hp * h
        qh = (qkv[:, base:base + hp] * scale).astype(md)
        kh = qkv[:, base + hp:base + 2 * hp].astype(md)
        vh = qkv[:, base + 2 * hp:base + 3 * hp].astype(md)
        s = jax.lax.dot_general(qh, kh, (((1,), (1,)), ((), ())),
                                preferred_element_type=jnp.float32)   # (Mp,Mp)
        if key_bias is not None:
            s = s + key_bias
        s = s - jnp.max(s, axis=-1, keepdims=True)
        p = jnp.exp(s)
        p = p * pl.reciprocal(jnp.sum(p, axis=-1, keepdims=True), approx=True)
        heads.append(jnp.dot(p.astype(md), vh,
                             preferred_element_type=jnp.float32))     # (Mp,hp)
    attn = jnp.dot(jnp.concatenate(heads, axis=-1).astype(md), wo_ref[...],
                   preferred_element_type=jnp.float32) + bo_ref[...]

    x = _layer_norm(x + attn, ln1w_ref[...], ln1b_ref[...])
    h1 = jnp.maximum(
        jnp.dot(x.astype(md), w1_ref[...],
                preferred_element_type=jnp.float32) + b1_ref[...], 0.0)
    h2 = jnp.dot(h1.astype(md), w2_ref[...],
                 preferred_element_type=jnp.float32) + b2_ref[...]
    x = _layer_norm(x + h2, ln2w_ref[...], ln2b_ref[...])
    h_ref[...] = x

    # --- last grid step: concat3 -> concat4 -> final (lane-dense) linear ---
    @pl.when(l == pl.num_programs(0) - 1)
    def _():
        t = cs(x, ctx, c3_wl, c3_bl, c3_wg, c3_bg, c3_wb)
        t = cs(t, ctx, c4_wl, c4_bl, c4_wg, c4_bg, c4_wb)
        t = cs(t, ctx, c5_wl, c5_bl, c5_wg, c5_bg, c5_wb)
        out_ref[...] = t.astype(out_ref.dtype)


def forward_pallas(prep, x, beta, context):
    """x: (N, T, 2), beta: (N,), context: (N, context_dim) -> (N, T, 2)."""
    # TODO(synk): the `mask is not None` attention-mask branch of the original
    # forward is not implemented (mask=None path only).
    N, T, point_dim = x.shape
    M = N * T
    Mp = _round_up(max(M, 8), 8)
    D = prep["d_model"]
    Cctx = prep["ctx_dim"]

    beta = beta.reshape(N, 1).astype(jnp.float32)
    ctx_emb = jnp.concatenate(
        [beta, jnp.sin(beta), jnp.cos(beta),
         context.reshape(N, -1).astype(jnp.float32)], axis=-1)        # (N,Cctx)

    # Build all token tensors TIME-MAJOR (== the reshape(T*N, 1, D) joint
    # sequence fed to the PyTorch encoder) -> no transposes around the
    # transformer.
    ctx_tok = jnp.broadcast_to(ctx_emb[None], (T, N, Cctx)).reshape(M, Cctx)
    x_tok = x.astype(jnp.float32).transpose(1, 0, 2).reshape(M, point_dim)
    pe_tok = jnp.broadcast_to(positional_encoding(T, D)[:, None, :],
                              (T, N, D)).reshape(M, D)

    if Mp != M:                                      # pad ragged token counts
        padr = ((0, Mp - M), (0, 0))
        x_tok = jnp.pad(x_tok, padr)
        ctx_tok = jnp.pad(ctx_tok, padr)
        pe_tok = jnp.pad(pe_tok, padr)

    inputs = [x_tok, ctx_tok, pe_tok]
    in_specs = [pl.BlockSpec(a.shape, lambda l: (0, 0)) for a in inputs]
    for name in ("concat1", "concat3", "concat4", "linear"):
        for k in ("wl", "bl", "wg", "bg", "wb"):
            a = prep[name][k]
            inputs.append(a)
            in_specs.append(pl.BlockSpec(a.shape, lambda l: (0, 0)))
    for k in ("wqkv", "bqkv", "wo", "bo", "ln1w", "ln1b",
              "w1", "b1", "w2", "b2", "ln2w", "ln2b"):
        a = prep["encoder"][k]                       # (L, rows, cols)
        inputs.append(a)
        in_specs.append(pl.BlockSpec((None, a.shape[1], a.shape[2]),
                                     lambda l: (l, 0, 0)))

    out = pl.pallas_call(
        functools.partial(_fused_forward_kernel, prep["nhead"], prep["hp"],
                          prep["hd"], M, Mp, prep["matmul_dtype"]),
        out_shape=jax.ShapeDtypeStruct((Mp, OUT_PAD), jnp.float32),
        grid_spec=pltpu.PrefetchScalarGridSpec(
            num_scalar_prefetch=0,
            grid=(prep["num_layers"],),
            in_specs=in_specs,
            out_specs=pl.BlockSpec((Mp, OUT_PAD), lambda l: (0, 0)),
            scratch_shapes=[pltpu.VMEM((Mp, D), jnp.float32)],
        ),
        compiler_params=pltpu.CompilerParams(
            dimension_semantics=("arbitrary",),
        ),
    )(*inputs)

    # time-major tokens -> (N, T, point_dim)
    return out[:M, :point_dim].reshape(T, N, point_dim).transpose(1, 0, 2)


# ---------------------------------------------------------------------------
# Pure-JAX reference (matches PyTorch semantics; casts matmul operands like
# the kernel so bf16 runs are compared apples-to-apples)
# ---------------------------------------------------------------------------
def _ref_dot(a, b, md):
    return jnp.dot(a.astype(md), b.astype(md), preferred_element_type=jnp.float32)


def _ref_concat_squash(x, ctx, p, md):
    xw = _ref_dot(x, p["wl"], md) + p["bl"]
    gate = jax.nn.sigmoid(_ref_dot(ctx, p["wg"], md) + p["bg"])
    return xw * gate + _ref_dot(ctx, p["wb"], md)


def _ref_encoder_layer(x, p, nhead, md):
    S, D = x.shape
    hd = D // nhead
    scale = 1.0 / math.sqrt(hd)
    qkv = _ref_dot(x, p["wqkv"], md) + p["bqkv"]
    q, k, v = qkv[:, :D], qkv[:, D:2 * D], qkv[:, 2 * D:]
    heads = []
    for h in range(nhead):
        sl = slice(h * hd, (h + 1) * hd)
        s = jnp.dot((q[:, sl] * scale).astype(md), k[:, sl].astype(md).T,
                    preferred_element_type=jnp.float32)
        heads.append(_ref_dot(jax.nn.softmax(s, axis=-1), v[:, sl], md))
    attn = _ref_dot(jnp.concatenate(heads, axis=-1), p["wo"], md) + p["bo"]
    x = _layer_norm(x + attn, p["ln1w"], p["ln1b"])
    h1 = jnp.maximum(_ref_dot(x, p["w1"], md) + p["b1"], 0.0)
    h2 = _ref_dot(h1, p["w2"], md) + p["b2"]
    return _layer_norm(x + h2, p["ln2w"], p["ln2b"])


def forward_reference(params, x, beta, context, *, nhead=4,
                      matmul_dtype=jnp.float32):
    N, T, point_dim = x.shape
    context_dim = context.shape[-1]
    d_model = 2 * context_dim
    M = N * T
    md = matmul_dtype

    beta = beta.reshape(N, 1, 1).astype(jnp.float32)
    time_emb = jnp.concatenate([beta, jnp.sin(beta), jnp.cos(beta)], axis=-1)
    ctx_emb = jnp.concatenate(
        [time_emb, context.reshape(N, 1, -1).astype(jnp.float32)], axis=-1)
    ctx_tok = jnp.broadcast_to(ctx_emb, (N, T, ctx_emb.shape[-1])).reshape(M, -1)

    x_tok = x.reshape(M, point_dim).astype(jnp.float32)
    h = _ref_concat_squash(x_tok, ctx_tok, params["concat1"], md)

    pe = positional_encoding(T, d_model)
    h = h.reshape(N, T, d_model) + pe[None]
    h = h.transpose(1, 0, 2).reshape(M, d_model)          # time-major sequence
    for lp in params["encoder"]:
        h = _ref_encoder_layer(h, lp, nhead, md)
    h = h.reshape(T, N, d_model).transpose(1, 0, 2).reshape(M, d_model)

    h = _ref_concat_squash(h, ctx_tok, params["concat3"], md)
    h = _ref_concat_squash(h, ctx_tok, params["concat4"], md)
    out = _ref_concat_squash(h, ctx_tok, params["linear"], md)
    return out.reshape(N, T, point_dim)


if __name__ == "__main__":
    key = jax.random.PRNGKey(0)
    point_dim = 2
    context_dim = 32          # -> d_model = 64, ff = 128, ctx dim = 35
    tf_layer = 2
    N, T = 4, 8               # 4 agents x 8 timesteps -> 32 joint tokens

    kp, kx, kb, kc = jax.random.split(key, 4)
    params = init_model(kp, point_dim, context_dim, tf_layer)
    x = jax.random.normal(kx, (N, T, point_dim), jnp.float32)
    beta = jax.random.uniform(kb, (N,), jnp.float32, 0.01, 1.0)
    context = jax.random.normal(kc, (N, context_dim), jnp.float32)

    # f32-operand run: checked against the pure-JAX f32 reference.
    prep_f32 = prepare_params(params, nhead=4, matmul_dtype=jnp.float32)
    out_f32 = jax.block_until_ready(forward_pallas(prep_f32, x, beta, context))
    ref_f32 = forward_reference(params, x, beta, context,
                                matmul_dtype=jnp.float32)
    assert out_f32.shape == (N, T, point_dim), out_f32.shape
    assert jnp.allclose(out_f32, ref_f32, atol=2e-2, rtol=2e-2), (
        float(jnp.max(jnp.abs(out_f32 - ref_f32))))

    # bf16-operand run (recommended MXU config): checked against a reference
    # that casts its matmul operands identically.
    prep_bf16 = prepare_params(params, nhead=4, matmul_dtype=jnp.bfloat16)
    out_bf16 = jax.block_until_ready(forward_pallas(prep_bf16, x, beta, context))
    ref_bf16 = forward_reference(params, x, beta, context,
                                 matmul_dtype=jnp.bfloat16)
    assert bool(jnp.all(jnp.isfinite(out_bf16)))
    assert jnp.allclose(out_bf16, ref_bf16, atol=2e-2, rtol=2e-2), (
        float(jnp.max(jnp.abs(out_bf16 - ref_bf16))))

    print("KERNEL_OK")
</pallas_src>

<mosaic_0001>
module attributes {stable_mosaic.version = 11 : i64} {
  func.func @_fused_forward_kernel(%arg0: i32, %arg1: memref<32x2xf32, #tpu.memory_space<vmem>>, %arg2: memref<32x35xf32, #tpu.memory_space<vmem>>, %arg3: memref<32x64xf32, #tpu.memory_space<vmem>>, %arg4: memref<2x64xf32, #tpu.memory_space<vmem>>, %arg5: memref<1x64xf32, #tpu.memory_space<vmem>>, %arg6: memref<35x64xf32, #tpu.memory_space<vmem>>, %arg7: memref<1x64xf32, #tpu.memory_space<vmem>>, %arg8: memref<35x64xf32, #tpu.memory_space<vmem>>, %arg9: memref<64x32xf32, #tpu.memory_space<vmem>>, %arg10: memref<1x32xf32, #tpu.memory_space<vmem>>, %arg11: memref<35x32xf32, #tpu.memory_space<vmem>>, %arg12: memref<1x32xf32, #tpu.memory_space<vmem>>, %arg13: memref<35x32xf32, #tpu.memory_space<vmem>>, %arg14: memref<32x16xf32, #tpu.memory_space<vmem>>, %arg15: memref<1x16xf32, #tpu.memory_space<vmem>>, %arg16: memref<35x16xf32, #tpu.memory_space<vmem>>, %arg17: memref<1x16xf32, #tpu.memory_space<vmem>>, %arg18: memref<35x16xf32, #tpu.memory_space<vmem>>, %arg19: memref<16x128xf32, #tpu.memory_space<vmem>>, %arg20: memref<1x128xf32, #tpu.memory_space<vmem>>, %arg21: memref<35x128xf32, #tpu.memory_space<vmem>>, %arg22: memref<1x128xf32, #tpu.memory_space<vmem>>, %arg23: memref<35x128xf32, #tpu.memory_space<vmem>>, %arg24: memref<1x64x1536xf32, #tpu.memory_space<vmem>>, %arg25: memref<1x1x1536xf32, #tpu.memory_space<vmem>>, %arg26: memref<1x512x64xf32, #tpu.memory_space<vmem>>, %arg27: memref<1x1x64xf32, #tpu.memory_space<vmem>>, %arg28: memref<1x1x64xf32, #tpu.memory_space<vmem>>, %arg29: memref<1x1x64xf32, #tpu.memory_space<vmem>>, %arg30: memref<1x64x128xf32, #tpu.memory_space<vmem>>, %arg31: memref<1x1x128xf32, #tpu.memory_space<vmem>>, %arg32: memref<1x128x64xf32, #tpu.memory_space<vmem>>, %arg33: memref<1x1x64xf32, #tpu.memory_space<vmem>>, %arg34: memref<1x1x64xf32, #tpu.memory_space<vmem>>, %arg35: memref<1x1x64xf32, #tpu.memory_space<vmem>>, %arg36: memref<32x128xf32, #tpu.memory_space<vmem>>, %arg37: memref<32x64xf32, #tpu.memory_space<vmem>>) attributes {dimension_semantics = [#tpu.dimension_semantics<arbitrary>], iteration_bounds = array<i64: 2>, scalar_prefetch = 0 : i64, scratch_operands = 1 : i64, tpu.core_type = #tpu.core_type<tc>, window_params = [{pipeline_mode = #tpu.pipeline_mode<synchronous>, transform_indices = @transform_0, window_bounds = array<i64: 32, 2>}, {pipeline_mode = #tpu.pipeline_mode<synchronous>, transform_indices = @transform_1, window_bounds = array<i64: 32, 35>}, {pipeline_mode = #tpu.pipeline_mode<synchronous>, transform_indices = @transform_2, window_bounds = array<i64: 32, 64>}, {pipeline_mode = #tpu.pipeline_mode<synchronous>, transform_indices = @transform_3, window_bounds = array<i64: 2, 64>}, {pipeline_mode = #tpu.pipeline_mode<synchronous>, transform_indices = @transform_4, window_bounds = array<i64: 1, 64>}, {pipeline_mode = #tpu.pipeline_mode<synchronous>, transform_indices = @transform_5, window_bounds = array<i64: 35, 64>}, {pipeline_mode = #tpu.pipeline_mode<synchronous>, transform_indices = @transform_6, window_bounds = array<i64: 1, 64>}, {pipeline_mode = #tpu.pipeline_mode<synchronous>, transform_indices = @transform_7, window_bounds = array<i64: 35, 64>}, {pipeline_mode = #tpu.pipeline_mode<synchronous>, transform_indices = @transform_8, window_bounds = array<i64: 64, 32>}, {pipeline_mode = #tpu.pipeline_mode<synchronous>, transform_indices = @transform_9, window_bounds = array<i64: 1, 32>}, {pipeline_mode = #tpu.pipeline_mode<synchronous>, transform_indices = @transform_10, window_bounds = array<i64: 35, 32>}, {pipeline_mode = #tpu.pipeline_mode<synchronous>, transform_indices = @transform_11, window_bounds = array<i64: 1, 32>}, {pipeline_mode = #tpu.pipeline_mode<synchronous>, transform_indices = @transform_12, window_bounds = array<i64: 35, 32>}, {pipeline_mode = #tpu.pipeline_mode<synchronous>, transform_indices = @transform_13, window_bounds = array<i64: 32, 16>}, {pipeline_mode = #tpu.pipeline_mode<synchronous>, transform_indices = @transform_14, window_bounds = array<i64: 1, 16>}, {pipeline_mode = #tpu.pipeline_mode<synchronous>, transform_indices = @transform_15, window_bounds = array<i64: 35, 16>}, {pipeline_mode = #tpu.pipeline_mode<synchronous>, transform_indices = @transform_16, window_bounds = array<i64: 1, 16>}, {pipeline_mode = #tpu.pipeline_mode<synchronous>, transform_indices = @transform_17, window_bounds = array<i64: 35, 16>}, {pipeline_mode = #tpu.pipeline_mode<synchronous>, transform_indices = @transform_18, window_bounds = array<i64: 16, 128>}, {pipeline_mode = #tpu.pipeline_mode<synchronous>, transform_indices = @transform_19, window_bounds = array<i64: 1, 128>}, {pipeline_mode = #tpu.pipeline_mode<synchronous>, transform_indices = @transform_20, window_bounds = array<i64: 35, 128>}, {pipeline_mode = #tpu.pipeline_mode<synchronous>, transform_indices = @transform_21, window_bounds = array<i64: 1, 128>}, {pipeline_mode = #tpu.pipeline_mode<synchronous>, transform_indices = @transform_22, window_bounds = array<i64: 35, 128>}, {transform_indices = @transform_23, window_bounds = array<i64: 1, 64, 1536>}, {transform_indices = @transform_24, window_bounds = array<i64: 1, 1, 1536>}, {transform_indices = @transform_25, window_bounds = array<i64: 1, 512, 64>}, {transform_indices = @transform_26, window_bounds = array<i64: 1, 1, 64>}, {transform_indices = @transform_27, window_bounds = array<i64: 1, 1, 64>}, {transform_indices = @transform_28, window_bounds = array<i64: 1, 1, 64>}, {transform_indices = @transform_29, window_bounds = array<i64: 1, 64, 128>}, {transform_indices = @transform_30, window_bounds = array<i64: 1, 1, 128>}, {transform_indices = @transform_31, window_bounds = array<i64: 1, 128, 64>}, {transform_indices = @transform_32, window_bounds = array<i64: 1, 1, 64>}, {transform_indices = @transform_33, window_bounds = array<i64: 1, 1, 64>}, {transform_indices = @transform_34, window_bounds = array<i64: 1, 1, 64>}, {pipeline_mode = #tpu.pipeline_mode<synchronous>, transform_indices = @transform_35, window_bounds = array<i64: 32, 128>}]} {
    %c0 = arith.constant 0 : index
    %c0_0 = arith.constant 0 : index
    %0 = vector.load %arg2[%c0, %c0_0] : memref<32x35xf32, #tpu.memory_space<vmem>>, vector<32x35xf32>
    %c0_i32 = arith.constant 0 : i32
    %1 = arith.cmpi eq, %arg0, %c0_i32 : i32
    %2 = arith.extui %1 : i1 to i32
    %c0_i32_1 = arith.constant 0 : i32
    %3 = arith.cmpi ne, %2, %c0_i32_1 : i32
    scf.if %3 {
      %c0_77 = arith.constant 0 : index
      %c0_78 = arith.constant 0 : index
      %162 = vector.load %arg1[%c0_77, %c0_78] : memref<32x2xf32, #tpu.memory_space<vmem>>, vector<32x2xf32>
      %c0_79 = arith.constant 0 : index
      %c0_80 = arith.constant 0 : index
      %163 = vector.load %arg4[%c0_79, %c0_80] : memref<2x64xf32, #tpu.memory_space<vmem>>, vector<2x64xf32>
      %cst_81 = arith.constant dense<0.000000e+00> : vector<32x64xf32>
      %164 = tpu.matmul %162, %163, %cst_81 {dimension_numbers = #tpu.dot_dimension_numbers<[1], [0], [0], [1], [0, 0, 1, 1], [], []>} : vector<32x2xf32>, vector<2x64xf32>, vector<32x64xf32> -> vector<32x64xf32>
      %c0_82 = arith.constant 0 : index
      %c0_83 = arith.constant 0 : index
      %165 = vector.load %arg5[%c0_82, %c0_83] : memref<1x64xf32, #tpu.memory_space<vmem>>, vector<1x64xf32>
      %166 = vector.broadcast %165 : vector<1x64xf32> to vector<32x64xf32>
      %167 = arith.addf %164, %166 : vector<32x64xf32>
      %c0_84 = arith.constant 0 : index
      %c0_85 = arith.constant 0 : index
      %168 = vector.load %arg6[%c0_84, %c0_85] : memref<35x64xf32, #tpu.memory_space<vmem>>, vector<35x64xf32>
      %cst_86 = arith.constant dense<0.000000e+00> : vector<32x64xf32>
      %169 = tpu.matmul %0, %168, %cst_86 {dimension_numbers = #tpu.dot_dimension_numbers<[1], [0], [0], [1], [0, 0, 1, 1], [], []>} : vector<32x35xf32>, vector<35x64xf32>, vector<32x64xf32> -> vector<32x64xf32>
      %c0_87 = arith.constant 0 : index
      %c0_88 = arith.constant 0 : index
      %170 = vector.load %arg7[%c0_87, %c0_88] : memref<1x64xf32, #tpu.memory_space<vmem>>, vector<1x64xf32>
      %171 = vector.broadcast %170 : vector<1x64xf32> to vector<32x64xf32>
      %172 = arith.addf %169, %171 : vector<32x64xf32>
      %173 = arith.negf %172 : vector<32x64xf32>
      %174 = math.exp %173 : vector<32x64xf32>
      %cst_89 = arith.constant 1.000000e+00 : f32
      %175 = vector.broadcast %cst_89 : f32 to vector<32x64xf32>
      %176 = arith.addf %175, %174 : vector<32x64xf32>
      %177 = arith.divf %175, %176 : vector<32x64xf32>
      %c0_90 = arith.constant 0 : index
      %c0_91 = arith.constant 0 : index
      %178 = vector.load %arg8[%c0_90, %c0_91] : memref<35x64xf32, #tpu.memory_space<vmem>>, vector<35x64xf32>
      %cst_92 = arith.constant dense<0.000000e+00> : vector<32x64xf32>
      %179 = tpu.matmul %0, %178, %cst_92 {dimension_numbers = #tpu.dot_dimension_numbers<[1], [0], [0], [1], [0, 0, 1, 1], [], []>} : vector<32x35xf32>, vector<35x64xf32>, vector<32x64xf32> -> vector<32x64xf32>
      %180 = arith.mulf %167, %177 : vector<32x64xf32>
      %181 = arith.addf %180, %179 : vector<32x64xf32>
      %c0_93 = arith.constant 0 : index
      %c0_94 = arith.constant 0 : index
      %182 = vector.load %arg3[%c0_93, %c0_94] : memref<32x64xf32, #tpu.memory_space<vmem>>, vector<32x64xf32>
      %183 = arith.addf %181, %182 : vector<32x64xf32>
      %c0_95 = arith.constant 0 : index
      %c0_96 = arith.constant 0 : index
      %184 = vector.load %arg37[%c0_95, %c0_96] : memref<32x64xf32, #tpu.memory_space<vmem>>, vector<32x64xf32>
      tpu.vector_store %arg37[%c0_95, %c0_96], %183 {strides = array<i32>} : memref<32x64xf32, #tpu.memory_space<vmem>>, vector<32x64xf32>,
    } else {
    }
    %c0_2 = arith.constant 0 : index
    %c0_3 = arith.constant 0 : index
    %4 = vector.load %arg37[%c0_2, %c0_3] : memref<32x64xf32, #tpu.memory_space<vmem>>, vector<32x64xf32>
    %c0_4 = arith.constant 0 : index
    %c0_5 = arith.constant 0 : index
    %c0_6 = arith.constant 0 : index
    %5 = vector.load %arg24[%c0_4, %c0_5, %c0_6] : memref<1x64x1536xf32, #tpu.memory_space<vmem>>, vector<1x64x1536xf32>
    %6 = vector.shape_cast %5 : vector<1x64x1536xf32> to vector<64x1536xf32>
    %cst = arith.constant dense<0.000000e+00> : vector<32x1536xf32>
    %7 = tpu.matmul %4, %6, %cst {dimension_numbers = #tpu.dot_dimension_numbers<[1], [0], [0], [1], [0, 0, 1, 1], [], []>} : vector<32x64xf32>, vector<64x1536xf32>, vector<32x1536xf32> -> vector<32x1536xf32>
    %c0_7 = arith.constant 0 : index
    %c0_8 = arith.constant 0 : index
    %c0_9 = arith.constant 0 : index
    %8 = vector.load %arg25[%c0_7, %c0_8, %c0_9] : memref<1x1x1536xf32, #tpu.memory_space<vmem>>, vector<1x1x1536xf32>
    %9 = vector.shape_cast %8 : vector<1x1x1536xf32> to vector<1x1536xf32>
    %10 = vector.broadcast %9 : vector<1x1536xf32> to vector<32x1536xf32>
    %11 = arith.addf %7, %10 : vector<32x1536xf32>
    %12 = vector.extract_strided_slice %11 {offsets = [0, 0], sizes = [32, 128], strides = [1, 1]} : vector<32x1536xf32> to vector<32x128xf32>
    %cst_10 = arith.constant 2.500000e-01 : f32
    %13 = vector.broadcast %cst_10 : f32 to vector<32x128xf32>
    %14 = arith.mulf %12, %13 : vector<32x128xf32>
    %15 = vector.extract_strided_slice %11 {offsets = [0, 128], sizes = [32, 128], strides = [1, 1]} : vector<32x1536xf32> to vector<32x128xf32>
    %16 = vector.extract_strided_slice %11 {offsets = [0, 256], sizes = [32, 128], strides = [1, 1]} : vector<32x1536xf32> to vector<32x128xf32>
    %cst_11 = arith.constant dense<0.000000e+00> : vector<32x32xf32>
    %17 = tpu.matmul %14, %15, %cst_11 {dimension_numbers = #tpu.dot_dimension_numbers<[1], [1], [0], [0], [0, 0, 1, 0], [], []>} : vector<32x128xf32>, vector<32x128xf32>, vector<32x32xf32> -> vector<32x32xf32>
    %cst_12 = arith.constant dense<0xFF800000> : vector<32xf32>
    %18 = vector.multi_reduction <maximumf>, %17, %cst_12 [1] : vector<32x32xf32> to vector<32xf32>
    %19 = vector.shape_cast %18 : vector<32xf32> to vector<32x1xf32>
    %20 = vector.broadcast %19 : vector<32x1xf32> to vector<32x32xf32>
    %21 = arith.subf %17, %20 : vector<32x32xf32>
    %22 = math.exp %21 : vector<32x32xf32>
    %cst_13 = arith.constant dense<0.000000e+00> : vector<32xf32>
    %23 = vector.multi_reduction <add>, %22, %cst_13 [1] : vector<32x32xf32> to vector<32xf32>
    %24 = vector.shape_cast %23 : vector<32xf32> to vector<32x1xf32>
    %25 = tpu.reciprocal %24 {approx = true} : vector<32x1xf32> -> vector<32x1xf32>
    %26 = vector.broadcast %25 : vector<32x1xf32> to vector<32x32xf32>
    %27 = arith.mulf %22, %26 : vector<32x32xf32>
    %cst_14 = arith.constant dense<0.000000e+00> : vector<32x128xf32>
    %28 = tpu.matmul %27, %16, %cst_14 {dimension_numbers = #tpu.dot_dimension_numbers<[1], [0], [0], [1], [0, 0, 1, 1], [], []>} : vector<32x32xf32>, vector<32x128xf32>, vector<32x128xf32> -> vector<32x128xf32>
    %29 = vector.extract_strided_slice %11 {offsets = [0, 384], sizes = [32, 128], strides = [1, 1]} : vector<32x1536xf32> to vector<32x128xf32>
    %cst_15 = arith.constant 2.500000e-01 : f32
    %30 = vector.broadcast %cst_15 : f32 to vector<32x128xf32>
    %31 = arith.mulf %29, %30 : vector<32x128xf32>
    %32 = vector.extract_strided_slice %11 {offsets = [0, 512], sizes = [32, 128], strides = [1, 1]} : vector<32x1536xf32> to vector<32x128xf32>
    %33 = vector.extract_strided_slice %11 {offsets = [0, 640], sizes = [32, 128], strides = [1, 1]} : vector<32x1536xf32> to vector<32x128xf32>
    %cst_16 = arith.constant dense<0.000000e+00> : vector<32x32xf32>
    %34 = tpu.matmul %31, %32, %cst_16 {dimension_numbers = #tpu.dot_dimension_numbers<[1], [1], [0], [0], [0, 0, 1, 0], [], []>} : vector<32x128xf32>, vector<32x128xf32>, vector<32x32xf32> -> vector<32x32xf32>
    %cst_17 = arith.constant dense<0xFF800000> : vector<32xf32>
    %35 = vector.multi_reduction <maximumf>, %34, %cst_17 [1] : vector<32x32xf32> to vector<32xf32>
    %36 = vector.shape_cast %35 : vector<32xf32> to vector<32x1xf32>
    %37 = vector.broadcast %36 : vector<32x1xf32> to vector<32x32xf32>
    %38 = arith.subf %34, %37 : vector<32x32xf32>
    %39 = math.exp %38 : vector<32x32xf32>
    %cst_18 = arith.constant dense<0.000000e+00> : vector<32xf32>
    %40 = vector.multi_reduction <add>, %39, %cst_18 [1] : vector<32x32xf32> to vector<32xf32>
    %41 = vector.shape_cast %40 : vector<32xf32> to vector<32x1xf32>
    %42 = tpu.reciprocal %41 {approx = true} : vector<32x1xf32> -> vector<32x1xf32>
    %43 = vector.broadcast %42 : vector<32x1xf32> to vector<32x32xf32>
    %44 = arith.mulf %39, %43 : vector<32x32xf32>
    %cst_19 = arith.constant dense<0.000000e+00> : vector<32x128xf32>
    %45 = tpu.matmul %44, %33, %cst_19 {dimension_numbers = #tpu.dot_dimension_numbers<[1], [0], [0], [1], [0, 0, 1, 1], [], []>} : vector<32x32xf32>, vector<32x128xf32>, vector<32x128xf32> -> vector<32x128xf32>
    %46 = vector.extract_strided_slice %11 {offsets = [0, 768], sizes = [32, 128], strides = [1, 1]} : vector<32x1536xf32> to vector<32x128xf32>
    %cst_20 = arith.constant 2.500000e-01 : f32
    %47 = vector.broadcast %cst_20 : f32 to vector<32x128xf32>
    %48 = arith.mulf %46, %47 : vector<32x128xf32>
    %49 = vector.extract_strided_slice %11 {offsets = [0, 896], sizes = [32, 128], strides = [1, 1]} : vector<32x1536xf32> to vector<32x128xf32>
    %50 = vector.extract_strided_slice %11 {offsets = [0, 1024], sizes = [32, 128], strides = [1, 1]} : vector<32x1536xf32> to vector<32x128xf32>
    %cst_21 = arith.constant dense<0.000000e+00> : vector<32x32xf32>
    %51 = tpu.matmul %48, %49, %cst_21 {dimension_numbers = #tpu.dot_dimension_numbers<[1], [1], [0], [0], [0, 0, 1, 0], [], []>} : vector<32x128xf32>, vector<32x128xf32>, vector<32x32xf32> -> vector<32x32xf32>
    %cst_22 = arith.constant dense<0xFF800000> : vector<32xf32>
    %52 = vector.multi_reduction <maximumf>, %51, %cst_22 [1] : vector<32x32xf32> to vector<32xf32>
    %53 = vector.shape_cast %52 : vector<32xf32> to vector<32x1xf32>
    %54 = vector.broadcast %53 : vector<32x1xf32> to vector<32x32xf32>
    %55 = arith.subf %51, %54 : vector<32x32xf32>
    %56 = math.exp %55 : vector<32x32xf32>
    %cst_23 = arith.constant dense<0.000000e+00> : vector<32xf32>
    %57 = vector.multi_reduction <add>, %56, %cst_23 [1] : vector<32x32xf32> to vector<32xf32>
    %58 = vector.shape_cast %57 : vector<32xf32> to vector<32x1xf32>
    %59 = tpu.reciprocal %58 {approx = true} : vector<32x1xf32> -> vector<32x1xf32>
    %60 = vector.broadcast %59 : vector<32x1xf32> to vector<32x32xf32>
    %61 = arith.mulf %56, %60 : vector<32x32xf32>
    %cst_24 = arith.constant dense<0.000000e+00> : vector<32x128xf32>
    %62 = tpu.matmul %61, %50, %cst_24 {dimension_numbers = #tpu.dot_dimension_numbers<[1], [0], [0], [1], [0, 0, 1, 1], [], []>} : vector<32x32xf32>, vector<32x128xf32>, vector<32x128xf32> -> vector<32x128xf32>
    %63 = vector.extract_strided_slice %11 {offsets = [0, 1152], sizes = [32, 128], strides = [1, 1]} : vector<32x1536xf32> to vector<32x128xf32>
    %cst_25 = arith.constant 2.500000e-01 : f32
    %64 = vector.broadcast %cst_25 : f32 to vector<32x128xf32>
    %65 = arith.mulf %63, %64 : vector<32x128xf32>
    %66 = vector.extract_strided_slice %11 {offsets = [0, 1280], sizes = [32, 128], strides = [1, 1]} : vector<32x1536xf32> to vector<32x128xf32>
    %67 = vector.extract_strided_slice %11 {offsets = [0, 1408], sizes = [32, 128], strides = [1, 1]} : vector<32x1536xf32> to vector<32x128xf32>
    %cst_26 = arith.constant dense<0.000000e+00> : vector<32x32xf32>
    %68 = tpu.matmul %65, %66, %cst_26 {dimension_numbers = #tpu.dot_dimension_numbers<[1], [1], [0], [0], [0, 0, 1, 0], [], []>} : vector<32x128xf32>, vector<32x128xf32>, vector<32x32xf32> -> vector<32x32xf32>
    %cst_27 = arith.constant dense<0xFF800000> : vector<32xf32>
    %69 = vector.multi_reduction <maximumf>, %68, %cst_27 [1] : vector<32x32xf32> to vector<32xf32>
    %70 = vector.shape_cast %69 : vector<32xf32> to vector<32x1xf32>
    %71 = vector.broadcast %70 : vector<32x1xf32> to vector<32x32xf32>
    %72 = arith.subf %68, %71 : vector<32x32xf32>
    %73 = math.exp %72 : vector<32x32xf32>
    %cst_28 = arith.constant dense<0.000000e+00> : vector<32xf32>
    %74 = vector.multi_reduction <add>, %73, %cst_28 [1] : vector<32x32xf32> to vector<32xf32>
    %75 = vector.shape_cast %74 : vector<32xf32> to vector<32x1xf32>
    %76 = tpu.reciprocal %75 {approx = true} : vector<32x1xf32> -> vector<32x1xf32>
    %77 = vector.broadcast %76 : vector<32x1xf32> to vector<32x32xf32>
    %78 = arith.mulf %73, %77 : vector<32x32xf32>
    %cst_29 = arith.constant dense<0.000000e+00> : vector<32x128xf32>
    %79 = tpu.matmul %78, %67, %cst_29 {dimension_numbers = #tpu.dot_dimension_numbers<[1], [0], [0], [1], [0, 0, 1, 1], [], []>} : vector<32x32xf32>, vector<32x128xf32>, vector<32x128xf32> -> vector<32x128xf32>
    %80 = tpu.concatenate %28, %45, %62, %79 in 1 : vector<32x128xf32>, vector<32x128xf32>, vector<32x128xf32>, vector<32x128xf32> -> vector<32x512xf32>
    %c0_30 = arith.constant 0 : index
    %c0_31 = arith.constant 0 : index
    %c0_32 = arith.constant 0 : index
    %81 = vector.load %arg26[%c0_30, %c0_31, %c0_32] : memref<1x512x64xf32, #tpu.memory_space<vmem>>, vector<1x512x64xf32>
    %82 = vector.shape_cast %81 : vector<1x512x64xf32> to vector<512x64xf32>
    %cst_33 = arith.constant dense<0.000000e+00> : vector<32x64xf32>
    %83 = tpu.matmul %80, %82, %cst_33 {dimension_numbers = #tpu.dot_dimension_numbers<[1], [0], [0], [1], [0, 0, 1, 1], [], []>} : vector<32x512xf32>, vector<512x64xf32>, vector<32x64xf32> -> vector<32x64xf32>
    %c0_34 = arith.constant 0 : index
    %c0_35 = arith.constant 0 : index
    %c0_36 = arith.constant 0 : index
    %84 = vector.load %arg27[%c0_34, %c0_35, %c0_36] : memref<1x1x64xf32, #tpu.memory_space<vmem>>, vector<1x1x64xf32>
    %85 = vector.shape_cast %84 : vector<1x1x64xf32> to vector<1x64xf32>
    %86 = vector.broadcast %85 : vector<1x64xf32> to vector<32x64xf32>
    %87 = arith.addf %83, %86 : vector<32x64xf32>
    %88 = arith.addf %4, %87 : vector<32x64xf32>
    %c0_37 = arith.constant 0 : index
    %c0_38 = arith.constant 0 : index
    %c0_39 = arith.constant 0 : index
    %89 = vector.load %arg28[%c0_37, %c0_38, %c0_39] : memref<1x1x64xf32, #tpu.memory_space<vmem>>, vector<1x1x64xf32>
    %90 = vector.shape_cast %89 : vector<1x1x64xf32> to vector<1x64xf32>
    %c0_40 = arith.constant 0 : index
    %c0_41 = arith.constant 0 : index
    %c0_42 = arith.constant 0 : index
    %91 = vector.load %arg29[%c0_40, %c0_41, %c0_42] : memref<1x1x64xf32, #tpu.memory_space<vmem>>, vector<1x1x64xf32>
    %92 = vector.shape_cast %91 : vector<1x1x64xf32> to vector<1x64xf32>
    %cst_43 = arith.constant dense<0.000000e+00> : vector<32xf32>
    %93 = vector.multi_reduction <add>, %88, %cst_43 [1] : vector<32x64xf32> to vector<32xf32>
    %94 = vector.shape_cast %93 : vector<32xf32> to vector<32x1xf32>
    %cst_44 = arith.constant 6.400000e+01 : f32
    %95 = vector.broadcast %cst_44 : f32 to vector<32x1xf32>
    %96 = arith.divf %94, %95 : vector<32x1xf32>
    %97 = vector.broadcast %96 : vector<32x1xf32> to vector<32x64xf32>
    %98 = arith.subf %88, %97 : vector<32x64xf32>
    %99 = arith.mulf %98, %98 : vector<32x64xf32>
    %cst_45 = arith.constant dense<0.000000e+00> : vector<32xf32>
    %100 = vector.multi_reduction <add>, %99, %cst_45 [1] : vector<32x64xf32> to vector<32xf32>
    %101 = vector.shape_cast %100 : vector<32xf32> to vector<32x1xf32>
    %cst_46 = arith.constant 6.400000e+01 : f32
    %102 = vector.broadcast %cst_46 : f32 to vector<32x1xf32>
    %103 = arith.divf %101, %102 : vector<32x1xf32>
    %104 = vector.broadcast %96 : vector<32x1xf32> to vector<32x64xf32>
    %105 = arith.subf %88, %104 : vector<32x64xf32>
    %cst_47 = arith.constant 9.99999974E-6 : f32
    %106 = vector.broadcast %cst_47 : f32 to vector<32x1xf32>
    %107 = arith.addf %103, %106 : vector<32x1xf32>
    %108 = math.rsqrt %107 : vector<32x1xf32>
    %109 = vector.broadcast %108 : vector<32x1xf32> to vector<32x64xf32>
    %110 = arith.mulf %105, %109 : vector<32x64xf32>
    %111 = vector.broadcast %90 : vector<1x64xf32> to vector<32x64xf32>
    %112 = arith.mulf %110, %111 : vector<32x64xf32>
    %113 = vector.broadcast %92 : vector<1x64xf32> to vector<32x64xf32>
    %114 = arith.addf %112, %113 : vector<32x64xf32>
    %c0_48 = arith.constant 0 : index
    %c0_49 = arith.constant 0 : index
    %c0_50 = arith.constant 0 : index
    %115 = vector.load %arg30[%c0_48, %c0_49, %c0_50] : memref<1x64x128xf32, #tpu.memory_space<vmem>>, vector<1x64x128xf32>
    %116 = vector.shape_cast %115 : vector<1x64x128xf32> to vector<64x128xf32>
    %cst_51 = arith.constant dense<0.000000e+00> : vector<32x128xf32>
    %117 = tpu.matmul %114, %116, %cst_51 {dimension_numbers = #tpu.dot_dimension_numbers<[1], [0], [0], [1], [0, 0, 1, 1], [], []>} : vector<32x64xf32>, vector<64x128xf32>, vector<32x128xf32> -> vector<32x128xf32>
    %c0_52 = arith.constant 0 : index
    %c0_53 = arith.constant 0 : index
    %c0_54 = arith.constant 0 : index
    %118 = vector.load %arg31[%c0_52, %c0_53, %c0_54] : memref<1x1x128xf32, #tpu.memory_space<vmem>>, vector<1x1x128xf32>
    %119 = vector.shape_cast %118 : vector<1x1x128xf32> to vector<1x128xf32>
    %120 = vector.broadcast %119 : vector<1x128xf32> to vector<32x128xf32>
    %121 = arith.addf %117, %120 : vector<32x128xf32>
    %cst_55 = arith.constant 0.000000e+00 : f32
    %122 = vector.broadcast %cst_55 : f32 to vector<32x128xf32>
    %123 = arith.maximumf %121, %122 : vector<32x128xf32>
    %c0_56 = arith.constant 0 : index
    %c0_57 = arith.constant 0 : index
    %c0_58 = arith.constant 0 : index
    %124 = vector.load %arg32[%c0_56, %c0_57, %c0_58] : memref<1x128x64xf32, #tpu.memory_space<vmem>>, vector<1x128x64xf32>
    %125 = vector.shape_cast %124 : vector<1x128x64xf32> to vector<128x64xf32>
    %cst_59 = arith.constant dense<0.000000e+00> : vector<32x64xf32>
    %126 = tpu.matmul %123, %125, %cst_59 {dimension_numbers = #tpu.dot_dimension_numbers<[1], [0], [0], [1], [0, 0, 1, 1], [], []>} : vector<32x128xf32>, vector<128x64xf32>, vector<32x64xf32> -> vector<32x64xf32>
    %c0_60 = arith.constant 0 : index
    %c0_61 = arith.constant 0 : index
    %c0_62 = arith.constant 0 : index
    %127 = vector.load %arg33[%c0_60, %c0_61, %c0_62] : memref<1x1x64xf32, #tpu.memory_space<vmem>>, vector<1x1x64xf32>
    %128 = vector.shape_cast %127 : vector<1x1x64xf32> to vector<1x64xf32>
    %129 = vector.broadcast %128 : vector<1x64xf32> to vector<32x64xf32>
    %130 = arith.addf %126, %129 : vector<32x64xf32>
    %131 = arith.addf %114, %130 : vector<32x64xf32>
    %c0_63 = arith.constant 0 : index
    %c0_64 = arith.constant 0 : index
    %c0_65 = arith.constant 0 : index
    %132 = vector.load %arg34[%c0_63, %c0_64, %c0_65] : memref<1x1x64xf32, #tpu.memory_space<vmem>>, vector<1x1x64xf32>
    %133 = vector.shape_cast %132 : vector<1x1x64xf32> to vector<1x64xf32>
    %c0_66 = arith.constant 0 : index
    %c0_67 = arith.constant 0 : index
    %c0_68 = arith.constant 0 : index
    %134 = vector.load %arg35[%c0_66, %c0_67, %c0_68] : memref<1x1x64xf32, #tpu.memory_space<vmem>>, vector<1x1x64xf32>
    %135 = vector.shape_cast %134 : vector<1x1x64xf32> to vector<1x64xf32>
    %cst_69 = arith.constant dense<0.000000e+00> : vector<32xf32>
    %136 = vector.multi_reduction <add>, %131, %cst_69 [1] : vector<32x64xf32> to vector<32xf32>
    %137 = vector.shape_cast %136 : vector<32xf32> to vector<32x1xf32>
    %cst_70 = arith.constant 6.400000e+01 : f32
    %138 = vector.broadcast %cst_70 : f32 to vector<32x1xf32>
    %139 = arith.divf %137, %138 : vector<32x1xf32>
    %140 = vector.broadcast %139 : vector<32x1xf32> to vector<32x64xf32>
    %141 = arith.subf %131, %140 : vector<32x64xf32>
    %142 = arith.mulf %141, %141 : vector<32x64xf32>
    %cst_71 = arith.constant dense<0.000000e+00> : vector<32xf32>
    %143 = vector.multi_reduction <add>, %142, %cst_71 [1] : vector<32x64xf32> to vector<32xf32>
    %144 = vector.shape_cast %143 : vector<32xf32> to vector<32x1xf32>
    %cst_72 = arith.constant 6.400000e+01 : f32
    %145 = vector.broadcast %cst_72 : f32 to vector<32x1xf32>
    %146 = arith.divf %144, %145 : vector<32x1xf32>
    %147 = vector.broadcast %139 : vector<32x1xf32> to vector<32x64xf32>
    %148 = arith.subf %131, %147 : vector<32x64xf32>
    %cst_73 = arith.constant 9.99999974E-6 : f32
    %149 = vector.broadcast %cst_73 : f32 to vector<32x1xf32>
    %150 = arith.addf %146, %149 : vector<32x1xf32>
    %151 = math.rsqrt %150 : vector<32x1xf32>
    %152 = vector.broadcast %151 : vector<32x1xf32> to vector<32x64xf32>
    %153 = arith.mulf %148, %152 : vector<32x64xf32>
    %154 = vector.broadcast %133 : vector<1x64xf32> to vector<32x64xf32>
    %155 = arith.mulf %153, %154 : vector<32x64xf32>
    %156 = vector.broadcast %135 : vector<1x64xf32> to vector<32x64xf32>
    %157 = arith.addf %155, %156 : vector<32x64xf32>
    %c0_74 = arith.constant 0 : index
    %c0_75 = arith.constant 0 : index
    %158 = vector.load %arg37[%c0_74, %c0_75] : memref<32x64xf32, #tpu.memory_space<vmem>>, vector<32x64xf32>
    tpu.vector_store %arg37[%c0_74, %c0_75], %157 {strides = array<i32>} : memref<32x64xf32, #tpu.memory_space<vmem>>, vector<32x64xf32>,
    %c1_i32 = arith.constant 1 : i32
    %159 = arith.cmpi eq, %arg0, %c1_i32 : i32
    %160 = arith.extui %159 : i1 to i32
    %c0_i32_76 = arith.constant 0 : i32
    %161 = arith.cmpi ne, %160, %c0_i32_76 : i32
    scf.if %161 {
      %c0_77 = arith.constant 0 : index
      %c0_78 = arith.constant 0 : index
      %162 = vector.load %arg9[%c0_77, %c0_78] : memref<64x32xf32, #tpu.memory_space<vmem>>, vector<64x32xf32>
      %cst_79 = arith.constant dense<0.000000e+00> : vector<32x32xf32>
      %163 = tpu.matmul %157, %162, %cst_79 {dimension_numbers = #tpu.dot_dimension_numbers<[1], [0], [0], [1], [0, 0, 1, 1], [], []>} : vector<32x64xf32>, vector<64x32xf32>, vector<32x32xf32> -> vector<32x32xf32>
      %c0_80 = arith.constant 0 : index
      %c0_81 = arith.constant 0 : index
      %164 = vector.load %arg10[%c0_80, %c0_81] : memref<1x32xf32, #tpu.memory_space<vmem>>, vector<1x32xf32>
      %165 = vector.broadcast %164 : vector<1x32xf32> to vector<32x32xf32>
      %166 = arith.addf %163, %165 : vector<32x32xf32>
      %c0_82 = arith.constant 0 : index
      %c0_83 = arith.constant 0 : index
      %167 = vector.load %arg11[%c0_82, %c0_83] : memref<35x32xf32, #tpu.memory_space<vmem>>, vector<35x32xf32>
      %cst_84 = arith.constant dense<0.000000e+00> : vector<32x32xf32>
      %168 = tpu.matmul %0, %167, %cst_84 {dimension_numbers = #tpu.dot_dimension_numbers<[1], [0], [0], [1], [0, 0, 1, 1], [], []>} : vector<32x35xf32>, vector<35x32xf32>, vector<32x32xf32> -> vector<32x32xf32>
      %c0_85 = arith.constant 0 : index
      %c0_86 = arith.constant 0 : index
      %169 = vector.load %arg12[%c0_85, %c0_86] : memref<1x32xf32, #tpu.memory_space<vmem>>, vector<1x32xf32>
      %170 = vector.broadcast %169 : vector<1x32xf32> to vector<32x32xf32>
      %171 = arith.addf %168, %170 : vector<32x32xf32>
      %172 = arith.negf %171 : vector<32x32xf32>
      %173 = math.exp %172 : vector<32x32xf32>
      %cst_87 = arith.constant 1.000000e+00 : f32
      %174 = vector.broadcast %cst_87 : f32 to vector<32x32xf32>
      %175 = arith.addf %174, %173 : vector<32x32xf32>
      %176 = arith.divf %174, %175 : vector<32x32xf32>
      %c0_88 = arith.constant 0 : index
      %c0_89 = arith.constant 0 : index
      %177 = vector.load %arg13[%c0_88, %c0_89] : memref<35x32xf32, #tpu.memory_space<vmem>>, vector<35x32xf32>
      %cst_90 = arith.constant dense<0.000000e+00> : vector<32x32xf32>
      %178 = tpu.matmul %0, %177, %cst_90 {dimension_numbers = #tpu.dot_dimension_numbers<[1], [0], [0], [1], [0, 0, 1, 1], [], []>} : vector<32x35xf32>, vector<35x32xf32>, vector<32x32xf32> -> vector<32x32xf32>
      %179 = arith.mulf %166, %176 : vector<32x32xf32>
      %180 = arith.addf %179, %178 : vector<32x32xf32>
      %c0_91 = arith.constant 0 : index
      %c0_92 = arith.constant 0 : index
      %181 = vector.load %arg14[%c0_91, %c0_92] : memref<32x16xf32, #tpu.memory_space<vmem>>, vector<32x16xf32>
      %cst_93 = arith.constant dense<0.000000e+00> : vector<32x16xf32>
      %182 = tpu.matmul %180, %181, %cst_93 {dimension_numbers = #tpu.dot_dimension_numbers<[1], [0], [0], [1], [0, 0, 1, 1], [], []>} : vector<32x32xf32>, vector<32x16xf32>, vector<32x16xf32> -> vector<32x16xf32>
      %c0_94 = arith.constant 0 : index
      %c0_95 = arith.constant 0 : index
      %183 = vector.load %arg15[%c0_94, %c0_95] : memref<1x16xf32, #tpu.memory_space<vmem>>, vector<1x16xf32>
      %184 = vector.broadcast %183 : vector<1x16xf32> to vector<32x16xf32>
      %185 = arith.addf %182, %184 : vector<32x16xf32>
      %c0_96 = arith.constant 0 : index
      %c0_97 = arith.constant 0 : index
      %186 = vector.load %arg16[%c0_96, %c0_97] : memref<35x16xf32, #tpu.memory_space<vmem>>, vector<35x16xf32>
      %cst_98 = arith.constant dense<0.000000e+00> : vector<32x16xf32>
      %187 = tpu.matmul %0, %186, %cst_98 {dimension_numbers = #tpu.dot_dimension_numbers<[1], [0], [0], [1], [0, 0, 1, 1], [], []>} : vector<32x35xf32>, vector<35x16xf32>, vector<32x16xf32> -> vector<32x16xf32>
      %c0_99 = arith.constant 0 : index
      %c0_100 = arith.constant 0 : index
      %188 = vector.load %arg17[%c0_99, %c0_100] : memref<1x16xf32, #tpu.memory_space<vmem>>, vector<1x16xf32>
      %189 = vector.broadcast %188 : vector<1x16xf32> to vector<32x16xf32>
      %190 = arith.addf %187, %189 : vector<32x16xf32>
      %191 = arith.negf %190 : vector<32x16xf32>
      %192 = math.exp %191 : vector<32x16xf32>
      %cst_101 = arith.constant 1.000000e+00 : f32
      %193 = vector.broadcast %cst_101 : f32 to vector<32x16xf32>
      %194 = arith.addf %193, %192 : vector<32x16xf32>
      %195 = arith.divf %193, %194 : vector<32x16xf32>
      %c0_102 = arith.constant 0 : index
      %c0_103 = arith.constant 0 : index
      %196 = vector.load %arg18[%c0_102, %c0_103] : memref<35x16xf32, #tpu.memory_space<vmem>>, vector<35x16xf32>
      %cst_104 = arith.constant dense<0.000000e+00> : vector<32x16xf32>
      %197 = tpu.matmul %0, %196, %cst_104 {dimension_numbers = #tpu.dot_dimension_numbers<[1], [0], [0], [1], [0, 0, 1, 1], [], []>} : vector<32x35xf32>, vector<35x16xf32>, vector<32x16xf32> -> vector<32x16xf32>
      %198 = arith.mulf %185, %195 : vector<32x16xf32>
      %199 = arith.addf %198, %197 : vector<32x16xf32>
      %c0_105 = arith.constant 0 : index
      %c0_106 = arith.constant 0 : index
      %200 = vector.load %arg19[%c0_105, %c0_106] : memref<16x128xf32, #tpu.memory_space<vmem>>, vector<16x128xf32>
      %cst_107 = arith.constant dense<0.000000e+00> : vector<32x128xf32>
      %201 = tpu.matmul %199, %200, %cst_107 {dimension_numbers = #tpu.dot_dimension_numbers<[1], [0], [0], [1], [0, 0, 1, 1], [], []>} : vector<32x16xf32>, vector<16x128xf32>, vector<32x128xf32> -> vector<32x128xf32>
      %c0_108 = arith.constant 0 : index
      %c0_109 = arith.constant 0 : index
      %202 = vector.load %arg20[%c0_108, %c0_109] : memref<1x128xf32, #tpu.memory_space<vmem>>, vector<1x128xf32>
      %203 = vector.broadcast %202 : vector<1x128xf32> to vector<32x128xf32>
      %204 = arith.addf %201, %203 : vector<32x128xf32>
      %c0_110 = arith.constant 0 : index
      %c0_111 = arith.constant 0 : index
      %205 = vector.load %arg21[%c0_110, %c0_111] : memref<35x128xf32, #tpu.memory_space<vmem>>, vector<35x128xf32>
      %cst_112 = arith.constant dense<0.000000e+00> : vector<32x128xf32>
      %206 = tpu.matmul %0, %205, %cst_112 {dimension_numbers = #tpu.dot_dimension_numbers<[1], [0], [0], [1], [0, 0, 1, 1], [], []>} : vector<32x35xf32>, vector<35x128xf32>, vector<32x128xf32> -> vector<32x128xf32>
      %c0_113 = arith.constant 0 : index
      %c0_114 = arith.constant 0 : index
      %207 = vector.load %arg22[%c0_113, %c0_114] : memref<1x128xf32, #tpu.memory_space<vmem>>, vector<1x128xf32>
      %208 = vector.broadcast %207 : vector<1x128xf32> to vector<32x128xf32>
      %209 = arith.addf %206, %208 : vector<32x128xf32>
      %210 = arith.negf %209 : vector<32x128xf32>
      %211 = math.exp %210 : vector<32x128xf32>
      %cst_115 = arith.constant 1.000000e+00 : f32
      %212 = vector.broadcast %cst_115 : f32 to vector<32x128xf32>
      %213 = arith.addf %212, %211 : vector<32x128xf32>
      %214 = arith.divf %212, %213 : vector<32x128xf32>
      %c0_116 = arith.constant 0 : index
      %c0_117 = arith.constant 0 : index
      %215 = vector.load %arg23[%c0_116, %c0_117] : memref<35x128xf32, #tpu.memory_space<vmem>>, vector<35x128xf32>
      %cst_118 = arith.constant dense<0.000000e+00> : vector<32x128xf32>
      %216 = tpu.matmul %0, %215, %cst_118 {dimension_numbers = #tpu.dot_dimension_numbers<[1], [0], [0], [1], [0, 0, 1, 1], [], []>} : vector<32x35xf32>, vector<35x128xf32>, vector<32x128xf32> -> vector<32x128xf32>
      %217 = arith.mulf %204, %214 : vector<32x128xf32>
      %218 = arith.addf %217, %216 : vector<32x128xf32>
      %c0_119 = arith.constant 0 : index
      %c0_120 = arith.constant 0 : index
      %219 = vector.load %arg36[%c0_119, %c0_120] : memref<32x128xf32, #tpu.memory_space<vmem>>, vector<32x128xf32>
      tpu.vector_store %arg36[%c0_119, %c0_120], %218 {strides = array<i32>} : memref<32x128xf32, #tpu.memory_space<vmem>>, vector<32x128xf32>,
    } else {
    }
    return
  }
  func.func @transform_0(%arg0: i32) -> (i32, i32) {
    %c0_i32 = arith.constant 0 : i32
    %c0_i32_0 = arith.constant 0 : i32
    %c0_i32_1 = arith.constant 0 : i32
    return %c0_i32, %c0_i32_0 : i32, i32
  }
  func.func @transform_1(%arg0: i32) -> (i32, i32) {
    %c0_i32 = arith.constant 0 : i32
    %c0_i32_0 = arith.constant 0 : i32
    %c0_i32_1 = arith.constant 0 : i32
    return %c0_i32, %c0_i32_0 : i32, i32
  }
  func.func @transform_2(%arg0: i32) -> (i32, i32) {
    %c0_i32 = arith.constant 0 : i32
    %c0_i32_0 = arith.constant 0 : i32
    %c0_i32_1 = arith.constant 0 : i32
    return %c0_i32, %c0_i32_0 : i32, i32
  }
  func.func @transform_3(%arg0: i32) -> (i32, i32) {
    %c0_i32 = arith.constant 0 : i32
    %c0_i32_0 = arith.constant 0 : i32
    %c0_i32_1 = arith.constant 0 : i32
    return %c0_i32, %c0_i32_0 : i32, i32
  }
  func.func @transform_4(%arg0: i32) -> (i32, i32) {
    %c0_i32 = arith.constant 0 : i32
    %c0_i32_0 = arith.constant 0 : i32
    %c0_i32_1 = arith.constant 0 : i32
    return %c0_i32, %c0_i32_0 : i32, i32
  }
  func.func @transform_5(%arg0: i32) -> (i32, i32) {
    %c0_i32 = arith.constant 0 : i32
    %c0_i32_0 = arith.constant 0 : i32
    %c0_i32_1 = arith.constant 0 : i32
    return %c0_i32, %c0_i32_0 : i32, i32
  }
  func.func @transform_6(%arg0: i32) -> (i32, i32) {
    %c0_i32 = arith.constant 0 : i32
    %c0_i32_0 = arith.constant 0 : i32
    %c0_i32_1 = arith.constant 0 : i32
    return %c0_i32, %c0_i32_0 : i32, i32
  }
  func.func @transform_7(%arg0: i32) -> (i32, i32) {
    %c0_i32 = arith.constant 0 : i32
    %c0_i32_0 = arith.constant 0 : i32
    %c0_i32_1 = arith.constant 0 : i32
    return %c0_i32, %c0_i32_0 : i32, i32
  }
  func.func @transform_8(%arg0: i32) -> (i32, i32) {
    %c0_i32 = arith.constant 0 : i32
    %c0_i32_0 = arith.constant 0 : i32
    %c0_i32_1 = arith.constant 0 : i32
    return %c0_i32, %c0_i32_0 : i32, i32
  }
  func.func @transform_9(%arg0: i32) -> (i32, i32) {
    %c0_i32 = arith.constant 0 : i32
    %c0_i32_0 = arith.constant 0 : i32
    %c0_i32_1 = arith.constant 0 : i32
    return %c0_i32, %c0_i32_0 : i32, i32
  }
  func.func @transform_10(%arg0: i32) -> (i32, i32) {
    %c0_i32 = arith.constant 0 : i32
    %c0_i32_0 = arith.constant 0 : i32
    %c0_i32_1 = arith.constant 0 : i32
    return %c0_i32, %c0_i32_0 : i32, i32
  }
  func.func @transform_11(%arg0: i32) -> (i32, i32) {
    %c0_i32 = arith.constant 0 : i32
    %c0_i32_0 = arith.constant 0 : i32
    %c0_i32_1 = arith.constant 0 : i32
    return %c0_i32, %c0_i32_0 : i32, i32
  }
  func.func @transform_12(%arg0: i32) -> (i32, i32) {
    %c0_i32 = arith.constant 0 : i32
    %c0_i32_0 = arith.constant 0 : i32
    %c0_i32_1 = arith.constant 0 : i32
    return %c0_i32, %c0_i32_0 : i32, i32
  }
  func.func @transform_13(%arg0: i32) -> (i32, i32) {
    %c0_i32 = arith.constant 0 : i32
    %c0_i32_0 = arith.constant 0 : i32
    %c0_i32_1 = arith.constant 0 : i32
    return %c0_i32, %c0_i32_0 : i32, i32
  }
  func.func @transform_14(%arg0: i32) -> (i32, i32) {
    %c0_i32 = arith.constant 0 : i32
    %c0_i32_0 = arith.constant 0 : i32
    %c0_i32_1 = arith.constant 0 : i32
    return %c0_i32, %c0_i32_0 : i32, i32
  }
  func.func @transform_15(%arg0: i32) -> (i32, i32) {
    %c0_i32 = arith.constant 0 : i32
    %c0_i32_0 = arith.constant 0 : i32
    %c0_i32_1 = arith.constant 0 : i32
    return %c0_i32, %c0_i32_0 : i32, i32
  }
  func.func @transform_16(%arg0: i32) -> (i32, i32) {
    %c0_i32 = arith.constant 0 : i32
    %c0_i32_0 = arith.constant 0 : i32
    %c0_i32_1 = arith.constant 0 : i32
    return %c0_i32, %c0_i32_0 : i32, i32
  }
  func.func @transform_17(%arg0: i32) -> (i32, i32) {
    %c0_i32 = arith.constant 0 : i32
    %c0_i32_0 = arith.constant 0 : i32
    %c0_i32_1 = arith.constant 0 : i32
    return %c0_i32, %c0_i32_0 : i32, i32
  }
  func.func @transform_18(%arg0: i32) -> (i32, i32) {
    %c0_i32 = arith.constant 0 : i32
    %c0_i32_0 = arith.constant 0 : i32
    %c0_i32_1 = arith.constant 0 : i32
    return %c0_i32, %c0_i32_0 : i32, i32
  }
  func.func @transform_19(%arg0: i32) -> (i32, i32) {
    %c0_i32 = arith.constant 0 : i32
    %c0_i32_0 = arith.constant 0 : i32
    %c0_i32_1 = arith.constant 0 : i32
    return %c0_i32, %c0_i32_0 : i32, i32
  }
  func.func @transform_20(%arg0: i32) -> (i32, i32) {
    %c0_i32 = arith.constant 0 : i32
    %c0_i32_0 = arith.constant 0 : i32
    %c0_i32_1 = arith.constant 0 : i32
    return %c0_i32, %c0_i32_0 : i32, i32
  }
  func.func @transform_21(%arg0: i32) -> (i32, i32) {
    %c0_i32 = arith.constant 0 : i32
    %c0_i32_0 = arith.constant 0 : i32
    %c0_i32_1 = arith.constant 0 : i32
    return %c0_i32, %c0_i32_0 : i32, i32
  }
  func.func @transform_22(%arg0: i32) -> (i32, i32) {
    %c0_i32 = arith.constant 0 : i32
    %c0_i32_0 = arith.constant 0 : i32
    %c0_i32_1 = arith.constant 0 : i32
    return %c0_i32, %c0_i32_0 : i32, i32
  }
  func.func @transform_23(%arg0: i32) -> (i32, i32, i32) {
    %c0_i32 = arith.constant 0 : i32
    %c0_i32_0 = arith.constant 0 : i32
    %c0_i32_1 = arith.constant 0 : i32
    return %arg0, %c0_i32, %c0_i32_0 : i32, i32, i32
  }
  func.func @transform_24(%arg0: i32) -> (i32, i32, i32) {
    %c0_i32 = arith.constant 0 : i32
    %c0_i32_0 = arith.constant 0 : i32
    %c0_i32_1 = arith.constant 0 : i32
    return %arg0, %c0_i32, %c0_i32_0 : i32, i32, i32
  }
  func.func @transform_25(%arg0: i32) -> (i32, i32, i32) {
    %c0_i32 = arith.constant 0 : i32
    %c0_i32_0 = arith.constant 0 : i32
    %c0_i32_1 = arith.constant 0 : i32
    return %arg0, %c0_i32, %c0_i32_0 : i32, i32, i32
  }
  func.func @transform_26(%arg0: i32) -> (i32, i32, i32) {
    %c0_i32 = arith.constant 0 : i32
    %c0_i32_0 = arith.constant 0 : i32
    %c0_i32_1 = arith.constant 0 : i32
    return %arg0, %c0_i32, %c0_i32_0 : i32, i32, i32
  }
  func.func @transform_27(%arg0: i32) -> (i32, i32, i32) {
    %c0_i32 = arith.constant 0 : i32
    %c0_i32_0 = arith.constant 0 : i32
    %c0_i32_1 = arith.constant 0 : i32
    return %arg0, %c0_i32, %c0_i32_0 : i32, i32, i32
  }
  func.func @transform_28(%arg0: i32) -> (i32, i32, i32) {
    %c0_i32 = arith.constant 0 : i32
    %c0_i32_0 = arith.constant 0 : i32
    %c0_i32_1 = arith.constant 0 : i32
    return %arg0, %c0_i32, %c0_i32_0 : i32, i32, i32
  }
  func.func @transform_29(%arg0: i32) -> (i32, i32, i32) {
    %c0_i32 = arith.constant 0 : i32
    %c0_i32_0 = arith.constant 0 : i32
    %c0_i32_1 = arith.constant 0 : i32
    return %arg0, %c0_i32, %c0_i32_0 : i32, i32, i32
  }
  func.func @transform_30(%arg0: i32) -> (i32, i32, i32) {
    %c0_i32 = arith.constant 0 : i32
    %c0_i32_0 = arith.constant 0 : i32
    %c0_i32_1 = arith.constant 0 : i32
    return %arg0, %c0_i32, %c0_i32_0 : i32, i32, i32
  }
  func.func @transform_31(%arg0: i32) -> (i32, i32, i32) {
    %c0_i32 = arith.constant 0 : i32
    %c0_i32_0 = arith.constant 0 : i32
    %c0_i32_1 = arith.constant 0 : i32
    return %arg0, %c0_i32, %c0_i32_0 : i32, i32, i32
  }
  func.func @transform_32(%arg0: i32) -> (i32, i32, i32) {
    %c0_i32 = arith.constant 0 : i32
    %c0_i32_0 = arith.constant 0 : i32
    %c0_i32_1 = arith.constant 0 : i32
    return %arg0, %c0_i32, %c0_i32_0 : i32, i32, i32
  }
  func.func @transform_33(%arg0: i32) -> (i32, i32, i32) {
    %c0_i32 = arith.constant 0 : i32
    %c0_i32_0 = arith.constant 0 : i32
    %c0_i32_1 = arith.constant 0 : i32
    return %arg0, %c0_i32, %c0_i32_0 : i32, i32, i32
  }
  func.func @transform_34(%arg0: i32) -> (i32, i32, i32) {
    %c0_i32 = arith.constant 0 : i32
    %c0_i32_0 = arith.constant 0 : i32
    %c0_i32_1 = arith.constant 0 : i32
    return %arg0, %c0_i32, %c0_i32_0 : i32, i32, i32
  }
  func.func @transform_35(%arg0: i32) -> (i32, i32) {
    %c0_i32 = arith.constant 0 : i32
    %c0_i32_0 = arith.constant 0 : i32
    %c0_i32_1 = arith.constant 0 : i32
    return %c0_i32, %c0_i32_0 : i32, i32
  }
}

</mosaic_0001>

<llo_original>
// kernel: tpu_custom_call.1
$region0: #{tpu_custom_call.1}
  #allocation0 [shape = 'u32[]', space=smem, size = 0x4, offset = 0x4, fixed_abs, tag = 'smem constant byte address 0x4 - core index']
  #allocation1 [shape = 'u32[144,128]{1,0:T(1,128)}', space=vmem, size = 0x12000, scoped, tag = 'internal scratch']
  #allocation2 [shape = 'f32[32,64]{1,0:T(8,128)}', space=vmem, size = 0x4000, scoped, tag = 'scratch operand']
  %s0 = inlined_call_operand.smem [shape: u32[36], index: -1, kind: input, shape index: {}]
  %s1 = sld [smem:[%s0]]
  %s2 = scalar_lea.smem %s0, 1
  %s3 = sld [smem:[%s2]]
  %s4 = scalar_lea.smem %s0, 2
  %s5 = sld [smem:[%s4]]
  %s6 = scalar_lea.smem %s0, 3
  %s7 = sld [smem:[%s6]]
  %s8 = scalar_lea.smem %s0, 4
  %s9 = sld [smem:[%s8]]
  %s10 = scalar_lea.smem %s0, 5
  %s11 = sld [smem:[%s10]]
  %s12 = scalar_lea.smem %s0, 6
  %s13 = sld [smem:[%s12]]
  %s14 = scalar_lea.smem %s0, 7
  %s15 = sld [smem:[%s14]]
  %s16 = scalar_lea.smem %s0, 8
  %s17 = sld [smem:[%s16]]
  %s18 = scalar_lea.smem %s0, 9
  %s19 = sld [smem:[%s18]]
  %s20 = scalar_lea.smem %s0, 10
  %s21 = sld [smem:[%s20]]
  %s22 = scalar_lea.smem %s0, 11
  %s23 = sld [smem:[%s22]]
  %s24 = scalar_lea.smem %s0, 12
  %s25 = sld [smem:[%s24]]
  %s26 = scalar_lea.smem %s0, 13
  %s27 = sld [smem:[%s26]]
  %s28 = scalar_lea.smem %s0, 14
  %s29 = sld [smem:[%s28]]
  %s30 = scalar_lea.smem %s0, 15
  %s31 = sld [smem:[%s30]]
  %s32 = scalar_lea.smem %s0, 16
  %s33 = sld [smem:[%s32]]
  %s34 = scalar_lea.smem %s0, 17
  %s35 = sld [smem:[%s34]]
  %s36 = scalar_lea.smem %s0, 18
  %s37 = sld [smem:[%s36]]
  %s38 = scalar_lea.smem %s0, 19
  %s39 = sld [smem:[%s38]]
  %s40 = scalar_lea.smem %s0, 20
  %s41 = sld [smem:[%s40]]
  %s42 = scalar_lea.smem %s0, 21
  %s43 = sld [smem:[%s42]]
  %s44 = scalar_lea.smem %s0, 22
  %s45 = sld [smem:[%s44]]
  %s46 = scalar_lea.smem %s0, 23
  %s47 = sld [smem:[%s46]]
  %s48 = scalar_lea.smem %s0, 24
  %s49 = sld [smem:[%s48]]
  %s50 = scalar_lea.smem %s0, 25
  %s51 = sld [smem:[%s50]]
  %s52 = scalar_lea.smem %s0, 26
  %s53 = sld [smem:[%s52]]
  %s54 = scalar_lea.smem %s0, 27
  %s55 = sld [smem:[%s54]]
  %s56 = scalar_lea.smem %s0, 28
  %s57 = sld [smem:[%s56]]
  %s58 = scalar_lea.smem %s0, 29
  %s59 = sld [smem:[%s58]]
  %s60 = scalar_lea.smem %s0, 30
  %s61 = sld [smem:[%s60]]
  %s62 = scalar_lea.smem %s0, 31
  %s63 = sld [smem:[%s62]]
  %s64 = scalar_lea.smem %s0, 32
  %s65 = sld [smem:[%s64]]
  %s66 = scalar_lea.smem %s0, 33
  %s67 = sld [smem:[%s66]]
  %s68 = scalar_lea.smem %s0, 34
  %s69 = sld [smem:[%s68]]
  %s70 = scalar_lea.smem %s0, 35
  %s71 = sld [smem:[%s70]]
  %s72 = sld [smem:[#allocation0]]
  $region241: #{tpu_custom_call.1} parent=0
    _
  %s74 = ssub.s32 1, %s72
  %s75 = scalar_select 0, %s74, %s72
  $region1: #{tpu_custom_call.1} parent=0
    #allocation3 [shape = 'u8[16384]{0}', space=vmem, size = 0x4000, scoped, tag = 'input window, operand 1, single buffered']
    #allocation4 [shape = 's32[2]{0}', space=sflag, size = 0x8, scoped, tag = 'scoped memory for tpu_custom_call.1']
    #allocation5 [shape = 's32[2]{0}', space=sflag, size = 0x8, scoped, tag = 'scoped memory for tpu_custom_call.1']
    #allocation6 [shape = 'u8[16384]{0}', space=vmem, size = 0x4000, scoped, tag = 'input window, operand 2, single buffered']
    #allocation7 [shape = 's32[1]{0}', space=sflag, size = 0x4, scoped, tag = 'scoped memory for tpu_custom_call.1']
    #allocation8 [shape = 'u8[512]{0}', space=vmem, size = 0x400, scoped, tag = 'input window, operand 4, single buffered']
    #allocation9 [shape = 'u8[512]{0}', space=vmem, size = 0x400, scoped, tag = 'input window, operand 6, single buffered']
    #allocation10 [shape = 's32[1]{0}', space=sflag, size = 0x4, scoped, tag = 'scoped memory for tpu_custom_call.1']
    #allocation11 [shape = 'u8[512]{0}', space=vmem, size = 0x400, scoped, tag = 'input window, operand 9, single buffered']
    #allocation12 [shape = 'u8[512]{0}', space=vmem, size = 0x400, scoped, tag = 'input window, operand 11, single buffered']
    #allocation13 [shape = 's32[1]{0}', space=sflag, size = 0x4, scoped, tag = 'scoped memory for tpu_custom_call.1']
    #allocation14 [shape = 'u8[512]{0}', space=vmem, size = 0x400, scoped, tag = 'input window, operand 14, single buffered']
    #allocation15 [shape = 'u8[512]{0}', space=vmem, size = 0x400, scoped, tag = 'input window, operand 16, single buffered']
    #allocation16 [shape = 's32[1]{0}', space=sflag, size = 0x4, scoped, tag = 'scoped memory for tpu_custom_call.1']
    #allocation17 [shape = 'u8[8192]{0}', space=vmem, size = 0x2000, scoped, tag = 'input window, operand 18, single buffered']
    #allocation18 [shape = 'u8[512]{0}', space=vmem, size = 0x400, scoped, tag = 'input window, operand 19, single buffered']
    #allocation19 [shape = 's32[1]{0}', space=sflag, size = 0x4, scoped, tag = 'scoped memory for tpu_custom_call.1']
    #allocation20 [shape = 'u8[512]{0}', space=vmem, size = 0x400, scoped, tag = 'input window, operand 21, single buffered']
    #allocation21 [shape = 'u8[20480]{0}', space=vmem, size = 0x5000, scoped, tag = 'input window, operand 22, single buffered']
    #allocation22 [shape = 's32[1]{0}', space=sflag, size = 0x4, scoped, tag = 'scoped memory for tpu_custom_call.1']
    #allocation23 [shape = 'u8[1024]{0}', space=vmem, size = 0x400, scoped, tag = 'input window, operand 27']
    #allocation24 [shape = 'u8[1024]{0}', space=vmem, size = 0x400, scoped, tag = 'input window, operand 33']
    #allocation25 [shape = 'u8[1024]{0}', space=vmem, size = 0x400, scoped, tag = 'input window, operand 34']
    #allocation26 [shape = 'u8[16384]{0}', space=vmem, size = 0x4000, scoped, tag = 'output window, operand 0, single buffered']
    %76 = vsyncpa [#allocation4], 0
    %77 = vsyncpa [#allocation7], 0
    %78 = vsyncpa [#allocation10], 0
    %79 = vsyncpa [#allocation13], 0
    %80 = vsyncpa [#allocation16], 0
    %81 = vsyncpa [#allocation19], 0
    %82 = vsyncpa [#allocation22], 0
    %83 = vsyncpa [#allocation5], 0
    loop: start=0, step=1, limit=4
    $region2: #{tpu_custom_call.1} parent=1 // loop_pre_header
      _
    $region3: #{tpu_custom_call.1} parent=1 // loop_header
      %s85 = sphi 0, %s89
      %p86 = scmp.ge.s32.totalorder %s85, 4
      %s93 = sphi 0, %s93
      %s95 = sphi 0, %s93
      %s96 = sphi 0, %s95
      %s110 = sphi 0, %s96
      %s114 = sphi 0, %s114
      %s116 = sphi 0, %s114
      %s117 = sphi 0, %s116
      %s131 = sphi 0, %s117
      %s135 = sphi 0, %s135
      %s137 = sphi 0, %s135
      %s138 = sphi 0, %s137
      %s152 = sphi 0, %s138
      %s156 = sphi 0, %s156
      %s158 = sphi 0, %s156
      %s159 = sphi 0, %s158
      %s173 = sphi 0, %s159
      %s177 = sphi 0, %s177
      %s179 = sphi 0, %s177
      %s180 = sphi 0, %s179
      %s194 = sphi 0, %s180
      %s198 = sphi 0, %s198
      %s200 = sphi 0, %s198
      %s201 = sphi 0, %s200
      %s215 = sphi 0, %s201
      %s219 = sphi 0, %s219
      %s221 = sphi 0, %s219
      %s222 = sphi 0, %s221
      %s236 = sphi 0, %s222
      %s240 = sphi 0, %s240
      %s242 = sphi 0, %s240
      %s243 = sphi 0, %s242
      %s257 = sphi 0, %s243
      %s261 = sphi 0, %s261
      %s263 = sphi 0, %s261
      %s264 = sphi 0, %s263
      %s278 = sphi 0, %s264
      %s282 = sphi 0, %s282
      %s284 = sphi 0, %s282
      %s285 = sphi 0, %s284
      %s299 = sphi 0, %s285
      %s303 = sphi 0, %s303
      %s305 = sphi 0, %s303
      %s306 = sphi 0, %s305
      %s320 = sphi 0, %s306
      %s324 = sphi 0, %s324
      %s326 = sphi 0, %s324
      %s327 = sphi 0, %s326
      %s341 = sphi 0, %s327
      %s345 = sphi 0, %s345
      %s347 = sphi 0, %s345
      %s348 = sphi 0, %s347
      %s362 = sphi 0, %s348
      %s366 = sphi 0, %s366
      %s368 = sphi 0, %s366
      %s369 = sphi 0, %s368
      %s383 = sphi 0, %s369
      %s387 = sphi 0, %s387
      %s389 = sphi 0, %s387
      %s390 = sphi 0, %s389
      %s404 = sphi 0, %s390
      %s408 = sphi 0, %s408
      %s410 = sphi 0, %s408
      %s411 = sphi 0, %s410
      %s425 = sphi 0, %s411
      %s429 = sphi 0, %s429
      %s431 = sphi 0, %s429
      %s432 = sphi 0, %s431
      %s446 = sphi 0, %s432
      %s450 = sphi 0, %s450
      %s452 = sphi 0, %s450
      %s453 = sphi 0, %s452
      %s467 = sphi 0, %s453
      %s471 = sphi 0, %s471
      %s473 = sphi 0, %s471
      %s474 = sphi 0, %s473
      %s488 = sphi 0, %s474
      %s492 = sphi 0, %s492
      %s494 = sphi 0, %s492
      %s495 = sphi 0, %s494
      %s509 = sphi 0, %s495
      %s513 = sphi 0, %s513
      %s515 = sphi 0, %s513
      %s516 = sphi 0, %s515
      %s530 = sphi 0, %s516
      %s534 = sphi 0, %s534
      %s536 = sphi 0, %s534
      %s537 = sphi 0, %s536
      %s551 = sphi 0, %s537
      %s555 = sphi 0, %s555
      %s557 = sphi 0, %s555
      %s558 = sphi 0, %s557
      %s572 = sphi 0, %s558
      %s578 = sphi 0, %s580
      %s581 = sphi 0, %s578
      %s582 = sphi 0, %s581
      %s598 = sphi 0, %s582
      %s604 = sphi 0, %s606
      %s607 = sphi 0, %s604
      %s608 = sphi 0, %s607
      %s624 = sphi 0, %s608
      %s630 = sphi 0, %s632
      %s633 = sphi 0, %s630
      %s634 = sphi 0, %s633
      %s650 = sphi 0, %s634
      %s656 = sphi 0, %s658
      %s659 = sphi 0, %s656
      %s660 = sphi 0, %s659
      %s676 = sphi 0, %s660
      %s682 = sphi 0, %s684
      %s685 = sphi 0, %s682
      %s686 = sphi 0, %s685
      %s702 = sphi 0, %s686
      %s708 = sphi 0, %s710
      %s711 = sphi 0, %s708
      %s712 = sphi 0, %s711
      %s728 = sphi 0, %s712
      %s734 = sphi 0, %s736
      %s737 = sphi 0, %s734
      %s738 = sphi 0, %s737
      %s754 = sphi 0, %s738
      %s760 = sphi 0, %s762
      %s763 = sphi 0, %s760
      %s764 = sphi 0, %s763
      %s780 = sphi 0, %s764
      %s786 = sphi 0, %s788
      %s789 = sphi 0, %s786
      %s790 = sphi 0, %s789
      %s806 = sphi 0, %s790
      %s812 = sphi 0, %s814
      %s815 = sphi 0, %s812
      %s816 = sphi 0, %s815
      %s832 = sphi 0, %s816
      %s838 = sphi 0, %s840
      %s841 = sphi 0, %s838
      %s842 = sphi 0, %s841
      %s858 = sphi 0, %s842
      %s864 = sphi 0, %s866
      %s867 = sphi 0, %s864
      %s868 = sphi 0, %s867
      %s884 = sphi 0, %s868
      %s888 = sphi 0, %s888
      %s890 = sphi 0, %s888
      %s891 = sphi 0, %s890
      %s905 = sphi 0, %s891
    $region4: #{tpu_custom_call.1} parent=1 // loop_header_branch
      %88 = sbr.rel (%p86) target = $region8
    $region5: #{tpu_custom_call.1} parent=1 // loop_body
      %s90 = ssub.s32 %s85, 1
      %s91 = ssub.s32 %s85, 2
      %s92 = sadd.s32 %s85, 1
      %s94 = sadd.s32 %s93, 1
      %p97 = scmp.eq.s32.totalorder %s85, 1
      %p98 = scmp.ne.s32.totalorder %s93, %s95
      %p99 = scmp.eq.s32.totalorder %s85, 0
      %p100 = por %p98, %p99
      %p101 = scmp.ne.s32.totalorder %s93, %s95
      %p102 = scmp.eq.s32.totalorder %s90, 1
      %p103 = por %p101, %p102
      %p104 = scmp.ne.s32.totalorder %s95, %s96
      %p105 = scmp.eq.s32.totalorder %s90, 0
      %p106 = por %p104, %p105
      %p107 = scmp.ne.s32.totalorder %s95, %s96
      %p108 = scmp.eq.s32.totalorder %s91, 1
      %p109 = por %p107, %p108
      %p111 = scmp.ne.s32.totalorder %s96, %s110
      %p112 = scmp.eq.s32.totalorder %s91, 0
      %p113 = por %p111, %p112
      %s115 = sadd.s32 %s114, 1
      %p118 = scmp.eq.s32.totalorder %s85, 1
      %p119 = scmp.ne.s32.totalorder %s114, %s116
      %p120 = scmp.eq.s32.totalorder %s85, 0
      %p121 = por %p119, %p120
      %p122 = scmp.ne.s32.totalorder %s114, %s116
      %p123 = scmp.eq.s32.totalorder %s90, 1
      %p124 = por %p122, %p123
      %p125 = scmp.ne.s32.totalorder %s116, %s117
      %p126 = scmp.eq.s32.totalorder %s90, 0
      %p127 = por %p125, %p126
      %p128 = scmp.ne.s32.totalorder %s116, %s117
      %p129 = scmp.eq.s32.totalorder %s91, 1
      %p130 = por %p128, %p129
      %p132 = scmp.ne.s32.totalorder %s117, %s131
      %p133 = scmp.eq.s32.totalorder %s91, 0
      %p134 = por %p132, %p133
      %s136 = sadd.s32 %s135, 1
      %p139 = scmp.eq.s32.totalorder %s85, 1
      %p140 = scmp.ne.s32.totalorder %s135, %s137
      %p141 = scmp.eq.s32.totalorder %s85, 0
      %p142 = por %p140, %p141
      %p143 = scmp.ne.s32.totalorder %s135, %s137
      %p144 = scmp.eq.s32.totalorder %s90, 1
      %p145 = por %p143, %p144
      %p146 = scmp.ne.s32.totalorder %s137, %s138
      %p147 = scmp.eq.s32.totalorder %s90, 0
      %p148 = por %p146, %p147
      %p149 = scmp.ne.s32.totalorder %s137, %s138
      %p150 = scmp.eq.s32.totalorder %s91, 1
      %p151 = por %p149, %p150
      %p153 = scmp.ne.s32.totalorder %s138, %s152
      %p154 = scmp.eq.s32.totalorder %s91, 0
      %p155 = por %p153, %p154
      %s157 = sadd.s32 %s156, 1
      %p160 = scmp.eq.s32.totalorder %s85, 1
      %p161 = scmp.ne.s32.totalorder %s156, %s158
      %p162 = scmp.eq.s32.totalorder %s85, 0
      %p163 = por %p161, %p162
      %p164 = scmp.ne.s32.totalorder %s156, %s158
      %p165 = scmp.eq.s32.totalorder %s90, 1
      %p166 = por %p164, %p165
      %p167 = scmp.ne.s32.totalorder %s158, %s159
      %p168 = scmp.eq.s32.totalorder %s90, 0
      %p169 = por %p167, %p168
      %p170 = scmp.ne.s32.totalorder %s158, %s159
      %p171 = scmp.eq.s32.totalorder %s91, 1
      %p172 = por %p170, %p171
      %p174 = scmp.ne.s32.totalorder %s159, %s173
      %p175 = scmp.eq.s32.totalorder %s91, 0
      %p176 = por %p174, %p175
      %s178 = sadd.s32 %s177, 1
      %p181 = scmp.eq.s32.totalorder %s85, 1
      %p182 = scmp.ne.s32.totalorder %s177, %s179
      %p183 = scmp.eq.s32.totalorder %s85, 0
      %p184 = por %p182, %p183
      %p185 = scmp.ne.s32.totalorder %s177, %s179
      %p186 = scmp.eq.s32.totalorder %s90, 1
      %p187 = por %p185, %p186
      %p188 = scmp.ne.s32.totalorder %s179, %s180
      %p189 = scmp.eq.s32.totalorder %s90, 0
      %p190 = por %p188, %p189
      %p191 = scmp.ne.s32.totalorder %s179, %s180
      %p192 = scmp.eq.s32.totalorder %s91, 1
      %p193 = por %p191, %p192
      %p195 = scmp.ne.s32.totalorder %s180, %s194
      %p196 = scmp.eq.s32.totalorder %s91, 0
      %p197 = por %p195, %p196
      %s199 = sadd.s32 %s198, 1
      %p202 = scmp.eq.s32.totalorder %s85, 1
      %p203 = scmp.ne.s32.totalorder %s198, %s200
      %p204 = scmp.eq.s32.totalorder %s85, 0
      %p205 = por %p203, %p204
      %p206 = scmp.ne.s32.totalorder %s198, %s200
      %p207 = scmp.eq.s32.totalorder %s90, 1
      %p208 = por %p206, %p207
      %p209 = scmp.ne.s32.totalorder %s200, %s201
      %p210 = scmp.eq.s32.totalorder %s90, 0
      %p211 = por %p209, %p210
      %p212 = scmp.ne.s32.totalorder %s200, %s201
      %p213 = scmp.eq.s32.totalorder %s91, 1
      %p214 = por %p212, %p213
      %p216 = scmp.ne.s32.totalorder %s201, %s215
      %p217 = scmp.eq.s32.totalorder %s91, 0
      %p218 = por %p216, %p217
      %s220 = sadd.s32 %s219, 1
      %p223 = scmp.eq.s32.totalorder %s85, 1
      %p224 = scmp.ne.s32.totalorder %s219, %s221
      %p225 = scmp.eq.s32.totalorder %s85, 0
      %p226 = por %p224, %p225
      %p227 = scmp.ne.s32.totalorder %s219, %s221
      %p228 = scmp.eq.s32.totalorder %s90, 1
      %p229 = por %p227, %p228
      %p230 = scmp.ne.s32.totalorder %s221, %s222
      %p231 = scmp.eq.s32.totalorder %s90, 0
      %p232 = por %p230, %p231
      %p233 = scmp.ne.s32.totalorder %s221, %s222
      %p234 = scmp.eq.s32.totalorder %s91, 1
      %p235 = por %p233, %p234
      %p237 = scmp.ne.s32.totalorder %s222, %s236
      %p238 = scmp.eq.s32.totalorder %s91, 0
      %p239 = por %p237, %p238
      %s241 = sadd.s32 %s240, 1
      %p244 = scmp.eq.s32.totalorder %s85, 1
      %p245 = scmp.ne.s32.totalorder %s240, %s242
      %p246 = scmp.eq.s32.totalorder %s85, 0
      %p247 = por %p245, %p246
      %p248 = scmp.ne.s32.totalorder %s240, %s242
      %p249 = scmp.eq.s32.totalorder %s90, 1
      %p250 = por %p248, %p249
      %p251 = scmp.ne.s32.totalorder %s242, %s243
      %p252 = scmp.eq.s32.totalorder %s90, 0
      %p253 = por %p251, %p252
      %p254 = scmp.ne.s32.totalorder %s242, %s243
      %p255 = scmp.eq.s32.totalorder %s91, 1
      %p256 = por %p254, %p255
      %p258 = scmp.ne.s32.totalorder %s243, %s257
      %p259 = scmp.eq.s32.totalorder %s91, 0
      %p260 = por %p258, %p259
      %s262 = sadd.s32 %s261, 1
      %p265 = scmp.eq.s32.totalorder %s85, 1
      %p266 = scmp.ne.s32.totalorder %s261, %s263
      %p267 = scmp.eq.s32.totalorder %s85, 0
      %p268 = por %p266, %p267
      %p269 = scmp.ne.s32.totalorder %s261, %s263
      %p270 = scmp.eq.s32.totalorder %s90, 1
      %p271 = por %p269, %p270
      %p272 = scmp.ne.s32.totalorder %s263, %s264
      %p273 = scmp.eq.s32.totalorder %s90, 0
      %p274 = por %p272, %p273
      %p275 = scmp.ne.s32.totalorder %s263, %s264
      %p276 = scmp.eq.s32.totalorder %s91, 1
      %p277 = por %p275, %p276
      %p279 = scmp.ne.s32.totalorder %s264, %s278
      %p280 = scmp.eq.s32.totalorder %s91, 0
      %p281 = por %p279, %p280
      %s283 = sadd.s32 %s282, 1
      %p286 = scmp.eq.s32.totalorder %s85, 1
      %p287 = scmp.ne.s32.totalorder %s282, %s284
      %p288 = scmp.eq.s32.totalorder %s85, 0
      %p289 = por %p287, %p288
      %p290 = scmp.ne.s32.totalorder %s282, %s284
      %p291 = scmp.eq.s32.totalorder %s90, 1
      %p292 = por %p290, %p291
      %p293 = scmp.ne.s32.totalorder %s284, %s285
      %p294 = scmp.eq.s32.totalorder %s90, 0
      %p295 = por %p293, %p294
      %p296 = scmp.ne.s32.totalorder %s284, %s285
      %p297 = scmp.eq.s32.totalorder %s91, 1
      %p298 = por %p296, %p297
      %p300 = scmp.ne.s32.totalorder %s285, %s299
      %p301 = scmp.eq.s32.totalorder %s91, 0
      %p302 = por %p300, %p301
      %s304 = sadd.s32 %s303, 1
      %p307 = scmp.eq.s32.totalorder %s85, 1
      %p308 = scmp.ne.s32.totalorder %s303, %s305
      %p309 = scmp.eq.s32.totalorder %s85, 0
      %p310 = por %p308, %p309
      %p311 = scmp.ne.s32.totalorder %s303, %s305
      %p312 = scmp.eq.s32.totalorder %s90, 1
      %p313 = por %p311, %p312
      %p314 = scmp.ne.s32.totalorder %s305, %s306
      %p315 = scmp.eq.s32.totalorder %s90, 0
      %p316 = por %p314, %p315
      %p317 = scmp.ne.s32.totalorder %s305, %s306
      %p318 = scmp.eq.s32.totalorder %s91, 1
      %p319 = por %p317, %p318
      %p321 = scmp.ne.s32.totalorder %s306, %s320
      %p322 = scmp.eq.s32.totalorder %s91, 0
      %p323 = por %p321, %p322
      %s325 = sadd.s32 %s324, 1
      %p328 = scmp.eq.s32.totalorder %s85, 1
      %p329 = scmp.ne.s32.totalorder %s324, %s326
      %p330 = scmp.eq.s32.totalorder %s85, 0
      %p331 = por %p329, %p330
      %p332 = scmp.ne.s32.totalorder %s324, %s326
      %p333 = scmp.eq.s32.totalorder %s90, 1
      %p334 = por %p332, %p333
      %p335 = scmp.ne.s32.totalorder %s326, %s327
      %p336 = scmp.eq.s32.totalorder %s90, 0
      %p337 = por %p335, %p336
      %p338 = scmp.ne.s32.totalorder %s326, %s327
      %p339 = scmp.eq.s32.totalorder %s91, 1
      %p340 = por %p338, %p339
      %p342 = scmp.ne.s32.totalorder %s327, %s341
      %p343 = scmp.eq.s32.totalorder %s91, 0
      %p344 = por %p342, %p343
      %s346 = sadd.s32 %s345, 1
      %p349 = scmp.eq.s32.totalorder %s85, 1
      %p350 = scmp.ne.s32.totalorder %s345, %s347
      %p351 = scmp.eq.s32.totalorder %s85, 0
      %p352 = por %p350, %p351
      %p353 = scmp.ne.s32.totalorder %s345, %s347
      %p354 = scmp.eq.s32.totalorder %s90, 1
      %p355 = por %p353, %p354
      %p356 = scmp.ne.s32.totalorder %s347, %s348
      %p357 = scmp.eq.s32.totalorder %s90, 0
      %p358 = por %p356, %p357
      %p359 = scmp.ne.s32.totalorder %s347, %s348
      %p360 = scmp.eq.s32.totalorder %s91, 1
      %p361 = por %p359, %p360
      %p363 = scmp.ne.s32.totalorder %s348, %s362
      %p364 = scmp.eq.s32.totalorder %s91, 0
      %p365 = por %p363, %p364
      %s367 = sadd.s32 %s366, 1
      %p370 = scmp.eq.s32.totalorder %s85, 1
      %p371 = scmp.ne.s32.totalorder %s366, %s368
      %p372 = scmp.eq.s32.totalorder %s85, 0
      %p373 = por %p371, %p372
      %p374 = scmp.ne.s32.totalorder %s366, %s368
      %p375 = scmp.eq.s32.totalorder %s90, 1
      %p376 = por %p374, %p375
      %p377 = scmp.ne.s32.totalorder %s368, %s369
      %p378 = scmp.eq.s32.totalorder %s90, 0
      %p379 = por %p377, %p378
      %p380 = scmp.ne.s32.totalorder %s368, %s369
      %p381 = scmp.eq.s32.totalorder %s91, 1
      %p382 = por %p380, %p381
      %p384 = scmp.ne.s32.totalorder %s369, %s383
      %p385 = scmp.eq.s32.totalorder %s91, 0
      %p386 = por %p384, %p385
      %s388 = sadd.s32 %s387, 1
      %p391 = scmp.eq.s32.totalorder %s85, 1
      %p392 = scmp.ne.s32.totalorder %s387, %s389
      %p393 = scmp.eq.s32.totalorder %s85, 0
      %p394 = por %p392, %p393
      %p395 = scmp.ne.s32.totalorder %s387, %s389
      %p396 = scmp.eq.s32.totalorder %s90, 1
      %p397 = por %p395, %p396
      %p398 = scmp.ne.s32.totalorder %s389, %s390
      %p399 = scmp.eq.s32.totalorder %s90, 0
      %p400 = por %p398, %p399
      %p401 = scmp.ne.s32.totalorder %s389, %s390
      %p402 = scmp.eq.s32.totalorder %s91, 1
      %p403 = por %p401, %p402
      %p405 = scmp.ne.s32.totalorder %s390, %s404
      %p406 = scmp.eq.s32.totalorder %s91, 0
      %p407 = por %p405, %p406
      %s409 = sadd.s32 %s408, 1
      %p412 = scmp.eq.s32.totalorder %s85, 1
      %p413 = scmp.ne.s32.totalorder %s408, %s410
      %p414 = scmp.eq.s32.totalorder %s85, 0
      %p415 = por %p413, %p414
      %p416 = scmp.ne.s32.totalorder %s408, %s410
      %p417 = scmp.eq.s32.totalorder %s90, 1
      %p418 = por %p416, %p417
      %p419 = scmp.ne.s32.totalorder %s410, %s411
      %p420 = scmp.eq.s32.totalorder %s90, 0
      %p421 = por %p419, %p420
      %p422 = scmp.ne.s32.totalorder %s410, %s411
      %p423 = scmp.eq.s32.totalorder %s91, 1
      %p424 = por %p422, %p423
      %p426 = scmp.ne.s32.totalorder %s411, %s425
      %p427 = scmp.eq.s32.totalorder %s91, 0
      %p428 = por %p426, %p427
      %s430 = sadd.s32 %s429, 1
      %p433 = scmp.eq.s32.totalorder %s85, 1
      %p434 = scmp.ne.s32.totalorder %s429, %s431
      %p435 = scmp.eq.s32.totalorder %s85, 0
      %p436 = por %p434, %p435
      %p437 = scmp.ne.s32.totalorder %s429, %s431
      %p438 = scmp.eq.s32.totalorder %s90, 1
      %p439 = por %p437, %p438
      %p440 = scmp.ne.s32.totalorder %s431, %s432
      %p441 = scmp.eq.s32.totalorder %s90, 0
      %p442 = por %p440, %p441
      %p443 = scmp.ne.s32.totalorder %s431, %s432
      %p444 = scmp.eq.s32.totalorder %s91, 1
      %p445 = por %p443, %p444
      %p447 = scmp.ne.s32.totalorder %s432, %s446
      %p448 = scmp.eq.s32.totalorder %s91, 0
      %p449 = por %p447, %p448
      %s451 = sadd.s32 %s450, 1
      %p454 = scmp.eq.s32.totalorder %s85, 1
      %p455 = scmp.ne.s32.totalorder %s450, %s452
      %p456 = scmp.eq.s32.totalorder %s85, 0
      %p457 = por %p455, %p456
      %p458 = scmp.ne.s32.totalorder %s450, %s452
      %p459 = scmp.eq.s32.totalorder %s90, 1
      %p460 = por %p458, %p459
      %p461 = scmp.ne.s32.totalorder %s452, %s453
      %p462 = scmp.eq.s32.totalorder %s90, 0
      %p463 = por %p461, %p462
      %p464 = scmp.ne.s32.totalorder %s452, %s453
      %p465 = scmp.eq.s32.totalorder %s91, 1
      %p466 = por %p464, %p465
      %p468 = scmp.ne.s32.totalorder %s453, %s467
      %p469 = scmp.eq.s32.totalorder %s91, 0
      %p470 = por %p468, %p469
      %s472 = sadd.s32 %s471, 1
      %p475 = scmp.eq.s32.totalorder %s85, 1
      %p476 = scmp.ne.s32.totalorder %s471, %s473
      %p477 = scmp.eq.s32.totalorder %s85, 0
      %p478 = por %p476, %p477
      %p479 = scmp.ne.s32.totalorder %s471, %s473
      %p480 = scmp.eq.s32.totalorder %s90, 1
      %p481 = por %p479, %p480
      %p482 = scmp.ne.s32.totalorder %s473, %s474
      %p483 = scmp.eq.s32.totalorder %s90, 0
      %p484 = por %p482, %p483
      %p485 = scmp.ne.s32.totalorder %s473, %s474
      %p486 = scmp.eq.s32.totalorder %s91, 1
      %p487 = por %p485, %p486
      %p489 = scmp.ne.s32.totalorder %s474, %s488
      %p490 = scmp.eq.s32.totalorder %s91, 0
      %p491 = por %p489, %p490
      %s493 = sadd.s32 %s492, 1
      %p496 = scmp.eq.s32.totalorder %s85, 1
      %p497 = scmp.ne.s32.totalorder %s492, %s494
      %p498 = scmp.eq.s32.totalorder %s85, 0
      %p499 = por %p497, %p498
      %p500 = scmp.ne.s32.totalorder %s492, %s494
      %p501 = scmp.eq.s32.totalorder %s90, 1
      %p502 = por %p500, %p501
      %p503 = scmp.ne.s32.totalorder %s494, %s495
      %p504 = scmp.eq.s32.totalorder %s90, 0
      %p505 = por %p503, %p504
      %p506 = scmp.ne.s32.totalorder %s494, %s495
      %p507 = scmp.eq.s32.totalorder %s91, 1
      %p508 = por %p506, %p507
      %p510 = scmp.ne.s32.totalorder %s495, %s509
      %p511 = scmp.eq.s32.totalorder %s91, 0
      %p512 = por %p510, %p511
      %s514 = sadd.s32 %s513, 1
      %p517 = scmp.eq.s32.totalorder %s85, 1
      %p518 = scmp.ne.s32.totalorder %s513, %s515
      %p519 = scmp.eq.s32.totalorder %s85, 0
      %p520 = por %p518, %p519
      %p521 = scmp.ne.s32.totalorder %s513, %s515
      %p522 = scmp.eq.s32.totalorder %s90, 1
      %p523 = por %p521, %p522
      %p524 = scmp.ne.s32.totalorder %s515, %s516
      %p525 = scmp.eq.s32.totalorder %s90, 0
      %p526 = por %p524, %p525
      %p527 = scmp.ne.s32.totalorder %s515, %s516
      %p528 = scmp.eq.s32.totalorder %s91, 1
      %p529 = por %p527, %p528
      %p531 = scmp.ne.s32.totalorder %s516, %s530
      %p532 = scmp.eq.s32.totalorder %s91, 0
      %p533 = por %p531, %p532
      %s535 = sadd.s32 %s534, 1
      %p538 = scmp.eq.s32.totalorder %s85, 1
      %p539 = scmp.ne.s32.totalorder %s534, %s536
      %p540 = scmp.eq.s32.totalorder %s85, 0
      %p541 = por %p539, %p540
      %p542 = scmp.ne.s32.totalorder %s534, %s536
      %p543 = scmp.eq.s32.totalorder %s90, 1
      %p544 = por %p542, %p543
      %p545 = scmp.ne.s32.totalorder %s536, %s537
      %p546 = scmp.eq.s32.totalorder %s90, 0
      %p547 = por %p545, %p546
      %p548 = scmp.ne.s32.totalorder %s536, %s537
      %p549 = scmp.eq.s32.totalorder %s91, 1
      %p550 = por %p548, %p549
      %p552 = scmp.ne.s32.totalorder %s537, %s551
      %p553 = scmp.eq.s32.totalorder %s91, 0
      %p554 = por %p552, %p553
      %s556 = sadd.s32 %s555, 1
      %p559 = scmp.eq.s32.totalorder %s85, 1
      %p560 = scmp.ne.s32.totalorder %s555, %s557
      %p561 = scmp.eq.s32.totalorder %s85, 0
      %p562 = por %p560, %p561
      %p563 = scmp.ne.s32.totalorder %s555, %s557
      %p564 = scmp.eq.s32.totalorder %s90, 1
      %p565 = por %p563, %p564
      %p566 = scmp.ne.s32.totalorder %s557, %s558
      %p567 = scmp.eq.s32.totalorder %s90, 0
      %p568 = por %p566, %p567
      %p569 = scmp.ne.s32.totalorder %s557, %s558
      %p570 = scmp.eq.s32.totalorder %s91, 1
      %p571 = por %p569, %p570
      %p573 = scmp.ne.s32.totalorder %s558, %s572
      %p574 = scmp.eq.s32.totalorder %s91, 0
      %p575 = por %p573, %p574
      %s576 = ssub.s32 %s85, %s92
      %p577 = scmp.eq.s32.totalorder %s576, 0
      %s579 = sadd.s32 %s578, 1
      %s580 = scalar_select %p577, %s578, %s579
      %p583 = pneg %p577
      %p584 = scmp.eq.s32.totalorder %s85, 1
      %p585 = por %p583, %p584
      %p586 = scmp.ne.s32.totalorder %s578, %s581
      %p587 = scmp.eq.s32.totalorder %s85, 0
      %p588 = por %p586, %p587
      %p589 = scmp.ne.s32.totalorder %s578, %s581
      %p590 = scmp.eq.s32.totalorder %s90, 1
      %p591 = por %p589, %p590
      %p592 = scmp.ne.s32.totalorder %s581, %s582
      %p593 = scmp.eq.s32.totalorder %s90, 0
      %p594 = por %p592, %p593
      %p595 = scmp.ne.s32.totalorder %s581, %s582
      %p596 = scmp.eq.s32.totalorder %s91, 1
      %p597 = por %p595, %p596
      %p599 = scmp.ne.s32.totalorder %s582, %s598
      %p600 = scmp.eq.s32.totalorder %s91, 0
      %p601 = por %p599, %p600
      %s602 = ssub.s32 %s85, %s92
      %p603 = scmp.eq.s32.totalorder %s602, 0
      %s605 = sadd.s32 %s604, 1
      %s606 = scalar_select %p603, %s604, %s605
      %p609 = pneg %p603
      %p610 = scmp.eq.s32.totalorder %s85, 1
      %p611 = por %p609, %p610
      %p612 = scmp.ne.s32.totalorder %s604, %s607
      %p613 = scmp.eq.s32.totalorder %s85, 0
      %p614 = por %p612, %p613
      %p615 = scmp.ne.s32.totalorder %s604, %s607
      %p616 = scmp.eq.s32.totalorder %s90, 1
      %p617 = por %p615, %p616
      %p618 = scmp.ne.s32.totalorder %s607, %s608
      %p619 = scmp.eq.s32.totalorder %s90, 0
      %p620 = por %p618, %p619
      %p621 = scmp.ne.s32.totalorder %s607, %s608
      %p622 = scmp.eq.s32.totalorder %s91, 1
      %p623 = por %p621, %p622
      %p625 = scmp.ne.s32.totalorder %s608, %s624
      %p626 = scmp.eq.s32.totalorder %s91, 0
      %p627 = por %p625, %p626
      %s628 = ssub.s32 %s85, %s92
      %p629 = scmp.eq.s32.totalorder %s628, 0
      %s631 = sadd.s32 %s630, 1
      %s632 = scalar_select %p629, %s630, %s631
      %p635 = pneg %p629
      %p636 = scmp.eq.s32.totalorder %s85, 1
      %p637 = por %p635, %p636
      %p638 = scmp.ne.s32.totalorder %s630, %s633
      %p639 = scmp.eq.s32.totalorder %s85, 0
      %p640 = por %p638, %p639
      %p641 = scmp.ne.s32.totalorder %s630, %s633
      %p642 = scmp.eq.s32.totalorder %s90, 1
      %p643 = por %p641, %p642
      %p644 = scmp.ne.s32.totalorder %s633, %s634
      %p645 = scmp.eq.s32.totalorder %s90, 0
      %p646 = por %p644, %p645
      %p647 = scmp.ne.s32.totalorder %s633, %s634
      %p648 = scmp.eq.s32.totalorder %s91, 1
      %p649 = por %p647, %p648
      %p651 = scmp.ne.s32.totalorder %s634, %s650
      %p652 = scmp.eq.s32.totalorder %s91, 0
      %p653 = por %p651, %p652
      %s654 = ssub.s32 %s85, %s92
      %p655 = scmp.eq.s32.totalorder %s654, 0
      %s657 = sadd.s32 %s656, 1
      %s658 = scalar_select %p655, %s656, %s657
      %p661 = pneg %p655
      %p662 = scmp.eq.s32.totalorder %s85, 1
      %p663 = por %p661, %p662
      %p664 = scmp.ne.s32.totalorder %s656, %s659
      %p665 = scmp.eq.s32.totalorder %s85, 0
      %p666 = por %p664, %p665
      %p667 = scmp.ne.s32.totalorder %s656, %s659
      %p668 = scmp.eq.s32.totalorder %s90, 1
      %p669 = por %p667, %p668
      %p670 = scmp.ne.s32.totalorder %s659, %s660
      %p671 = scmp.eq.s32.totalorder %s90, 0
      %p672 = por %p670, %p671
      %p673 = scmp.ne.s32.totalorder %s659, %s660
      %p674 = scmp.eq.s32.totalorder %s91, 1
      %p675 = por %p673, %p674
      %p677 = scmp.ne.s32.totalorder %s660, %s676
      %p678 = scmp.eq.s32.totalorder %s91, 0
      %p679 = por %p677, %p678
      %s680 = ssub.s32 %s85, %s92
      %p681 = scmp.eq.s32.totalorder %s680, 0
      %s683 = sadd.s32 %s682, 1
      %s684 = scalar_select %p681, %s682, %s683
      %p687 = pneg %p681
      %p688 = scmp.eq.s32.totalorder %s85, 1
      %p689 = por %p687, %p688
      %p690 = scmp.ne.s32.totalorder %s682, %s685
      %p691 = scmp.eq.s32.totalorder %s85, 0
      %p692 = por %p690, %p691
      %p693 = scmp.ne.s32.totalorder %s682, %s685
      %p694 = scmp.eq.s32.totalorder %s90, 1
      %p695 = por %p693, %p694
      %p696 = scmp.ne.s32.totalorder %s685, %s686
      %p697 = scmp.eq.s32.totalorder %s90, 0
      %p698 = por %p696, %p697
      %p699 = scmp.ne.s32.totalorder %s685, %s686
      %p700 = scmp.eq.s32.totalorder %s91, 1
      %p701 = por %p699, %p700
      %p703 = scmp.ne.s32.totalorder %s686, %s702
      %p704 = scmp.eq.s32.totalorder %s91, 0
      %p705 = por %p703, %p704
      %s706 = ssub.s32 %s85, %s92
      %p707 = scmp.eq.s32.totalorder %s706, 0
      %s709 = sadd.s32 %s708, 1
      %s710 = scalar_select %p707, %s708, %s709
      %p713 = pneg %p707
      %p714 = scmp.eq.s32.totalorder %s85, 1
      %p715 = por %p713, %p714
      %p716 = scmp.ne.s32.totalorder %s708, %s711
      %p717 = scmp.eq.s32.totalorder %s85, 0
      %p718 = por %p716, %p717
      %p719 = scmp.ne.s32.totalorder %s708, %s711
      %p720 = scmp.eq.s32.totalorder %s90, 1
      %p721 = por %p719, %p720
      %p722 = scmp.ne.s32.totalorder %s711, %s712
      %p723 = scmp.eq.s32.totalorder %s90, 0
      %p724 = por %p722, %p723
      %p725 = scmp.ne.s32.totalorder %s711, %s712
      %p726 = scmp.eq.s32.totalorder %s91, 1
      %p727 = por %p725, %p726
      %p729 = scmp.ne.s32.totalorder %s712, %s728
      %p730 = scmp.eq.s32.totalorder %s91, 0
      %p731 = por %p729, %p730
      %s732 = ssub.s32 %s85, %s92
      %p733 = scmp.eq.s32.totalorder %s732, 0
      %s735 = sadd.s32 %s734, 1
      %s736 = scalar_select %p733, %s734, %s735
      %p739 = pneg %p733
      %p740 = scmp.eq.s32.totalorder %s85, 1
      %p741 = por %p739, %p740
      %p742 = scmp.ne.s32.totalorder %s734, %s737
      %p743 = scmp.eq.s32.totalorder %s85, 0
      %p744 = por %p742, %p743
      %p745 = scmp.ne.s32.totalorder %s734, %s737
      %p746 = scmp.eq.s32.totalorder %s90, 1
      %p747 = por %p745, %p746
      %p748 = scmp.ne.s32.totalorder %s737, %s738
      %p749 = scmp.eq.s32.totalorder %s90, 0
      %p750 = por %p748, %p749
      %p751 = scmp.ne.s32.totalorder %s737, %s738
      %p752 = scmp.eq.s32.totalorder %s91, 1
      %p753 = por %p751, %p752
      %p755 = scmp.ne.s32.totalorder %s738, %s754
      %p756 = scmp.eq.s32.totalorder %s91, 0
      %p757 = por %p755, %p756
      %s758 = ssub.s32 %s85, %s92
      %p759 = scmp.eq.s32.totalorder %s758, 0
      %s761 = sadd.s32 %s760, 1
      %s762 = scalar_select %p759, %s760, %s761
      %p765 = pneg %p759
      %p766 = scmp.eq.s32.totalorder %s85, 1
      %p767 = por %p765, %p766
      %p768 = scmp.ne.s32.totalorder %s760, %s763
      %p769 = scmp.eq.s32.totalorder %s85, 0
      %p770 = por %p768, %p769
      %p771 = scmp.ne.s32.totalorder %s760, %s763
      %p772 = scmp.eq.s32.totalorder %s90, 1
      %p773 = por %p771, %p772
      %p774 = scmp.ne.s32.totalorder %s763, %s764
      %p775 = scmp.eq.s32.totalorder %s90, 0
      %p776 = por %p774, %p775
      %p777 = scmp.ne.s32.totalorder %s763, %s764
      %p778 = scmp.eq.s32.totalorder %s91, 1
      %p779 = por %p777, %p778
      %p781 = scmp.ne.s32.totalorder %s764, %s780
      %p782 = scmp.eq.s32.totalorder %s91, 0
      %p783 = por %p781, %p782
      %s784 = ssub.s32 %s85, %s92
      %p785 = scmp.eq.s32.totalorder %s784, 0
      %s787 = sadd.s32 %s786, 1
      %s788 = scalar_select %p785, %s786, %s787
      %p791 = pneg %p785
      %p792 = scmp.eq.s32.totalorder %s85, 1
      %p793 = por %p791, %p792
      %p794 = scmp.ne.s32.totalorder %s786, %s789
      %p795 = scmp.eq.s32.totalorder %s85, 0
      %p796 = por %p794, %p795
      %p797 = scmp.ne.s32.totalorder %s786, %s789
      %p798 = scmp.eq.s32.totalorder %s90, 1
      %p799 = por %p797, %p798
      %p800 = scmp.ne.s32.totalorder %s789, %s790
      %p801 = scmp.eq.s32.totalorder %s90, 0
      %p802 = por %p800, %p801
      %p803 = scmp.ne.s32.totalorder %s789, %s790
      %p804 = scmp.eq.s32.totalorder %s91, 1
      %p805 = por %p803, %p804
      %p807 = scmp.ne.s32.totalorder %s790, %s806
      %p808 = scmp.eq.s32.totalorder %s91, 0
      %p809 = por %p807, %p808
      %s810 = ssub.s32 %s85, %s92
      %p811 = scmp.eq.s32.totalorder %s810, 0
      %s813 = sadd.s32 %s812, 1
      %s814 = scalar_select %p811, %s812, %s813
      %p817 = pneg %p811
      %p818 = scmp.eq.s32.totalorder %s85, 1
      %p819 = por %p817, %p818
      %p820 = scmp.ne.s32.totalorder %s812, %s815
      %p821 = scmp.eq.s32.totalorder %s85, 0
      %p822 = por %p820, %p821
      %p823 = scmp.ne.s32.totalorder %s812, %s815
      %p824 = scmp.eq.s32.totalorder %s90, 1
      %p825 = por %p823, %p824
      %p826 = scmp.ne.s32.totalorder %s815, %s816
      %p827 = scmp.eq.s32.totalorder %s90, 0
      %p828 = por %p826, %p827
      %p829 = scmp.ne.s32.totalorder %s815, %s816
      %p830 = scmp.eq.s32.totalorder %s91, 1
      %p831 = por %p829, %p830
      %p833 = scmp.ne.s32.totalorder %s816, %s832
      %p834 = scmp.eq.s32.totalorder %s91, 0
      %p835 = por %p833, %p834
      %s836 = ssub.s32 %s85, %s92
      %p837 = scmp.eq.s32.totalorder %s836, 0
      %s839 = sadd.s32 %s838, 1
      %s840 = scalar_select %p837, %s838, %s839
      %p843 = pneg %p837
      %p844 = scmp.eq.s32.totalorder %s85, 1
      %p845 = por %p843, %p844
      %p846 = scmp.ne.s32.totalorder %s838, %s841
      %p847 = scmp.eq.s32.totalorder %s85, 0
      %p848 = por %p846, %p847
      %p849 = scmp.ne.s32.totalorder %s838, %s841
      %p850 = scmp.eq.s32.totalorder %s90, 1
      %p851 = por %p849, %p850
      %p852 = scmp.ne.s32.totalorder %s841, %s842
      %p853 = scmp.eq.s32.totalorder %s90, 0
      %p854 = por %p852, %p853
      %p855 = scmp.ne.s32.totalorder %s841, %s842
      %p856 = scmp.eq.s32.totalorder %s91, 1
      %p857 = por %p855, %p856
      %p859 = scmp.ne.s32.totalorder %s842, %s858
      %p860 = scmp.eq.s32.totalorder %s91, 0
      %p861 = por %p859, %p860
      %s862 = ssub.s32 %s85, %s92
      %p863 = scmp.eq.s32.totalorder %s862, 0
      %s865 = sadd.s32 %s864, 1
      %s866 = scalar_select %p863, %s864, %s865
      %p869 = pneg %p863
      %p870 = scmp.eq.s32.totalorder %s85, 1
      %p871 = por %p869, %p870
      %p872 = scmp.ne.s32.totalorder %s864, %s867
      %p873 = scmp.eq.s32.totalorder %s85, 0
      %p874 = por %p872, %p873
      %p875 = scmp.ne.s32.totalorder %s864, %s867
      %p876 = scmp.eq.s32.totalorder %s90, 1
      %p877 = por %p875, %p876
      %p878 = scmp.ne.s32.totalorder %s867, %s868
      %p879 = scmp.eq.s32.totalorder %s90, 0
      %p880 = por %p878, %p879
      %p881 = scmp.ne.s32.totalorder %s867, %s868
      %p882 = scmp.eq.s32.totalorder %s91, 1
      %p883 = por %p881, %p882
      %p885 = scmp.ne.s32.totalorder %s868, %s884
      %p886 = scmp.eq.s32.totalorder %s91, 0
      %p887 = por %p885, %p886
      %s889 = sadd.s32 %s888, 1
      %p892 = scmp.eq.s32.totalorder %s85, 1
      %p893 = scmp.ne.s32.totalorder %s888, %s890
      %p894 = scmp.eq.s32.totalorder %s85, 0
      %p895 = por %p893, %p894
      %p896 = scmp.ne.s32.totalorder %s888, %s890
      %p897 = scmp.eq.s32.totalorder %s90, 1
      %p898 = por %p896, %p897
      %p899 = scmp.ne.s32.totalorder %s890, %s891
      %p900 = scmp.eq.s32.totalorder %s90, 0
      %p901 = por %p899, %p900
      %p902 = scmp.ne.s32.totalorder %s890, %s891
      %p903 = scmp.eq.s32.totalorder %s91, 1
      %p904 = por %p902, %p903
      %p906 = scmp.ne.s32.totalorder %s891, %s905
      %p907 = scmp.eq.s32.totalorder %s91, 0
      %p908 = por %p906, %p907
      %p909 = scmp.le.s32.totalorder 1, %s85
      %p910 = scmp.lt.s32.totalorder %s85, 3
      %p911 = pnand %p909, %p910
      %p912 = pneg %p911
      // Predicated region
      $region9: #{tpu_custom_call.1} parent=5 // pred_check
        _
      $region10: #{tpu_custom_call.1} parent=5 // pred_check_branch
        %914 = sbr.rel (%p911) target = $region12
      $region11: #{tpu_custom_call.1} parent=5 // pred_region
        %s915 = ssub.s32 %s85, 1
        // Predicated region
        $region13: #{tpu_custom_call.1} parent=11 // pred_check
          %p916 = pneg %p106
        $region14: #{tpu_custom_call.1} parent=11 // pred_check_branch
          %918 = sbr.rel (%p916) target = $region16
        $region15: #{tpu_custom_call.1} parent=11 // pred_region
          _
        $region16: #{tpu_custom_call.1} parent=11 // pred_fallthru
          _
        // Predicated region
        $region17: #{tpu_custom_call.1} parent=11 // pred_check
          %p919 = pneg %p127
        $region18: #{tpu_custom_call.1} parent=11 // pred_check_branch
          %921 = sbr.rel (%p919) target = $region20
        $region19: #{tpu_custom_call.1} parent=11 // pred_region
          %s923 = ssub.s32 512, 512
          %924 = vsyncadd [#allocation4], %s923
          %s925 = sshll.u32 [#allocation3], 4
          %s926 = int_to_ptr.vmem [resolvable:$true] %s925
          %931 = dma.hbm_to_vmem [thread:$0]  %s3, 512, %s926, [#allocation4], 128, 128, 8
        $region20: #{tpu_custom_call.1} parent=11 // pred_fallthru
          _
        // Predicated region
        $region21: #{tpu_custom_call.1} parent=11 // pred_check
          %p932 = pneg %p148
        $region22: #{tpu_custom_call.1} parent=11 // pred_check_branch
          %934 = sbr.rel (%p932) target = $region24
        $region23: #{tpu_custom_call.1} parent=11 // pred_region
          %s936 = ssub.s32 512, 512
          %937 = vsyncadd [#allocation7], %s936
          %s938 = sshll.u32 [#allocation6], 4
          %s939 = int_to_ptr.vmem [resolvable:$true] %s938
          %944 = dma.hbm_to_vmem [thread:$0]  %s5, 512, %s939, [#allocation7], 128, 128, 8
        $region24: #{tpu_custom_call.1} parent=11 // pred_fallthru
          _
        // Predicated region
        $region25: #{tpu_custom_call.1} parent=11 // pred_check
          %p945 = pneg %p169
        $region26: #{tpu_custom_call.1} parent=11 // pred_check_branch
          %947 = sbr.rel (%p945) target = $region28
        $region27: #{tpu_custom_call.1} parent=11 // pred_region
          _
        $region28: #{tpu_custom_call.1} parent=11 // pred_fallthru
          _
        // Predicated region
        $region29: #{tpu_custom_call.1} parent=11 // pred_check
          %p948 = pneg %p190
        $region30: #{tpu_custom_call.1} parent=11 // pred_check_branch
          %950 = sbr.rel (%p948) target = $region32
        $region31: #{tpu_custom_call.1} parent=11 // pred_region
          %s952 = ssub.s32 16, 16
          %953 = vsyncadd [#allocation7], %s952
          %s955 = sshll.u32 [#allocation8], 4
          %s956 = int_to_ptr.vmem [resolvable:$true] %s955
          %958 = dma.hbm_to_vmem [thread:$0]  %s9, 16, %s956, [#allocation7]
        $region32: #{tpu_custom_call.1} parent=11 // pred_fallthru
          _
        // Predicated region
        $region33: #{tpu_custom_call.1} parent=11 // pred_check
          %p959 = pneg %p211
        $region34: #{tpu_custom_call.1} parent=11 // pred_check_branch
          %961 = sbr.rel (%p959) target = $region36
        $region35: #{tpu_custom_call.1} parent=11 // pred_region
          _
        $region36: #{tpu_custom_call.1} parent=11 // pred_fallthru
          _
        // Predicated region
        $region37: #{tpu_custom_call.1} parent=11 // pred_check
          %p962 = pneg %p232
        $region38: #{tpu_custom_call.1} parent=11 // pred_check_branch
          %964 = sbr.rel (%p962) target = $region40
        $region39: #{tpu_custom_call.1} parent=11 // pred_region
          %s966 = ssub.s32 16, 16
          %967 = vsyncadd [#allocation10], %s966
          %s969 = sshll.u32 [#allocation9], 4
          %s970 = int_to_ptr.vmem [resolvable:$true] %s969
          %972 = dma.hbm_to_vmem [thread:$0]  %s13, 16, %s970, [#allocation10]
        $region40: #{tpu_custom_call.1} parent=11 // pred_fallthru
          _
        // Predicated region
        $region41: #{tpu_custom_call.1} parent=11 // pred_check
          %p973 = pneg %p253
        $region42: #{tpu_custom_call.1} parent=11 // pred_check_branch
          %975 = sbr.rel (%p973) target = $region44
        $region43: #{tpu_custom_call.1} parent=11 // pred_region
          _
        $region44: #{tpu_custom_call.1} parent=11 // pred_fallthru
          _
        // Predicated region
        $region45: #{tpu_custom_call.1} parent=11 // pred_check
          %p976 = pneg %p274
        $region46: #{tpu_custom_call.1} parent=11 // pred_check_branch
          %978 = sbr.rel (%p976) target = $region48
        $region47: #{tpu_custom_call.1} parent=11 // pred_region
          _
        $region48: #{tpu_custom_call.1} parent=11 // pred_fallthru
          _
        // Predicated region
        $region49: #{tpu_custom_call.1} parent=11 // pred_check
          %p979 = pneg %p295
        $region50: #{tpu_custom_call.1} parent=11 // pred_check_branch
          %981 = sbr.rel (%p979) target = $region52
        $region51: #{tpu_custom_call.1} parent=11 // pred_region
          %s983 = ssub.s32 16, 16
          %984 = vsyncadd [#allocation10], %s983
          %s986 = sshll.u32 [#allocation11], 4
          %s987 = int_to_ptr.vmem [resolvable:$true] %s986
          %989 = dma.hbm_to_vmem [thread:$0]  %s19, 16, %s987, [#allocation10]
        $region52: #{tpu_custom_call.1} parent=11 // pred_fallthru
          _
        // Predicated region
        $region53: #{tpu_custom_call.1} parent=11 // pred_check
          %p990 = pneg %p316
        $region54: #{tpu_custom_call.1} parent=11 // pred_check_branch
          %992 = sbr.rel (%p990) target = $region56
        $region55: #{tpu_custom_call.1} parent=11 // pred_region
          _
        $region56: #{tpu_custom_call.1} parent=11 // pred_fallthru
          _
        // Predicated region
        $region57: #{tpu_custom_call.1} parent=11 // pred_check
          %p993 = pneg %p337
        $region58: #{tpu_custom_call.1} parent=11 // pred_check_branch
          %995 = sbr.rel (%p993) target = $region60
        $region59: #{tpu_custom_call.1} parent=11 // pred_region
          %s997 = ssub.s32 16, 16
          %998 = vsyncadd [#allocation13], %s997
          %s1000 = sshll.u32 [#allocation12], 4
          %s1001 = int_to_ptr.vmem [resolvable:$true] %s1000
          %1003 = dma.hbm_to_vmem [thread:$0]  %s23, 16, %s1001, [#allocation13]
        $region60: #{tpu_custom_call.1} parent=11 // pred_fallthru
          _
        // Predicated region
        $region61: #{tpu_custom_call.1} parent=11 // pred_check
          %p1004 = pneg %p358
        $region62: #{tpu_custom_call.1} parent=11 // pred_check_branch
          %1006 = sbr.rel (%p1004) target = $region64
        $region63: #{tpu_custom_call.1} parent=11 // pred_region
          _
        $region64: #{tpu_custom_call.1} parent=11 // pred_fallthru
          _
        // Predicated region
        $region65: #{tpu_custom_call.1} parent=11 // pred_check
          %p1007 = pneg %p379
        $region66: #{tpu_custom_call.1} parent=11 // pred_check_branch
          %1009 = sbr.rel (%p1007) target = $region68
        $region67: #{tpu_custom_call.1} parent=11 // pred_region
          _
        $region68: #{tpu_custom_call.1} parent=11 // pred_fallthru
          _
        // Predicated region
        $region69: #{tpu_custom_call.1} parent=11 // pred_check
          %p1010 = pneg %p400
        $region70: #{tpu_custom_call.1} parent=11 // pred_check_branch
          %1012 = sbr.rel (%p1010) target = $region72
        $region71: #{tpu_custom_call.1} parent=11 // pred_region
          %s1014 = ssub.s32 16, 16
          %1015 = vsyncadd [#allocation13], %s1014
          %s1017 = sshll.u32 [#allocation14], 4
          %s1018 = int_to_ptr.vmem [resolvable:$true] %s1017
          %1020 = dma.hbm_to_vmem [thread:$0]  %s29, 16, %s1018, [#allocation13]
        $region72: #{tpu_custom_call.1} parent=11 // pred_fallthru
          _
        // Predicated region
        $region73: #{tpu_custom_call.1} parent=11 // pred_check
          %p1021 = pneg %p421
        $region74: #{tpu_custom_call.1} parent=11 // pred_check_branch
          %1023 = sbr.rel (%p1021) target = $region76
        $region75: #{tpu_custom_call.1} parent=11 // pred_region
          _
        $region76: #{tpu_custom_call.1} parent=11 // pred_fallthru
          _
        // Predicated region
        $region77: #{tpu_custom_call.1} parent=11 // pred_check
          %p1024 = pneg %p442
        $region78: #{tpu_custom_call.1} parent=11 // pred_check_branch
          %1026 = sbr.rel (%p1024) target = $region80
        $region79: #{tpu_custom_call.1} parent=11 // pred_region
          %s1028 = ssub.s32 16, 16
          %1029 = vsyncadd [#allocation16], %s1028
          %s1031 = sshll.u32 [#allocation15], 4
          %s1032 = int_to_ptr.vmem [resolvable:$true] %s1031
          %1034 = dma.hbm_to_vmem [thread:$0]  %s33, 16, %s1032, [#allocation16]
        $region80: #{tpu_custom_call.1} parent=11 // pred_fallthru
          _
        // Predicated region
        $region81: #{tpu_custom_call.1} parent=11 // pred_check
          %p1035 = pneg %p463
        $region82: #{tpu_custom_call.1} parent=11 // pred_check_branch
          %1037 = sbr.rel (%p1035) target = $region84
        $region83: #{tpu_custom_call.1} parent=11 // pred_region
          _
        $region84: #{tpu_custom_call.1} parent=11 // pred_fallthru
          _
        // Predicated region
        $region85: #{tpu_custom_call.1} parent=11 // pred_check
          %p1038 = pneg %p484
        $region86: #{tpu_custom_call.1} parent=11 // pred_check_branch
          %1040 = sbr.rel (%p1038) target = $region88
        $region87: #{tpu_custom_call.1} parent=11 // pred_region
          %s1042 = ssub.s32 256, 256
          %1043 = vsyncadd [#allocation16], %s1042
          %s1044 = sshll.u32 [#allocation17], 4
          %s1045 = int_to_ptr.vmem [resolvable:$true] %s1044
          %1050 = dma.hbm_to_vmem [thread:$0]  %s37, 256, %s1045, [#allocation16], 128, 128, 8
        $region88: #{tpu_custom_call.1} parent=11 // pred_fallthru
          _
        // Predicated region
        $region89: #{tpu_custom_call.1} parent=11 // pred_check
          %p1051 = pneg %p505
        $region90: #{tpu_custom_call.1} parent=11 // pred_check_branch
          %1053 = sbr.rel (%p1051) target = $region92
        $region91: #{tpu_custom_call.1} parent=11 // pred_region
          %s1055 = ssub.s32 16, 16
          %1056 = vsyncadd [#allocation19], %s1055
          %s1058 = sshll.u32 [#allocation18], 4
          %s1059 = int_to_ptr.vmem [resolvable:$true] %s1058
          %1061 = dma.hbm_to_vmem [thread:$0]  %s39, 16, %s1059, [#allocation19]
        $region92: #{tpu_custom_call.1} parent=11 // pred_fallthru
          _
        // Predicated region
        $region93: #{tpu_custom_call.1} parent=11 // pred_check
          %p1062 = pneg %p526
        $region94: #{tpu_custom_call.1} parent=11 // pred_check_branch
          %1064 = sbr.rel (%p1062) target = $region96
        $region95: #{tpu_custom_call.1} parent=11 // pred_region
          _
        $region96: #{tpu_custom_call.1} parent=11 // pred_fallthru
          _
        // Predicated region
        $region97: #{tpu_custom_call.1} parent=11 // pred_check
          %p1065 = pneg %p547
        $region98: #{tpu_custom_call.1} parent=11 // pred_check_branch
          %1067 = sbr.rel (%p1065) target = $region100
        $region99: #{tpu_custom_call.1} parent=11 // pred_region
          %s1069 = ssub.s32 16, 16
          %1070 = vsyncadd [#allocation19], %s1069
          %s1072 = sshll.u32 [#allocation20], 4
          %s1073 = int_to_ptr.vmem [resolvable:$true] %s1072
          %1075 = dma.hbm_to_vmem [thread:$0]  %s43, 16, %s1073, [#allocation19]
        $region100: #{tpu_custom_call.1} parent=11 // pred_fallthru
          _
        // Predicated region
        $region101: #{tpu_custom_call.1} parent=11 // pred_check
          %p1076 = pneg %p568
        $region102: #{tpu_custom_call.1} parent=11 // pred_check_branch
          %1078 = sbr.rel (%p1076) target = $region104
        $region103: #{tpu_custom_call.1} parent=11 // pred_region
          %s1080 = ssub.s32 640, 640
          %1081 = vsyncadd [#allocation22], %s1080
          %s1082 = sshll.u32 [#allocation21], 4
          %s1083 = int_to_ptr.vmem [resolvable:$true] %s1082
          %1088 = dma.hbm_to_vmem [thread:$0]  %s45, 640, %s1083, [#allocation22], 128, 128, 8
        $region104: #{tpu_custom_call.1} parent=11 // pred_fallthru
          _
      $region12: #{tpu_custom_call.1} parent=5 // pred_fallthru
        _
      %p1089 = scmp.lt.s32.totalorder %s85, 2
      // Predicated region
      $region105: #{tpu_custom_call.1} parent=5 // pred_check
        %p1090 = pneg %p1089
      $region106: #{tpu_custom_call.1} parent=5 // pred_check_branch
        %1092 = sbr.rel (%p1090) target = $region108
      $region107: #{tpu_custom_call.1} parent=5 // pred_region
        // Predicated region
        $region109: #{tpu_custom_call.1} parent=107 // pred_check
          %p1093 = pneg %p588
        $region110: #{tpu_custom_call.1} parent=107 // pred_check_branch
          %1095 = sbr.rel (%p1093) target = $region112
        $region111: #{tpu_custom_call.1} parent=107 // pred_region
          %p1096 = scmp.lt.s32.totalorder %s85, 1
          %s1097 = scalar_select %p1096, %s85, 1
          %s1098 = smul.addr %s1097, 96
          %s1099 = smul.addr %s1098, 8
          %s1100 = scalar_lea.vmem %s47, %s1099
        $region112: #{tpu_custom_call.1} parent=107 // pred_fallthru
          _
        // Predicated region
        $region113: #{tpu_custom_call.1} parent=107 // pred_check
          %p1101 = pneg %p614
        $region114: #{tpu_custom_call.1} parent=107 // pred_check_branch
          %1103 = sbr.rel (%p1101) target = $region116
        $region115: #{tpu_custom_call.1} parent=107 // pred_region
          %p1104 = scmp.lt.s32.totalorder %s85, 1
          %s1105 = scalar_select %p1104, %s85, 1
          %s1106 = smul.addr %s1105, 12
          %s1107 = scalar_lea.vmem %s49, %s1106
        $region116: #{tpu_custom_call.1} parent=107 // pred_fallthru
          _
        // Predicated region
        $region117: #{tpu_custom_call.1} parent=107 // pred_check
          %p1108 = pneg %p640
        $region118: #{tpu_custom_call.1} parent=107 // pred_check_branch
          %1110 = sbr.rel (%p1108) target = $region120
        $region119: #{tpu_custom_call.1} parent=107 // pred_region
          %p1111 = scmp.lt.s32.totalorder %s85, 1
          %s1112 = scalar_select %p1111, %s85, 1
          %s1113 = smul.addr %s1112, 64
          %s1114 = smul.addr %s1113, 8
          %s1115 = scalar_lea.vmem %s51, %s1114
        $region120: #{tpu_custom_call.1} parent=107 // pred_fallthru
          _
        // Predicated region
        $region121: #{tpu_custom_call.1} parent=107 // pred_check
          %p1116 = pneg %p666
        $region122: #{tpu_custom_call.1} parent=107 // pred_check_branch
          %1118 = sbr.rel (%p1116) target = $region124
        $region123: #{tpu_custom_call.1} parent=107 // pred_region
          %p1119 = scmp.lt.s32.totalorder %s85, 1
          %s1120 = scalar_select %p1119, %s85, 1
          %s1121 = scalar_lea.vmem %s53, %s1120
        $region124: #{tpu_custom_call.1} parent=107 // pred_fallthru
          _
        // Predicated region
        $region125: #{tpu_custom_call.1} parent=107 // pred_check
          %p1122 = pneg %p692
        $region126: #{tpu_custom_call.1} parent=107 // pred_check_branch
          %1124 = sbr.rel (%p1122) target = $region128
        $region127: #{tpu_custom_call.1} parent=107 // pred_region
          %s1125 = sand.u32 %s85, 1
          %s1126 = scalar_lea.sflag [#allocation4], %s1125
          %s1127 = sand.u32 %s682, 1
          %s1128 = scalar_lea.vmem [#allocation23], %s1127
          %s1130 = ssub.s32 16, 16
          %1131 = vsyncadd %s1126, %s1130
          %s1132 = smul.addr %s85, 16
          %s1133 = scalar_lea.hbm %s55, %s1132
          %s1135 = sshll.u32 %s1128, 4
          %s1136 = int_to_ptr.vmem [resolvable:$true] %s1135
          %1138 = dma.hbm_to_vmem [thread:$0]  %s1133, 16, %s1136, %s1126
        $region128: #{tpu_custom_call.1} parent=107 // pred_fallthru
          _
        // Predicated region
        $region129: #{tpu_custom_call.1} parent=107 // pred_check
          %p1139 = pneg %p718
        $region130: #{tpu_custom_call.1} parent=107 // pred_check_branch
          %1141 = sbr.rel (%p1139) target = $region132
        $region131: #{tpu_custom_call.1} parent=107 // pred_region
          %p1142 = scmp.lt.s32.totalorder %s85, 1
          %s1143 = scalar_select %p1142, %s85, 1
          %s1144 = scalar_lea.vmem %s57, %s1143
        $region132: #{tpu_custom_call.1} parent=107 // pred_fallthru
          _
        // Predicated region
        $region133: #{tpu_custom_call.1} parent=107 // pred_check
          %p1145 = pneg %p744
        $region134: #{tpu_custom_call.1} parent=107 // pred_check_branch
          %1147 = sbr.rel (%p1145) target = $region136
        $region135: #{tpu_custom_call.1} parent=107 // pred_region
          %p1148 = scmp.lt.s32.totalorder %s85, 1
          %s1149 = scalar_select %p1148, %s85, 1
          %s1150 = smul.addr %s1149, 8
          %s1151 = smul.addr %s1150, 8
          %s1152 = scalar_lea.vmem %s59, %s1151
        $region136: #{tpu_custom_call.1} parent=107 // pred_fallthru
          _
        // Predicated region
        $region137: #{tpu_custom_call.1} parent=107 // pred_check
          %p1153 = pneg %p770
        $region138: #{tpu_custom_call.1} parent=107 // pred_check_branch
          %1155 = sbr.rel (%p1153) target = $region140
        $region139: #{tpu_custom_call.1} parent=107 // pred_region
          %p1156 = scmp.lt.s32.totalorder %s85, 1
          %s1157 = scalar_select %p1156, %s85, 1
          %s1158 = scalar_lea.vmem %s61, %s1157
        $region140: #{tpu_custom_call.1} parent=107 // pred_fallthru
          _
        // Predicated region
        $region141: #{tpu_custom_call.1} parent=107 // pred_check
          %p1159 = pneg %p796
        $region142: #{tpu_custom_call.1} parent=107 // pred_check_branch
          %1161 = sbr.rel (%p1159) target = $region144
        $region143: #{tpu_custom_call.1} parent=107 // pred_region
          %p1162 = scmp.lt.s32.totalorder %s85, 1
          %s1163 = scalar_select %p1162, %s85, 1
          %s1164 = smul.addr %s1163, 16
          %s1165 = smul.addr %s1164, 8
          %s1166 = scalar_lea.vmem %s63, %s1165
        $region144: #{tpu_custom_call.1} parent=107 // pred_fallthru
          _
        // Predicated region
        $region145: #{tpu_custom_call.1} parent=107 // pred_check
          %p1167 = pneg %p822
        $region146: #{tpu_custom_call.1} parent=107 // pred_check_branch
          %1169 = sbr.rel (%p1167) target = $region148
        $region147: #{tpu_custom_call.1} parent=107 // pred_region
          %p1170 = scmp.lt.s32.totalorder %s85, 1
          %s1171 = scalar_select %p1170, %s85, 1
          %s1172 = scalar_lea.vmem %s65, %s1171
        $region148: #{tpu_custom_call.1} parent=107 // pred_fallthru
          _
        // Predicated region
        $region149: #{tpu_custom_call.1} parent=107 // pred_check
          %p1173 = pneg %p848
        $region150: #{tpu_custom_call.1} parent=107 // pred_check_branch
          %1175 = sbr.rel (%p1173) target = $region152
        $region151: #{tpu_custom_call.1} parent=107 // pred_region
          %s1176 = sand.u32 %s85, 1
          %s1177 = scalar_lea.sflag [#allocation4], %s1176
          %s1178 = sand.u32 %s838, 1
          %s1179 = scalar_lea.vmem [#allocation24], %s1178
          %s1181 = ssub.s32 16, 16
          %1182 = vsyncadd %s1177, %s1181
          %s1183 = smul.addr %s85, 16
          %s1184 = scalar_lea.hbm %s67, %s1183
          %s1186 = sshll.u32 %s1179, 4
          %s1187 = int_to_ptr.vmem [resolvable:$true] %s1186
          %1189 = dma.hbm_to_vmem [thread:$0]  %s1184, 16, %s1187, %s1177
        $region152: #{tpu_custom_call.1} parent=107 // pred_fallthru
          _
        // Predicated region
        $region153: #{tpu_custom_call.1} parent=107 // pred_check
          %p1190 = pneg %p874
        $region154: #{tpu_custom_call.1} parent=107 // pred_check_branch
          %1192 = sbr.rel (%p1190) target = $region156
        $region155: #{tpu_custom_call.1} parent=107 // pred_region
          %s1193 = sand.u32 %s85, 1
          %s1194 = scalar_lea.sflag [#allocation4], %s1193
          %s1195 = sand.u32 %s864, 1
          %s1196 = scalar_lea.vmem [#allocation25], %s1195
          %s1198 = ssub.s32 16, 16
          %1199 = vsyncadd %s1194, %s1198
          %s1200 = smul.addr %s85, 16
          %s1201 = scalar_lea.hbm %s69, %s1200
          %s1203 = sshll.u32 %s1196, 4
          %s1204 = int_to_ptr.vmem [resolvable:$true] %s1203
          %1206 = dma.hbm_to_vmem [thread:$0]  %s1201, 16, %s1204, %s1194
        $region156: #{tpu_custom_call.1} parent=107 // pred_fallthru
          _
      $region108: #{tpu_custom_call.1} parent=5 // pred_fallthru
        _
      %p1207 = scmp.le.s32.totalorder 1, %s85
      %p1208 = scmp.lt.s32.totalorder %s85, 3
      %p1209 = pnand %p1207, %p1208
      %p1210 = pneg %p1209
      // Predicated region
      $region157: #{tpu_custom_call.1} parent=5 // pred_check
        _
      $region158: #{tpu_custom_call.1} parent=5 // pred_check_branch
        %1212 = sbr.rel (%p1209) target = $region160
      $region159: #{tpu_custom_call.1} parent=5 // pred_region
        %s1213 = ssub.s32 %s85, 1
        // Predicated region
        $region161: #{tpu_custom_call.1} parent=159 // pred_check
          %p1214 = pneg %p127
        $region162: #{tpu_custom_call.1} parent=159 // pred_check_branch
          %1216 = sbr.rel (%p1214) target = $region164
        $region163: #{tpu_custom_call.1} parent=159 // pred_region
          %1217 = dma.done [#allocation4], 512
        $region164: #{tpu_custom_call.1} parent=159 // pred_fallthru
          _
        // Predicated region
        $region165: #{tpu_custom_call.1} parent=159 // pred_check
          %p1218 = pneg %p148
        $region166: #{tpu_custom_call.1} parent=159 // pred_check_branch
          %1220 = sbr.rel (%p1218) target = $region168
        $region167: #{tpu_custom_call.1} parent=159 // pred_region
          %1221 = dma.done [#allocation7], 512
        $region168: #{tpu_custom_call.1} parent=159 // pred_fallthru
          _
        // Predicated region
        $region169: #{tpu_custom_call.1} parent=159 // pred_check
          %p1222 = pneg %p190
        $region170: #{tpu_custom_call.1} parent=159 // pred_check_branch
          %1224 = sbr.rel (%p1222) target = $region172
        $region171: #{tpu_custom_call.1} parent=159 // pred_region
          %1225 = dma.done [#allocation7], 16
        $region172: #{tpu_custom_call.1} parent=159 // pred_fallthru
          _
        // Predicated region
        $region173: #{tpu_custom_call.1} parent=159 // pred_check
          %p1226 = pneg %p232
        $region174: #{tpu_custom_call.1} parent=159 // pred_check_branch
          %1228 = sbr.rel (%p1226) target = $region176
        $region175: #{tpu_custom_call.1} parent=159 // pred_region
          %1229 = dma.done [#allocation10], 16
        $region176: #{tpu_custom_call.1} parent=159 // pred_fallthru
          _
        // Predicated region
        $region177: #{tpu_custom_call.1} parent=159 // pred_check
          %p1230 = pneg %p295
        $region178: #{tpu_custom_call.1} parent=159 // pred_check_branch
          %1232 = sbr.rel (%p1230) target = $region180
        $region179: #{tpu_custom_call.1} parent=159 // pred_region
          %1233 = dma.done [#allocation10], 16
        $region180: #{tpu_custom_call.1} parent=159 // pred_fallthru
          _
        // Predicated region
        $region181: #{tpu_custom_call.1} parent=159 // pred_check
          %p1234 = pneg %p337
        $region182: #{tpu_custom_call.1} parent=159 // pred_check_branch
          %1236 = sbr.rel (%p1234) target = $region184
        $region183: #{tpu_custom_call.1} parent=159 // pred_region
          %1237 = dma.done [#allocation13], 16
        $region184: #{tpu_custom_call.1} parent=159 // pred_fallthru
          _
        // Predicated region
        $region185: #{tpu_custom_call.1} parent=159 // pred_check
          %p1238 = pneg %p400
        $region186: #{tpu_custom_call.1} parent=159 // pred_check_branch
          %1240 = sbr.rel (%p1238) target = $region188
        $region187: #{tpu_custom_call.1} parent=159 // pred_region
          %1241 = dma.done [#allocation13], 16
        $region188: #{tpu_custom_call.1} parent=159 // pred_fallthru
          _
        // Predicated region
        $region189: #{tpu_custom_call.1} parent=159 // pred_check
          %p1242 = pneg %p442
        $region190: #{tpu_custom_call.1} parent=159 // pred_check_branch
          %1244 = sbr.rel (%p1242) target = $region192
        $region191: #{tpu_custom_call.1} parent=159 // pred_region
          %1245 = dma.done [#allocation16], 16
        $region192: #{tpu_custom_call.1} parent=159 // pred_fallthru
          _
        // Predicated region
        $region193: #{tpu_custom_call.1} parent=159 // pred_check
          %p1246 = pneg %p484
        $region194: #{tpu_custom_call.1} parent=159 // pred_check_branch
          %1248 = sbr.rel (%p1246) target = $region196
        $region195: #{tpu_custom_call.1} parent=159 // pred_region
          %1249 = dma.done [#allocation16], 256
        $region196: #{tpu_custom_call.1} parent=159 // pred_fallthru
          _
        // Predicated region
        $region197: #{tpu_custom_call.1} parent=159 // pred_check
          %p1250 = pneg %p505
        $region198: #{tpu_custom_call.1} parent=159 // pred_check_branch
          %1252 = sbr.rel (%p1250) target = $region200
        $region199: #{tpu_custom_call.1} parent=159 // pred_region
          %1253 = dma.done [#allocation19], 16
        $region200: #{tpu_custom_call.1} parent=159 // pred_fallthru
          _
        // Predicated region
        $region201: #{tpu_custom_call.1} parent=159 // pred_check
          %p1254 = pneg %p547
        $region202: #{tpu_custom_call.1} parent=159 // pred_check_branch
          %1256 = sbr.rel (%p1254) target = $region204
        $region203: #{tpu_custom_call.1} parent=159 // pred_region
          %1257 = dma.done [#allocation19], 16
        $region204: #{tpu_custom_call.1} parent=159 // pred_fallthru
          _
        // Predicated region
        $region205: #{tpu_custom_call.1} parent=159 // pred_check
          %p1258 = pneg %p568
        $region206: #{tpu_custom_call.1} parent=159 // pred_check_branch
          %1260 = sbr.rel (%p1258) target = $region208
        $region207: #{tpu_custom_call.1} parent=159 // pred_region
          %1261 = dma.done [#allocation22], 640
        $region208: #{tpu_custom_call.1} parent=159 // pred_fallthru
          _
        %s1262 = sand.u32 %s90, 1
        %s1263 = scalar_lea.sflag [#allocation4], %s1262
        %s1264 = sand.u32 %s685, 1
        %s1265 = scalar_lea.vmem [#allocation23], %s1264
        // Predicated region
        $region209: #{tpu_custom_call.1} parent=159 // pred_check
          %p1266 = pneg %p698
        $region210: #{tpu_custom_call.1} parent=159 // pred_check_branch
          %1268 = sbr.rel (%p1266) target = $region212
        $region211: #{tpu_custom_call.1} parent=159 // pred_region
          %1269 = dma.done %s1263, 16
        $region212: #{tpu_custom_call.1} parent=159 // pred_fallthru
          _
        %s1270 = sand.u32 %s90, 1
        %s1271 = scalar_lea.sflag [#allocation4], %s1270
        %s1272 = sand.u32 %s841, 1
        %s1273 = scalar_lea.vmem [#allocation24], %s1272
        // Predicated region
        $region213: #{tpu_custom_call.1} parent=159 // pred_check
          %p1274 = pneg %p854
        $region214: #{tpu_custom_call.1} parent=159 // pred_check_branch
          %1276 = sbr.rel (%p1274) target = $region216
        $region215: #{tpu_custom_call.1} parent=159 // pred_region
          %1277 = dma.done %s1271, 16
        $region216: #{tpu_custom_call.1} parent=159 // pred_fallthru
          _
        %s1278 = sand.u32 %s90, 1
        %s1279 = scalar_lea.sflag [#allocation4], %s1278
        %s1280 = sand.u32 %s867, 1
        %s1281 = scalar_lea.vmem [#allocation25], %s1280
        // Predicated region
        $region217: #{tpu_custom_call.1} parent=159 // pred_check
          %p1282 = pneg %p880
        $region218: #{tpu_custom_call.1} parent=159 // pred_check_branch
          %1284 = sbr.rel (%p1282) target = $region220
        $region219: #{tpu_custom_call.1} parent=159 // pred_region
          %1285 = dma.done %s1279, 16
        $region220: #{tpu_custom_call.1} parent=159 // pred_fallthru
          _
        %p1286 = pneg %p106
        %p1287 = pneg %p103
        %p1288 = pneg %p127
        %p1289 = pneg %p124
        %p1290 = pneg %p148
        %p1291 = pneg %p145
        %p1292 = pneg %p169
        %p1293 = pneg %p166
        %p1294 = pneg %p190
        %p1295 = pneg %p187
        %p1296 = pneg %p211
        %p1297 = pneg %p208
        %p1298 = pneg %p232
        %p1299 = pneg %p229
        %p1300 = pneg %p253
        %p1301 = pneg %p250
        %p1302 = pneg %p274
        %p1303 = pneg %p271
        %p1304 = pneg %p295
        %p1305 = pneg %p292
        %p1306 = pneg %p316
        %p1307 = pneg %p313
        %p1308 = pneg %p337
        %p1309 = pneg %p334
        %p1310 = pneg %p358
        %p1311 = pneg %p355
        %p1312 = pneg %p379
        %p1313 = pneg %p376
        %p1314 = pneg %p400
        %p1315 = pneg %p397
        %p1316 = pneg %p421
        %p1317 = pneg %p418
        %p1318 = pneg %p442
        %p1319 = pneg %p439
        %p1320 = pneg %p463
        %p1321 = pneg %p460
        %p1322 = pneg %p484
        %p1323 = pneg %p481
        %p1324 = pneg %p505
        %p1325 = pneg %p502
        %p1326 = pneg %p526
        %p1327 = pneg %p523
        %p1328 = pneg %p547
        %p1329 = pneg %p544
        %p1330 = pneg %p568
        %p1331 = pneg %p565
        %p1332 = scmp.lt.s32.totalorder %s90, 1
        %s1333 = scalar_select %p1332, %s90, 1
        %s1334 = smul.addr %s1333, 96
        %s1335 = smul.addr %s1334, 8
        %s1336 = scalar_lea.vmem %s47, %s1335
        %p1337 = pneg %p594
        %p1338 = pneg %p591
        %p1339 = scmp.lt.s32.totalorder %s90, 1
        %s1340 = scalar_select %p1339, %s90, 1
        %s1341 = smul.addr %s1340, 12
        %s1342 = scalar_lea.vmem %s49, %s1341
        %p1343 = pneg %p620
        %p1344 = pneg %p617
        %p1345 = scmp.lt.s32.totalorder %s90, 1
        %s1346 = scalar_select %p1345, %s90, 1
        %s1347 = smul.addr %s1346, 64
        %s1348 = smul.addr %s1347, 8
        %s1349 = scalar_lea.vmem %s51, %s1348
        %p1350 = pneg %p646
        %p1351 = pneg %p643
        %p1352 = scmp.lt.s32.totalorder %s90, 1
        %s1353 = scalar_select %p1352, %s90, 1
        %s1354 = scalar_lea.vmem %s53, %s1353
        %p1355 = pneg %p672
        %p1356 = pneg %p669
        %s1357 = sand.u32 %s90, 1
        %s1358 = scalar_lea.sflag [#allocation4], %s1357
        %s1359 = sand.u32 %s685, 1
        %s1360 = scalar_lea.vmem [#allocation23], %s1359
        %p1361 = pneg %p698
        %p1362 = pneg %p695
        %p1363 = scmp.lt.s32.totalorder %s90, 1
        %s1364 = scalar_select %p1363, %s90, 1
        %s1365 = scalar_lea.vmem %s57, %s1364
        %p1366 = pneg %p724
        %p1367 = pneg %p721
        %p1368 = scmp.lt.s32.totalorder %s90, 1
        %s1369 = scalar_select %p1368, %s90, 1
        %s1370 = smul.addr %s1369, 8
        %s1371 = smul.addr %s1370, 8
        %s1372 = scalar_lea.vmem %s59, %s1371
        %p1373 = pneg %p750
        %p1374 = pneg %p747
        %p1375 = scmp.lt.s32.totalorder %s90, 1
        %s1376 = scalar_select %p1375, %s90, 1
        %s1377 = scalar_lea.vmem %s61, %s1376
        %p1378 = pneg %p776
        %p1379 = pneg %p773
        %p1380 = scmp.lt.s32.totalorder %s90, 1
        %s1381 = scalar_select %p1380, %s90, 1
        %s1382 = smul.addr %s1381, 16
        %s1383 = smul.addr %s1382, 8
        %s1384 = scalar_lea.vmem %s63, %s1383
        %p1385 = pneg %p802
        %p1386 = pneg %p799
        %p1387 = scmp.lt.s32.totalorder %s90, 1
        %s1388 = scalar_select %p1387, %s90, 1
        %s1389 = scalar_lea.vmem %s65, %s1388
        %p1390 = pneg %p828
        %p1391 = pneg %p825
        %s1392 = sand.u32 %s90, 1
        %s1393 = scalar_lea.sflag [#allocation4], %s1392
        %s1394 = sand.u32 %s841, 1
        %s1395 = scalar_lea.vmem [#allocation24], %s1394
        %p1396 = pneg %p854
        %p1397 = pneg %p851
        %s1398 = sand.u32 %s90, 1
        %s1399 = scalar_lea.sflag [#allocation4], %s1398
        %s1400 = sand.u32 %s867, 1
        %s1401 = scalar_lea.vmem [#allocation25], %s1400
        %p1402 = pneg %p880
        %p1403 = pneg %p877
        %p1404 = pneg %p901
        %p1405 = pneg %p898
        %p1406 = scmp.lt.s32.totalorder %s90, 1
        %s1407 = scalar_select %p1406, %s90, 1
        %s1408 = smul.addr %s1407, 96
        %s1409 = smul.addr %s1408, 8
        %s1410 = scalar_lea.vmem %s47, %s1409
        %p1411 = scmp.lt.s32.totalorder %s90, 1
        %s1412 = scalar_select %p1411, %s90, 1
        %s1413 = smul.addr %s1412, 12
        %s1414 = scalar_lea.vmem %s49, %s1413
        %p1415 = scmp.lt.s32.totalorder %s90, 1
        %s1416 = scalar_select %p1415, %s90, 1
        %s1417 = smul.addr %s1416, 64
        %s1418 = smul.addr %s1417, 8
        %s1419 = scalar_lea.vmem %s51, %s1418
        %p1420 = scmp.lt.s32.totalorder %s90, 1
        %s1421 = scalar_select %p1420, %s90, 1
        %s1422 = scalar_lea.vmem %s53, %s1421
        %p1423 = scmp.lt.s32.totalorder %s90, 1
        %s1424 = scalar_select %p1423, %s90, 1
        %s1425 = scalar_lea.vmem %s57, %s1424
        %p1426 = scmp.lt.s32.totalorder %s90, 1
        %s1427 = scalar_select %p1426, %s90, 1
        %s1428 = smul.addr %s1427, 8
        %s1429 = smul.addr %s1428, 8
        %s1430 = scalar_lea.vmem %s59, %s1429
        %p1431 = scmp.lt.s32.totalorder %s90, 1
        %s1432 = scalar_select %p1431, %s90, 1
        %s1433 = scalar_lea.vmem %s61, %s1432
        %p1434 = scmp.lt.s32.totalorder %s90, 1
        %s1435 = scalar_select %p1434, %s90, 1
        %s1436 = smul.addr %s1435, 16
        %s1437 = smul.addr %s1436, 8
        %s1438 = scalar_lea.vmem %s63, %s1437
        %p1439 = scmp.lt.s32.totalorder %s90, 1
        %s1440 = scalar_select %p1439, %s90, 1
        %s1441 = scalar_lea.vmem %s65, %s1440
        %v1442 = vld [vmem:[#allocation3] sm:$0xff]
        %v1443 = vld [vmem:[#allocation3 + $0x8] sm:$0xff]
        %v1444 = vld [vmem:[#allocation3 + $0x10] sm:$0xff]
        %v1445 = vld [vmem:[#allocation3 + $0x18] sm:$0xff]
        %p1446 = scmp.eq.s32.totalorder %s90, 0
        // Predicated region
        $region221: #{tpu_custom_call.1} parent=159 // pred_check
          %p1447 = pneg %p1446
        $region222: #{tpu_custom_call.1} parent=159 // pred_check_branch
          %1449 = sbr.rel (%p1447) target = $region224
        $region223: #{tpu_custom_call.1} parent=159 // pred_region
          %v1450 = vld [vmem:[%s1] sm:$0xff]
          %v1451 = vld [vmem:[%s1 + $0x8] sm:$0xff]
          %v1452 = vld [vmem:[%s1 + $0x10] sm:$0xff]
          %v1453 = vld [vmem:[%s1 + $0x18] sm:$0xff]
          %v1454 = vld [vmem:[%s7] sm:$0x3]
          %v1455 = vld [vmem:[#allocation8] sm:$0x1]
          %v1457 = vlaneseq
          %v1458 = vshrl.u32 %v1457, 7
          %v1459 = vsub.s32 0, %v1458
          %v1460 = vrot.slane %v1455, %v1459
          %vm1462 = vcmask 15360
          %v1464 = vsel %vm1462, %v1450, 0
          %v1467 = vsel %vm1462, %v1451, 0
          %v1470 = vsel %vm1462, %v1452, 0
          %v1473 = vsel %vm1462, %v1453, 0
          %vm1475 = vcmask 1041408
          %v1477 = vsel %vm1475, %v1454, 0
          %1479 = vmatprep.subr.mxu0 0.0
          %1480 = vmatpush1.msra.mxu0 %v1477
          %1481 = vmatprep.subr.mxu0 0.0
          %1482 = vmatpush1.msra.mxu0 0.0
          %1483 = vmatprep.subr.mxu0 0.0
          %1484 = vmatpush1.msra.mxu0 0.0
          %1485 = vmatprep.subr.mxu0 0.0
          %1486 = vmatpush1.msra.mxu0 0.0
          %1487 = vmatprep.subr.mxu0 0.0
          %1488 = vmatpush1.msra.mxu0 0.0
          %1489 = vmatprep.subr.mxu0 0.0
          %1490 = vmatpush1.msra.mxu0 0.0
          %1491 = vmatprep.subr.mxu0 0.0
          %1492 = vmatpush1.msra.mxu0 0.0
          %1493 = vmatprep.subr.mxu0 0.0
          %1494 = vmatpush1.msra.mxu0 0.0
          %1495 = vmatprep.subr.mxu0 0.0
          %1496 = vmatpush1.msra.mxu0 0.0
          %1497 = vmatprep.subr.mxu0 0.0
          %1498 = vmatpush1.msra.mxu0 0.0
          %1499 = vmatprep.subr.mxu0 0.0
          %1500 = vmatpush1.msra.mxu0 0.0
          %1501 = vmatprep.subr.mxu0 0.0
          %1502 = vmatpush1.msra.mxu0 0.0
          %1503 = vmatprep.subr.mxu0 0.0
          %1504 = vmatpush1.msra.mxu0 0.0
          %1505 = vmatprep.subr.mxu0 0.0
          %1506 = vmatpush1.msra.mxu0 0.0
          %1507 = vmatprep.subr.mxu0 0.0
          %1508 = vmatpush1.msra.mxu0 0.0
          %1509 = vmatprep.subr.mxu0 0.0
          %1510 = vmatpush1.msra.mxu0 0.0
          %1511 = vmatprep.subr.mxu0 0.0
          %1512 = vmatpush1.msra.mxu0 0.0
          %1513 = vmatprep.subr.mxu0 0.0
          %1514 = vmatpush1.msra.mxu0 0.0
          %1515 = vmatprep.subr.mxu0 0.0
          %1516 = vmatpush1.msra.mxu0 0.0
          %1517 = vmatprep.subr.mxu0 0.0
          %1518 = vmatpush1.msra.mxu0 0.0
          %1519 = vmatprep.subr.mxu0 0.0
          %1520 = vmatpush1.msra.mxu0 0.0
          %1521 = vmatprep.subr.mxu0 0.0
          %1522 = vmatpush1.msra.mxu0 0.0
          %1523 = vmatprep.subr.mxu0 0.0
          %1524 = vmatpush1.msra.mxu0 0.0
          %1525 = vmatprep.subr.mxu0 0.0
          %1526 = vmatpush1.msra.mxu0 0.0
          %1527 = vmatprep.subr.mxu0 0.0
          %1528 = vmatpush1.msra.mxu0 0.0
          %1529 = vmatprep.subr.mxu0 0.0
          %1530 = vmatpush1.msra.mxu0 0.0
          %1531 = vmatprep.subr.mxu0 0.0
          %1532 = vmatpush1.msra.mxu0 0.0
          %1533 = vmatprep.subr.mxu0 0.0
          %1534 = vmatpush1.msra.mxu0 0.0
          %1535 = vmatprep.subr.mxu0 0.0
          %1536 = vmatpush1.msra.mxu0 0.0
          %1537 = vmatprep.subr.mxu0 0.0
          %1538 = vmatpush1.msra.mxu0 0.0
          %1539 = vmatprep.subr.mxu0 0.0
          %1540 = vmatpush1.msra.mxu0 0.0
          %1541 = vmatprep.subr.mxu0 0.0
          %1542 = vmatpush1.msra.mxu0 0.0
          %1543 = vmatprep.mubr.f32.mxu0 0.0
          %1544 = vmatmul.mubr.f32.gmra.mrb[0].mxu0 %v1464
          %v1545 = vpop.f32.mrb[0].mxu0
          %v1546 = vadd.f32 %v1460, %v1545
          %v1547 = vpop.f32.mrb[0].mxu0
          %1548 = vmatprep.mubr.f32.mxu0 0.0
          %1549 = vmatmul.mubr.f32.gmra.mrb[0].mxu0 %v1467
          %v1550 = vpop.f32.mrb[0].mxu0
          %v1551 = vadd.f32 %v1460, %v1550
          %v1552 = vpop.f32.mrb[0].mxu0
          %1553 = vmatprep.mubr.f32.mxu0 0.0
          %1554 = vmatmul.mubr.f32.gmra.mrb[0].mxu0 %v1470
          %v1555 = vpop.f32.mrb[0].mxu0
          %v1556 = vadd.f32 %v1460, %v1555
          %v1557 = vpop.f32.mrb[0].mxu0
          %1558 = vmatprep.mubr.f32.mxu0 0.0
          %1559 = vmatmul.mubr.f32.gmra.mrb[0].mxu0 %v1473
          %v1560 = vpop.f32.mrb[0].mxu0
          %v1561 = vadd.f32 %v1460, %v1560
          %v1562 = vpop.f32.mrb[0].mxu0
          %1563 = vdwg.mxu0
          %v1564 = vld [vmem:[%s11] sm:$0xff]
          %v1565 = vld [vmem:[%s11 + $0x8] sm:$0xff]
          %v1566 = vld [vmem:[%s11 + $0x10] sm:$0xff]
          %v1567 = vld [vmem:[%s11 + $0x18] sm:$0xff]
          %v1568 = vld [vmem:[%s11 + $0x20] sm:$0x7]
          %v1569 = vld [vmem:[#allocation9] sm:$0x1]
          %v1571 = vlaneseq
          %v1572 = vshrl.u32 %v1571, 7
          %v1573 = vsub.s32 0, %v1572
          %v1574 = vrot.slane %v1569, %v1573
          %vm1576 = vcmask 285696
          %v1578 = vsel %vm1576, %v1442, 0
          %v1581 = vsel %vm1576, %v1443, 0
          %v1584 = vsel %vm1576, %v1444, 0
          %v1587 = vsel %vm1576, %v1445, 0
          %vm1589 = vcmask 1042432
          %v1591 = vsel %vm1589, %v1568, 0
          %1593 = vmatprep.subr.mxu0 0.0
          %1594 = vmatpush1.msra.mxu0 %v1564
          %1595 = vmatprep.subr.mxu0 0.0
          %1596 = vmatpush1.msra.mxu0 %v1565
          %1597 = vmatprep.subr.mxu0 0.0
          %1598 = vmatpush1.msra.mxu0 %v1566
          %1599 = vmatprep.subr.mxu0 0.0
          %1600 = vmatpush1.msra.mxu0 %v1567
          %1601 = vmatprep.subr.mxu0 0.0
          %1602 = vmatpush1.msra.mxu0 %v1591
          %1603 = vmatprep.subr.mxu0 0.0
          %1604 = vmatpush1.msra.mxu0 0.0
          %1605 = vmatprep.subr.mxu0 0.0
          %1606 = vmatpush1.msra.mxu0 0.0
          %1607 = vmatprep.subr.mxu0 0.0
          %1608 = vmatpush1.msra.mxu0 0.0
          %1609 = vmatprep.subr.mxu0 0.0
          %1610 = vmatpush1.msra.mxu0 0.0
          %1611 = vmatprep.subr.mxu0 0.0
          %1612 = vmatpush1.msra.mxu0 0.0
          %1613 = vmatprep.subr.mxu0 0.0
          %1614 = vmatpush1.msra.mxu0 0.0
          %1615 = vmatprep.subr.mxu0 0.0
          %1616 = vmatpush1.msra.mxu0 0.0
          %1617 = vmatprep.subr.mxu0 0.0
          %1618 = vmatpush1.msra.mxu0 0.0
          %1619 = vmatprep.subr.mxu0 0.0
          %1620 = vmatpush1.msra.mxu0 0.0
          %1621 = vmatprep.subr.mxu0 0.0
          %1622 = vmatpush1.msra.mxu0 0.0
          %1623 = vmatprep.subr.mxu0 0.0
          %1624 = vmatpush1.msra.mxu0 0.0
          %1625 = vmatprep.subr.mxu0 0.0
          %1626 = vmatpush1.msra.mxu0 0.0
          %1627 = vmatprep.subr.mxu0 0.0
          %1628 = vmatpush1.msra.mxu0 0.0
          %1629 = vmatprep.subr.mxu0 0.0
          %1630 = vmatpush1.msra.mxu0 0.0
          %1631 = vmatprep.subr.mxu0 0.0
          %1632 = vmatpush1.msra.mxu0 0.0
          %1633 = vmatprep.subr.mxu0 0.0
          %1634 = vmatpush1.msra.mxu0 0.0
          %1635 = vmatprep.subr.mxu0 0.0
          %1636 = vmatpush1.msra.mxu0 0.0
          %1637 = vmatprep.subr.mxu0 0.0
          %1638 = vmatpush1.msra.mxu0 0.0
          %1639 = vmatprep.subr.mxu0 0.0
          %1640 = vmatpush1.msra.mxu0 0.0
          %1641 = vmatprep.subr.mxu0 0.0
          %1642 = vmatpush1.msra.mxu0 0.0
          %1643 = vmatprep.subr.mxu0 0.0
          %1644 = vmatpush1.msra.mxu0 0.0
          %1645 = vmatprep.subr.mxu0 0.0
          %1646 = vmatpush1.msra.mxu0 0.0
          %1647 = vmatprep.subr.mxu0 0.0
          %1648 = vmatpush1.msra.mxu0 0.0
          %1649 = vmatprep.subr.mxu0 0.0
          %1650 = vmatpush1.msra.mxu0 0.0
          %1651 = vmatprep.subr.mxu0 0.0
          %1652 = vmatpush1.msra.mxu0 0.0
          %1653 = vmatprep.subr.mxu0 0.0
          %1654 = vmatpush1.msra.mxu0 0.0
          %1655 = vmatprep.subr.mxu0 0.0
          %1656 = vmatpush1.msra.mxu0 0.0
          %1657 = vmatprep.mubr.f32.mxu0 0.0
          %1658 = vmatmul.mubr.f32.gmra.mrb[0].mxu0 %v1578
          %v1659 = vpop.f32.mrb[0].mxu0
          %v1660 = vadd.f32 %v1574, %v1659
          %v1661 = vpop.f32.mrb[0].mxu0
          %1662 = vmatprep.mubr.f32.mxu0 0.0
          %1663 = vmatmul.mubr.f32.gmra.mrb[0].mxu0 %v1581
          %v1664 = vpop.f32.mrb[0].mxu0
          %v1665 = vadd.f32 %v1574, %v1664
          %v1666 = vpop.f32.mrb[0].mxu0
          %1667 = vmatprep.mubr.f32.mxu0 0.0
          %1668 = vmatmul.mubr.f32.gmra.mrb[0].mxu0 %v1584
          %v1669 = vpop.f32.mrb[0].mxu0
          %v1670 = vadd.f32 %v1574, %v1669
          %v1671 = vpop.f32.mrb[0].mxu0
          %1672 = vmatprep.mubr.f32.mxu0 0.0
          %1673 = vmatmul.mubr.f32.gmra.mrb[0].mxu0 %v1587
          %v1674 = vpop.f32.mrb[0].mxu0
          %v1675 = vadd.f32 %v1574, %v1674
          %v1676 = vpop.f32.mrb[0].mxu0
          %1677 = vdwg.mxu0
          %v1678 = vxor.u32 %v1660, 2147483648
          %v1679 = vxor.u32 %v1665, 2147483648
          %v1680 = vxor.u32 %v1670, 2147483648
          %v1681 = vxor.u32 %v1675, 2147483648
          %v1682 = vmul.f32 %v1678, 1.442695
          %v1683 = vpow.pop %v1682
          %v1684 = vmul.f32 %v1679, 1.442695
          %v1685 = vpow.pop %v1684
          %v1686 = vmul.f32 %v1680, 1.442695
          %v1687 = vpow.pop %v1686
          %v1688 = vmul.f32 %v1681, 1.442695
          %v1689 = vpow.pop %v1688
          %v1690 = vadd.f32 %v1683, 1.0
          %v1691 = vadd.f32 %v1685, 1.0
          %v1692 = vadd.f32 %v1687, 1.0
          %v1693 = vadd.f32 %v1689, 1.0
          %v1694 = vrcp.pop %v1690
          %v1695 = vmul.f32 1.0, %v1694
          %v1696 = vrcp.pop %v1691
          %v1697 = vmul.f32 1.0, %v1696
          %v1698 = vrcp.pop %v1692
          %v1699 = vmul.f32 1.0, %v1698
          %v1700 = vrcp.pop %v1693
          %v1701 = vmul.f32 1.0, %v1700
          %v1702 = vld [vmem:[%s15] sm:$0xff]
          %v1703 = vld [vmem:[%s15 + $0x8] sm:$0xff]
          %v1704 = vld [vmem:[%s15 + $0x10] sm:$0xff]
          %v1705 = vld [vmem:[%s15 + $0x18] sm:$0xff]
          %v1706 = vld [vmem:[%s15 + $0x20] sm:$0x7]
          %v1708 = vsel %vm1589, %v1706, 0
          %1710 = vmatprep.subr.mxu0 0.0
          %1711 = vmatpush1.msra.mxu0 %v1702
          %1712 = vmatprep.subr.mxu0 0.0
          %1713 = vmatpush1.msra.mxu0 %v1703
          %1714 = vmatprep.subr.mxu0 0.0
          %1715 = vmatpush1.msra.mxu0 %v1704
          %1716 = vmatprep.subr.mxu0 0.0
          %1717 = vmatpush1.msra.mxu0 %v1705
          %1718 = vmatprep.subr.mxu0 0.0
          %1719 = vmatpush1.msra.mxu0 %v1708
          %1720 = vmatprep.subr.mxu0 0.0
          %1721 = vmatpush1.msra.mxu0 0.0
          %1722 = vmatprep.subr.mxu0 0.0
          %1723 = vmatpush1.msra.mxu0 0.0
          %1724 = vmatprep.subr.mxu0 0.0
          %1725 = vmatpush1.msra.mxu0 0.0
          %1726 = vmatprep.subr.mxu0 0.0
          %1727 = vmatpush1.msra.mxu0 0.0
          %1728 = vmatprep.subr.mxu0 0.0
          %1729 = vmatpush1.msra.mxu0 0.0
          %1730 = vmatprep.subr.mxu0 0.0
          %1731 = vmatpush1.msra.mxu0 0.0
          %1732 = vmatprep.subr.mxu0 0.0
          %1733 = vmatpush1.msra.mxu0 0.0
          %1734 = vmatprep.subr.mxu0 0.0
          %1735 = vmatpush1.msra.mxu0 0.0
          %1736 = vmatprep.subr.mxu0 0.0
          %1737 = vmatpush1.msra.mxu0 0.0
          %1738 = vmatprep.subr.mxu0 0.0
          %1739 = vmatpush1.msra.mxu0 0.0
          %1740 = vmatprep.subr.mxu0 0.0
          %1741 = vmatpush1.msra.mxu0 0.0
          %1742 = vmatprep.subr.mxu0 0.0
          %1743 = vmatpush1.msra.mxu0 0.0
          %1744 = vmatprep.subr.mxu0 0.0
          %1745 = vmatpush1.msra.mxu0 0.0
          %1746 = vmatprep.subr.mxu0 0.0
          %1747 = vmatpush1.msra.mxu0 0.0
          %1748 = vmatprep.subr.mxu0 0.0
          %1749 = vmatpush1.msra.mxu0 0.0
          %1750 = vmatprep.subr.mxu0 0.0
          %1751 = vmatpush1.msra.mxu0 0.0
          %1752 = vmatprep.subr.mxu0 0.0
          %1753 = vmatpush1.msra.mxu0 0.0
          %1754 = vmatprep.subr.mxu0 0.0
          %1755 = vmatpush1.msra.mxu0 0.0
          %1756 = vmatprep.subr.mxu0 0.0
          %1757 = vmatpush1.msra.mxu0 0.0
          %1758 = vmatprep.subr.mxu0 0.0
          %1759 = vmatpush1.msra.mxu0 0.0
          %1760 = vmatprep.subr.mxu0 0.0
          %1761 = vmatpush1.msra.mxu0 0.0
          %1762 = vmatprep.subr.mxu0 0.0
          %1763 = vmatpush1.msra.mxu0 0.0
          %1764 = vmatprep.subr.mxu0 0.0
          %1765 = vmatpush1.msra.mxu0 0.0
          %1766 = vmatprep.subr.mxu0 0.0
          %1767 = vmatpush1.msra.mxu0 0.0
          %1768 = vmatprep.subr.mxu0 0.0
          %1769 = vmatpush1.msra.mxu0 0.0
          %1770 = vmatprep.subr.mxu0 0.0
          %1771 = vmatpush1.msra.mxu0 0.0
          %1772 = vmatprep.subr.mxu0 0.0
          %1773 = vmatpush1.msra.mxu0 0.0
          %1774 = vmatprep.mubr.f32.mxu0 0.0
          %1775 = vmatmul.mubr.f32.gmra.mrb[0].mxu0 %v1578
          %v1776 = vpop.f32.mrb[0].mxu0
          %v1777 = vadd.f32 0.0, %v1776
          %v1778 = vpop.f32.mrb[0].mxu0
          %1779 = vmatprep.mubr.f32.mxu0 0.0
          %1780 = vmatmul.mubr.f32.gmra.mrb[0].mxu0 %v1581
          %v1781 = vpop.f32.mrb[0].mxu0
          %v1782 = vadd.f32 0.0, %v1781
          %v1783 = vpop.f32.mrb[0].mxu0
          %1784 = vmatprep.mubr.f32.mxu0 0.0
          %1785 = vmatmul.mubr.f32.gmra.mrb[0].mxu0 %v1584
          %v1786 = vpop.f32.mrb[0].mxu0
          %v1787 = vadd.f32 0.0, %v1786
          %v1788 = vpop.f32.mrb[0].mxu0
          %1789 = vmatprep.mubr.f32.mxu0 0.0
          %1790 = vmatmul.mubr.f32.gmra.mrb[0].mxu0 %v1587
          %v1791 = vpop.f32.mrb[0].mxu0
          %v1792 = vadd.f32 0.0, %v1791
          %v1793 = vpop.f32.mrb[0].mxu0
          %1794 = vdwg.mxu0
          %v1795 = vmul.f32 %v1546, %v1695
          %v1796 = vmul.f32 %v1551, %v1697
          %v1797 = vmul.f32 %v1556, %v1699
          %v1798 = vmul.f32 %v1561, %v1701
          %v1799 = vadd.f32 %v1795, %v1777
          %v1800 = vadd.f32 %v1796, %v1782
          %v1801 = vadd.f32 %v1797, %v1787
          %v1802 = vadd.f32 %v1798, %v1792
          %v1803 = vld [vmem:[#allocation6] sm:$0xff]
          %v1804 = vld [vmem:[#allocation6 + $0x8] sm:$0xff]
          %v1805 = vld [vmem:[#allocation6 + $0x10] sm:$0xff]
          %v1806 = vld [vmem:[#allocation6 + $0x18] sm:$0xff]
          %v1807 = vadd.f32 %v1799, %v1803
          %v1808 = vadd.f32 %v1800, %v1804
          %v1809 = vadd.f32 %v1801, %v1805
          %v1810 = vadd.f32 %v1802, %v1806
          %vm1811 = vcmask 523264
          %1812 = vst.msk [vmem:[#allocation2] sm:$0xff] %vm1811, %v1807
          %1813 = vst.msk [vmem:[#allocation2 + $0x8] sm:$0xff] %vm1811, %v1808
          %1814 = vst.msk [vmem:[#allocation2 + $0x10] sm:$0xff] %vm1811, %v1809
          %1815 = vst.msk [vmem:[#allocation2 + $0x18] sm:$0xff] %vm1811, %v1810
        $region224: #{tpu_custom_call.1} parent=159 // pred_fallthru
          _
        %v1816 = vld [vmem:[#allocation2] sm:$0xff]
        %v1817 = vld [vmem:[#allocation2 + $0x8] sm:$0xff]
        %v1818 = vld [vmem:[#allocation2 + $0x10] sm:$0xff]
        %v1819 = vld [vmem:[#allocation2 + $0x18] sm:$0xff]
        %v1820 = vld [vmem:[%s1410] sm:$0xff]
        %v1821 = vld [vmem:[%s1410 + $0x8] sm:$0xff]
        %v1822 = vld [vmem:[%s1410 + $0x10] sm:$0xff]
        %v1823 = vld [vmem:[%s1410 + $0x18] sm:$0xff]
        %v1824 = vld [vmem:[%s1410 + $0x20] sm:$0xff]
        %v1825 = vld [vmem:[%s1410 + $0x28] sm:$0xff]
        %v1826 = vld [vmem:[%s1410 + $0x30] sm:$0xff]
        %v1827 = vld [vmem:[%s1410 + $0x38] sm:$0xff]
        %v1828 = vld [vmem:[%s1410 + $0x40] sm:$0xff]
        %v1829 = vld [vmem:[%s1410 + $0x48] sm:$0xff]
        %v1830 = vld [vmem:[%s1410 + $0x50] sm:$0xff]
        %v1831 = vld [vmem:[%s1410 + $0x58] sm:$0xff]
        %v1832 = vld [vmem:[%s1410 + $0x60] sm:$0xff]
        %v1833 = vld [vmem:[%s1410 + $0x68] sm:$0xff]
        %v1834 = vld [vmem:[%s1410 + $0x70] sm:$0xff]
        %v1835 = vld [vmem:[%s1410 + $0x78] sm:$0xff]
        %v1836 = vld [vmem:[%s1410 + $0x80] sm:$0xff]
        %v1837 = vld [vmem:[%s1410 + $0x88] sm:$0xff]
        %v1838 = vld [vmem:[%s1410 + $0x90] sm:$0xff]
        %v1839 = vld [vmem:[%s1410 + $0x98] sm:$0xff]
        %v1840 = vld [vmem:[%s1410 + $0xa0] sm:$0xff]
        %v1841 = vld [vmem:[%s1410 + $0xa8] sm:$0xff]
        %v1842 = vld [vmem:[%s1410 + $0xb0] sm:$0xff]
        %v1843 = vld [vmem:[%s1410 + $0xb8] sm:$0xff]
        %v1844 = vld [vmem:[%s1410 + $0xc0] sm:$0xff]
        %v1845 = vld [vmem:[%s1410 + $0xc8] sm:$0xff]
        %v1846 = vld [vmem:[%s1410 + $0xd0] sm:$0xff]
        %v1847 = vld [vmem:[%s1410 + $0xd8] sm:$0xff]
        %v1848 = vld [vmem:[%s1410 + $0xe0] sm:$0xff]
        %v1849 = vld [vmem:[%s1410 + $0xe8] sm:$0xff]
        %v1850 = vld [vmem:[%s1410 + $0xf0] sm:$0xff]
        %v1851 = vld [vmem:[%s1410 + $0xf8] sm:$0xff]
        %v1852 = vld [vmem:[%s1410 + $0x100] sm:$0xff]
        %v1853 = vld [vmem:[%s1410 + $0x108] sm:$0xff]
        %v1854 = vld [vmem:[%s1410 + $0x110] sm:$0xff]
        %v1855 = vld [vmem:[%s1410 + $0x118] sm:$0xff]
        %v1856 = vld [vmem:[%s1410 + $0x120] sm:$0xff]
        %v1857 = vld [vmem:[%s1410 + $0x128] sm:$0xff]
        %v1858 = vld [vmem:[%s1410 + $0x130] sm:$0xff]
        %v1859 = vld [vmem:[%s1410 + $0x138] sm:$0xff]
        %v1860 = vld [vmem:[%s1410 + $0x140] sm:$0xff]
        %v1861 = vld [vmem:[%s1410 + $0x148] sm:$0xff]
        %v1862 = vld [vmem:[%s1410 + $0x150] sm:$0xff]
        %v1863 = vld [vmem:[%s1410 + $0x158] sm:$0xff]
        %v1864 = vld [vmem:[%s1410 + $0x160] sm:$0xff]
        %v1865 = vld [vmem:[%s1410 + $0x168] sm:$0xff]
        %v1866 = vld [vmem:[%s1410 + $0x170] sm:$0xff]
        %v1867 = vld [vmem:[%s1410 + $0x178] sm:$0xff]
        %v1868 = vld [vmem:[%s1410 + $0x180] sm:$0xff]
        %v1869 = vld [vmem:[%s1410 + $0x188] sm:$0xff]
        %v1870 = vld [vmem:[%s1410 + $0x190] sm:$0xff]
        %v1871 = vld [vmem:[%s1410 + $0x198] sm:$0xff]
        %v1872 = vld [vmem:[%s1410 + $0x1a0] sm:$0xff]
        %v1873 = vld [vmem:[%s1410 + $0x1a8] sm:$0xff]
        %v1874 = vld [vmem:[%s1410 + $0x1b0] sm:$0xff]
        %v1875 = vld [vmem:[%s1410 + $0x1b8] sm:$0xff]
        %v1876 = vld [vmem:[%s1410 + $0x1c0] sm:$0xff]
        %v1877 = vld [vmem:[%s1410 + $0x1c8] sm:$0xff]
        %v1878 = vld [vmem:[%s1410 + $0x1d0] sm:$0xff]
        %v1879 = vld [vmem:[%s1410 + $0x1d8] sm:$0xff]
        %v1880 = vld [vmem:[%s1410 + $0x1e0] sm:$0xff]
        %v1881 = vld [vmem:[%s1410 + $0x1e8] sm:$0xff]
        %v1882 = vld [vmem:[%s1410 + $0x1f0] sm:$0xff]
        %v1883 = vld [vmem:[%s1410 + $0x1f8] sm:$0xff]
        %v1884 = vld [vmem:[%s1410 + $0x200] sm:$0xff]
        %v1885 = vld [vmem:[%s1410 + $0x208] sm:$0xff]
        %v1886 = vld [vmem:[%s1410 + $0x210] sm:$0xff]
        %v1887 = vld [vmem:[%s1410 + $0x218] sm:$0xff]
        %v1888 = vld [vmem:[%s1410 + $0x220] sm:$0xff]
        %v1889 = vld [vmem:[%s1410 + $0x228] sm:$0xff]
        %v1890 = vld [vmem:[%s1410 + $0x230] sm:$0xff]
        %v1891 = vld [vmem:[%s1410 + $0x238] sm:$0xff]
        %v1892 = vld [vmem:[%s1410 + $0x240] sm:$0xff]
        %v1893 = vld [vmem:[%s1410 + $0x248] sm:$0xff]
        %v1894 = vld [vmem:[%s1410 + $0x250] sm:$0xff]
        %v1895 = vld [vmem:[%s1410 + $0x258] sm:$0xff]
        %v1896 = vld [vmem:[%s1410 + $0x260] sm:$0xff]
        %v1897 = vld [vmem:[%s1410 + $0x268] sm:$0xff]
        %v1898 = vld [vmem:[%s1410 + $0x270] sm:$0xff]
        %v1899 = vld [vmem:[%s1410 + $0x278] sm:$0xff]
        %v1900 = vld [vmem:[%s1410 + $0x280] sm:$0xff]
        %v1901 = vld [vmem:[%s1410 + $0x288] sm:$0xff]
        %v1902 = vld [vmem:[%s1410 + $0x290] sm:$0xff]
        %v1903 = vld [vmem:[%s1410 + $0x298] sm:$0xff]
        %v1904 = vld [vmem:[%s1410 + $0x2a0] sm:$0xff]
        %v1905 = vld [vmem:[%s1410 + $0x2a8] sm:$0xff]
        %v1906 = vld [vmem:[%s1410 + $0x2b0] sm:$0xff]
        %v1907 = vld [vmem:[%s1410 + $0x2b8] sm:$0xff]
        %v1908 = vld [vmem:[%s1410 + $0x2c0] sm:$0xff]
        %v1909 = vld [vmem:[%s1410 + $0x2c8] sm:$0xff]
        %v1910 = vld [vmem:[%s1410 + $0x2d0] sm:$0xff]
        %v1911 = vld [vmem:[%s1410 + $0x2d8] sm:$0xff]
        %v1912 = vld [vmem:[%s1410 + $0x2e0] sm:$0xff]
        %v1913 = vld [vmem:[%s1410 + $0x2e8] sm:$0xff]
        %v1914 = vld [vmem:[%s1410 + $0x2f0] sm:$0xff]
        %v1915 = vld [vmem:[%s1410 + $0x2f8] sm:$0xff]
        %v1916 = vld [vmem:[%s1414] sm:$0xff]
        %v1917 = vld [vmem:[%s1414 + $0x8] sm:$0xf]
        %v1920 = vlaneseq
        %v1921 = vshrl.u32 %v1920, 7
        %v1922 = vsub.s32 0, %v1921
        %v1923 = vrot.slane %v1916, %v1922
        %v1924 = vlaneseq
        %v1925 = vshrl.u32 %v1924, 7
        %v1926 = vsub.s32 1, %v1925
        %v1927 = vrot.slane %v1916, %v1926
        %v1928 = vlaneseq
        %v1929 = vshrl.u32 %v1928, 7
        %v1930 = vsub.s32 2, %v1929
        %v1931 = vrot.slane %v1916, %v1930
        %v1932 = vlaneseq
        %v1933 = vshrl.u32 %v1932, 7
        %v1934 = vsub.s32 3, %v1933
        %v1935 = vrot.slane %v1916, %v1934
        %v1936 = vlaneseq
        %v1937 = vshrl.u32 %v1936, 7
        %v1938 = vsub.s32 4, %v1937
        %v1939 = vrot.slane %v1916, %v1938
        %v1940 = vlaneseq
        %v1941 = vshrl.u32 %v1940, 7
        %v1942 = vsub.s32 5, %v1941
        %v1943 = vrot.slane %v1916, %v1942
        %v1944 = vlaneseq
        %v1945 = vshrl.u32 %v1944, 7
        %v1946 = vsub.s32 6, %v1945
        %v1947 = vrot.slane %v1916, %v1946
        %v1948 = vlaneseq
        %v1949 = vshrl.u32 %v1948, 7
        %v1950 = vsub.s32 7, %v1949
        %v1951 = vrot.slane %v1916, %v1950
        %v1952 = vlaneseq
        %v1953 = vshrl.u32 %v1952, 7
        %v1954 = vsub.s32 0, %v1953
        %v1955 = vrot.slane %v1917, %v1954
        %v1956 = vlaneseq
        %v1957 = vshrl.u32 %v1956, 7
        %v1958 = vsub.s32 1, %v1957
        %v1959 = vrot.slane %v1917, %v1958
        %v1960 = vlaneseq
        %v1961 = vshrl.u32 %v1960, 7
        %v1962 = vsub.s32 2, %v1961
        %v1963 = vrot.slane %v1917, %v1962
        %v1964 = vlaneseq
        %v1965 = vshrl.u32 %v1964, 7
        %v1966 = vsub.s32 3, %v1965
        %v1967 = vrot.slane %v1917, %v1966
        %vm1980 = vcmask 523264
        %v1982 = vsel %vm1980, %v1816, 0
        %v1985 = vsel %vm1980, %v1817, 0
        %v1988 = vsel %vm1980, %v1818, 0
        %v1991 = vsel %vm1980, %v1819, 0
        %1993 = vmatprep.subr.mxu0 %v1821
        %1994 = vmatpush1.msra.mxu0 %v1820
        %1995 = vmatprep.subr.mxu0 %v1833
        %1996 = vmatpush1.msra.mxu0 %v1832
        %1997 = vmatprep.subr.mxu0 %v1845
        %1998 = vmatpush1.msra.mxu0 %v1844
        %1999 = vmatprep.subr.mxu0 %v1857
        %2000 = vmatpush1.msra.mxu0 %v1856
        %2001 = vmatprep.subr.mxu0 %v1869
        %2002 = vmatpush1.msra.mxu0 %v1868
        %2003 = vmatprep.subr.mxu0 %v1881
        %2004 = vmatpush1.msra.mxu0 %v1880
        %2005 = vmatprep.subr.mxu0 %v1893
        %2006 = vmatpush1.msra.mxu0 %v1892
        %2007 = vmatprep.subr.mxu0 %v1905
        %2008 = vmatpush1.msra.mxu0 %v1904
        %2009 = vmatprep.subr.mxu0 0.0
        %2010 = vmatpush1.msra.mxu0 0.0
        %2011 = vmatprep.subr.mxu0 0.0
        %2012 = vmatpush1.msra.mxu0 0.0
        %2013 = vmatprep.subr.mxu0 0.0
        %2014 = vmatpush1.msra.mxu0 0.0
        %2015 = vmatprep.subr.mxu0 0.0
        %2016 = vmatpush1.msra.mxu0 0.0
        %2017 = vmatprep.subr.mxu0 0.0
        %2018 = vmatpush1.msra.mxu0 0.0
        %2019 = vmatprep.subr.mxu0 0.0
        %2020 = vmatpush1.msra.mxu0 0.0
        %2021 = vmatprep.subr.mxu0 0.0
        %2022 = vmatpush1.msra.mxu0 0.0
        %2023 = vmatprep.subr.mxu0 0.0
        %2024 = vmatpush1.msra.mxu0 0.0
        %2025 = vmatprep.subr.mxu0 0.0
        %2026 = vmatpush1.msra.mxu0 0.0
        %2027 = vmatprep.subr.mxu0 0.0
        %2028 = vmatpush1.msra.mxu0 0.0
        %2029 = vmatprep.subr.mxu0 0.0
        %2030 = vmatpush1.msra.mxu0 0.0
        %2031 = vmatprep.subr.mxu0 0.0
        %2032 = vmatpush1.msra.mxu0 0.0
        %2033 = vmatprep.subr.mxu0 0.0
        %2034 = vmatpush1.msra.mxu0 0.0
        %2035 = vmatprep.subr.mxu0 0.0
        %2036 = vmatpush1.msra.mxu0 0.0
        %2037 = vmatprep.subr.mxu0 0.0
        %2038 = vmatpush1.msra.mxu0 0.0
        %2039 = vmatprep.subr.mxu0 0.0
        %2040 = vmatpush1.msra.mxu0 0.0
        %2041 = vmatprep.subr.mxu0 0.0
        %2042 = vmatpush1.msra.mxu0 0.0
        %2043 = vmatprep.subr.mxu0 0.0
        %2044 = vmatpush1.msra.mxu0 0.0
        %2045 = vmatprep.subr.mxu0 0.0
        %2046 = vmatpush1.msra.mxu0 0.0
        %2047 = vmatprep.subr.mxu0 0.0
        %2048 = vmatpush1.msra.mxu0 0.0
        %2049 = vmatprep.subr.mxu0 0.0
        %2050 = vmatpush1.msra.mxu0 0.0
        %2051 = vmatprep.subr.mxu0 0.0
        %2052 = vmatpush1.msra.mxu0 0.0
        %2053 = vmatprep.subr.mxu0 0.0
        %2054 = vmatpush1.msra.mxu0 0.0
        %2055 = vmatprep.subr.mxu0 0.0
        %2056 = vmatpush1.msra.mxu0 0.0
        %2057 = vmatprep.mubr.f32.mxu0 0.0
        %2058 = vmatmul.mubr.f32.gmra.mrb[0].mxu0 %v1982
        %v2059 = vpop.f32.mrb[0].mxu0
        %v2060 = vadd.f32 %v1923, %v2059
        %v2061 = vpop.f32.mrb[0].mxu0
        %v2062 = vadd.f32 %v1927, %v2061
        %2063 = vmatprep.mubr.f32.mxu0 0.0
        %2064 = vmatmul.mubr.f32.gmra.mrb[0].mxu0 %v1985
        %v2065 = vpop.f32.mrb[0].mxu0
        %v2066 = vadd.f32 %v1923, %v2065
        %v2067 = vpop.f32.mrb[0].mxu0
        %v2068 = vadd.f32 %v1927, %v2067
        %2069 = vmatprep.mubr.f32.mxu0 0.0
        %2070 = vmatmul.mubr.f32.gmra.mrb[0].mxu0 %v1988
        %v2071 = vpop.f32.mrb[0].mxu0
        %v2072 = vadd.f32 %v1923, %v2071
        %v2073 = vpop.f32.mrb[0].mxu0
        %v2074 = vadd.f32 %v1927, %v2073
        %2075 = vmatprep.mubr.f32.mxu0 0.0
        %2076 = vmatmul.mubr.f32.gmra.mrb[0].mxu0 %v1991
        %v2077 = vpop.f32.mrb[0].mxu0
        %v2078 = vadd.f32 %v1923, %v2077
        %v2079 = vpop.f32.mrb[0].mxu0
        %v2080 = vadd.f32 %v1927, %v2079
        %2081 = vdwg.mxu0
        %2082 = vmatprep.subr.mxu0 %v1823
        %2083 = vmatpush1.msra.mxu0 %v1822
        %2084 = vmatprep.subr.mxu0 %v1835
        %2085 = vmatpush1.msra.mxu0 %v1834
        %2086 = vmatprep.subr.mxu0 %v1847
        %2087 = vmatpush1.msra.mxu0 %v1846
        %2088 = vmatprep.subr.mxu0 %v1859
        %2089 = vmatpush1.msra.mxu0 %v1858
        %2090 = vmatprep.subr.mxu0 %v1871
        %2091 = vmatpush1.msra.mxu0 %v1870
        %2092 = vmatprep.subr.mxu0 %v1883
        %2093 = vmatpush1.msra.mxu0 %v1882
        %2094 = vmatprep.subr.mxu0 %v1895
        %2095 = vmatpush1.msra.mxu0 %v1894
        %2096 = vmatprep.subr.mxu0 %v1907
        %2097 = vmatpush1.msra.mxu0 %v1906
        %2098 = vmatprep.subr.mxu0 0.0
        %2099 = vmatpush1.msra.mxu0 0.0
        %2100 = vmatprep.subr.mxu0 0.0
        %2101 = vmatpush1.msra.mxu0 0.0
        %2102 = vmatprep.subr.mxu0 0.0
        %2103 = vmatpush1.msra.mxu0 0.0
        %2104 = vmatprep.subr.mxu0 0.0
        %2105 = vmatpush1.msra.mxu0 0.0
        %2106 = vmatprep.subr.mxu0 0.0
        %2107 = vmatpush1.msra.mxu0 0.0
        %2108 = vmatprep.subr.mxu0 0.0
        %2109 = vmatpush1.msra.mxu0 0.0
        %2110 = vmatprep.subr.mxu0 0.0
        %2111 = vmatpush1.msra.mxu0 0.0
        %2112 = vmatprep.subr.mxu0 0.0
        %2113 = vmatpush1.msra.mxu0 0.0
        %2114 = vmatprep.subr.mxu0 0.0
        %2115 = vmatpush1.msra.mxu0 0.0
        %2116 = vmatprep.subr.mxu0 0.0
        %2117 = vmatpush1.msra.mxu0 0.0
        %2118 = vmatprep.subr.mxu0 0.0
        %2119 = vmatpush1.msra.mxu0 0.0
        %2120 = vmatprep.subr.mxu0 0.0
        %2121 = vmatpush1.msra.mxu0 0.0
        %2122 = vmatprep.subr.mxu0 0.0
        %2123 = vmatpush1.msra.mxu0 0.0
        %2124 = vmatprep.subr.mxu0 0.0
        %2125 = vmatpush1.msra.mxu0 0.0
        %2126 = vmatprep.subr.mxu0 0.0
        %2127 = vmatpush1.msra.mxu0 0.0
        %2128 = vmatprep.subr.mxu0 0.0
        %2129 = vmatpush1.msra.mxu0 0.0
        %2130 = vmatprep.subr.mxu0 0.0
        %2131 = vmatpush1.msra.mxu0 0.0
        %2132 = vmatprep.subr.mxu0 0.0
        %2133 = vmatpush1.msra.mxu0 0.0
        %2134 = vmatprep.subr.mxu0 0.0
        %2135 = vmatpush1.msra.mxu0 0.0
        %2136 = vmatprep.subr.mxu0 0.0
        %2137 = vmatpush1.msra.mxu0 0.0
        %2138 = vmatprep.subr.mxu0 0.0
        %2139 = vmatpush1.msra.mxu0 0.0
        %2140 = vmatprep.subr.mxu0 0.0
        %2141 = vmatpush1.msra.mxu0 0.0
        %2142 = vmatprep.subr.mxu0 0.0
        %2143 = vmatpush1.msra.mxu0 0.0
        %2144 = vmatprep.subr.mxu0 0.0
        %2145 = vmatpush1.msra.mxu0 0.0
        %2146 = vmatprep.mubr.f32.mxu0 0.0
        %2147 = vmatmul.mubr.f32.gmra.mrb[0].mxu0 %v1982
        %v2148 = vpop.f32.mrb[0].mxu0
        %v2149 = vadd.f32 %v1931, %v2148
        %v2150 = vpop.f32.mrb[0].mxu0
        %v2151 = vadd.f32 %v1935, %v2150
        %2152 = vmatprep.mubr.f32.mxu0 0.0
        %2153 = vmatmul.mubr.f32.gmra.mrb[0].mxu0 %v1985
        %v2154 = vpop.f32.mrb[0].mxu0
        %v2155 = vadd.f32 %v1931, %v2154
        %v2156 = vpop.f32.mrb[0].mxu0
        %v2157 = vadd.f32 %v1935, %v2156
        %2158 = vmatprep.mubr.f32.mxu0 0.0
        %2159 = vmatmul.mubr.f32.gmra.mrb[0].mxu0 %v1988
        %v2160 = vpop.f32.mrb[0].mxu0
        %v2161 = vadd.f32 %v1931, %v2160
        %v2162 = vpop.f32.mrb[0].mxu0
        %v2163 = vadd.f32 %v1935, %v2162
        %2164 = vmatprep.mubr.f32.mxu0 0.0
        %2165 = vmatmul.mubr.f32.gmra.mrb[0].mxu0 %v1991
        %v2166 = vpop.f32.mrb[0].mxu0
        %v2167 = vadd.f32 %v1931, %v2166
        %v2168 = vpop.f32.mrb[0].mxu0
        %v2169 = vadd.f32 %v1935, %v2168
        %2170 = vdwg.mxu0
        %2171 = vmatprep.subr.mxu0 %v1825
        %2172 = vmatpush1.msra.mxu0 %v1824
        %2173 = vmatprep.subr.mxu0 %v1837
        %2174 = vmatpush1.msra.mxu0 %v1836
        %2175 = vmatprep.subr.mxu0 %v1849
        %2176 = vmatpush1.msra.mxu0 %v1848
        %2177 = vmatprep.subr.mxu0 %v1861
        %2178 = vmatpush1.msra.mxu0 %v1860
        %2179 = vmatprep.subr.mxu0 %v1873
        %2180 = vmatpush1.msra.mxu0 %v1872
        %2181 = vmatprep.subr.mxu0 %v1885
        %2182 = vmatpush1.msra.mxu0 %v1884
        %2183 = vmatprep.subr.mxu0 %v1897
        %2184 = vmatpush1.msra.mxu0 %v1896
        %2185 = vmatprep.subr.mxu0 %v1909
        %2186 = vmatpush1.msra.mxu0 %v1908
        %2187 = vmatprep.subr.mxu0 0.0
        %2188 = vmatpush1.msra.mxu0 0.0
        %2189 = vmatprep.subr.mxu0 0.0
        %2190 = vmatpush1.msra.mxu0 0.0
        %2191 = vmatprep.subr.mxu0 0.0
        %2192 = vmatpush1.msra.mxu0 0.0
        %2193 = vmatprep.subr.mxu0 0.0
        %2194 = vmatpush1.msra.mxu0 0.0
        %2195 = vmatprep.subr.mxu0 0.0
        %2196 = vmatpush1.msra.mxu0 0.0
        %2197 = vmatprep.subr.mxu0 0.0
        %2198 = vmatpush1.msra.mxu0 0.0
        %2199 = vmatprep.subr.mxu0 0.0
        %2200 = vmatpush1.msra.mxu0 0.0
        %2201 = vmatprep.subr.mxu0 0.0
        %2202 = vmatpush1.msra.mxu0 0.0
        %2203 = vmatprep.subr.mxu0 0.0
        %2204 = vmatpush1.msra.mxu0 0.0
        %2205 = vmatprep.subr.mxu0 0.0
        %2206 = vmatpush1.msra.mxu0 0.0
        %2207 = vmatprep.subr.mxu0 0.0
        %2208 = vmatpush1.msra.mxu0 0.0
        %2209 = vmatprep.subr.mxu0 0.0
        %2210 = vmatpush1.msra.mxu0 0.0
        %2211 = vmatprep.subr.mxu0 0.0
        %2212 = vmatpush1.msra.mxu0 0.0
        %2213 = vmatprep.subr.mxu0 0.0
        %2214 = vmatpush1.msra.mxu0 0.0
        %2215 = vmatprep.subr.mxu0 0.0
        %2216 = vmatpush1.msra.mxu0 0.0
        %2217 = vmatprep.subr.mxu0 0.0
        %2218 = vmatpush1.msra.mxu0 0.0
        %2219 = vmatprep.subr.mxu0 0.0
        %2220 = vmatpush1.msra.mxu0 0.0
        %2221 = vmatprep.subr.mxu0 0.0
        %2222 = vmatpush1.msra.mxu0 0.0
        %2223 = vmatprep.subr.mxu0 0.0
        %2224 = vmatpush1.msra.mxu0 0.0
        %2225 = vmatprep.subr.mxu0 0.0
        %2226 = vmatpush1.msra.mxu0 0.0
        %2227 = vmatprep.subr.mxu0 0.0
        %2228 = vmatpush1.msra.mxu0 0.0
        %2229 = vmatprep.subr.mxu0 0.0
        %2230 = vmatpush1.msra.mxu0 0.0
        %2231 = vmatprep.subr.mxu0 0.0
        %2232 = vmatpush1.msra.mxu0 0.0
        %2233 = vmatprep.subr.mxu0 0.0
        %2234 = vmatpush1.msra.mxu0 0.0
        %2235 = vmatprep.mubr.f32.mxu0 0.0
        %2236 = vmatmul.mubr.f32.gmra.mrb[0].mxu0 %v1982
        %v2237 = vpop.f32.mrb[0].mxu0
        %v2238 = vadd.f32 %v1939, %v2237
        %v2239 = vpop.f32.mrb[0].mxu0
        %v2240 = vadd.f32 %v1943, %v2239
        %2241 = vmatprep.mubr.f32.mxu0 0.0
        %2242 = vmatmul.mubr.f32.gmra.mrb[0].mxu0 %v1985
        %v2243 = vpop.f32.mrb[0].mxu0
        %v2244 = vadd.f32 %v1939, %v2243
        %v2245 = vpop.f32.mrb[0].mxu0
        %v2246 = vadd.f32 %v1943, %v2245
        %2247 = vmatprep.mubr.f32.mxu0 0.0
        %2248 = vmatmul.mubr.f32.gmra.mrb[0].mxu0 %v1988
        %v2249 = vpop.f32.mrb[0].mxu0
        %v2250 = vadd.f32 %v1939, %v2249
        %v2251 = vpop.f32.mrb[0].mxu0
        %v2252 = vadd.f32 %v1943, %v2251
        %2253 = vmatprep.mubr.f32.mxu0 0.0
        %2254 = vmatmul.mubr.f32.gmra.mrb[0].mxu0 %v1991
        %v2255 = vpop.f32.mrb[0].mxu0
        %v2256 = vadd.f32 %v1939, %v2255
        %v2257 = vpop.f32.mrb[0].mxu0
        %v2258 = vadd.f32 %v1943, %v2257
        %2259 = vdwg.mxu0
        %2260 = vmatprep.subr.mxu0 %v1827
        %2261 = vmatpush1.msra.mxu0 %v1826
        %2262 = vmatprep.subr.mxu0 %v1839
        %2263 = vmatpush1.msra.mxu0 %v1838
        %2264 = vmatprep.subr.mxu0 %v1851
        %2265 = vmatpush1.msra.mxu0 %v1850
        %2266 = vmatprep.subr.mxu0 %v1863
        %2267 = vmatpush1.msra.mxu0 %v1862
        %2268 = vmatprep.subr.mxu0 %v1875
        %2269 = vmatpush1.msra.mxu0 %v1874
        %2270 = vmatprep.subr.mxu0 %v1887
        %2271 = vmatpush1.msra.mxu0 %v1886
        %2272 = vmatprep.subr.mxu0 %v1899
        %2273 = vmatpush1.msra.mxu0 %v1898
        %2274 = vmatprep.subr.mxu0 %v1911
        %2275 = vmatpush1.msra.mxu0 %v1910
        %2276 = vmatprep.subr.mxu0 0.0
        %2277 = vmatpush1.msra.mxu0 0.0
        %2278 = vmatprep.subr.mxu0 0.0
        %2279 = vmatpush1.msra.mxu0 0.0
        %2280 = vmatprep.subr.mxu0 0.0
        %2281 = vmatpush1.msra.mxu0 0.0
        %2282 = vmatprep.subr.mxu0 0.0
        %2283 = vmatpush1.msra.mxu0 0.0
        %2284 = vmatprep.subr.mxu0 0.0
        %2285 = vmatpush1.msra.mxu0 0.0
        %2286 = vmatprep.subr.mxu0 0.0
        %2287 = vmatpush1.msra.mxu0 0.0
        %2288 = vmatprep.subr.mxu0 0.0
        %2289 = vmatpush1.msra.mxu0 0.0
        %2290 = vmatprep.subr.mxu0 0.0
        %2291 = vmatpush1.msra.mxu0 0.0
        %2292 = vmatprep.subr.mxu0 0.0
        %2293 = vmatpush1.msra.mxu0 0.0
        %2294 = vmatprep.subr.mxu0 0.0
        %2295 = vmatpush1.msra.mxu0 0.0
        %2296 = vmatprep.subr.mxu0 0.0
        %2297 = vmatpush1.msra.mxu0 0.0
        %2298 = vmatprep.subr.mxu0 0.0
        %2299 = vmatpush1.msra.mxu0 0.0
        %2300 = vmatprep.subr.mxu0 0.0
        %2301 = vmatpush1.msra.mxu0 0.0
        %2302 = vmatprep.subr.mxu0 0.0
        %2303 = vmatpush1.msra.mxu0 0.0
        %2304 = vmatprep.subr.mxu0 0.0
        %2305 = vmatpush1.msra.mxu0 0.0
        %2306 = vmatprep.subr.mxu0 0.0
        %2307 = vmatpush1.msra.mxu0 0.0
        %2308 = vmatprep.subr.mxu0 0.0
        %2309 = vmatpush1.msra.mxu0 0.0
        %2310 = vmatprep.subr.mxu0 0.0
        %2311 = vmatpush1.msra.mxu0 0.0
        %2312 = vmatprep.subr.mxu0 0.0
        %2313 = vmatpush1.msra.mxu0 0.0
        %2314 = vmatprep.subr.mxu0 0.0
        %2315 = vmatpush1.msra.mxu0 0.0
        %2316 = vmatprep.subr.mxu0 0.0
        %2317 = vmatpush1.msra.mxu0 0.0
        %2318 = vmatprep.subr.mxu0 0.0
        %2319 = vmatpush1.msra.mxu0 0.0
        %2320 = vmatprep.subr.mxu0 0.0
        %2321 = vmatpush1.msra.mxu0 0.0
        %2322 = vmatprep.subr.mxu0 0.0
        %2323 = vmatpush1.msra.mxu0 0.0
        %2324 = vmatprep.mubr.f32.mxu0 0.0
        %2325 = vmatmul.mubr.f32.gmra.mrb[0].mxu0 %v1982
        %v2326 = vpop.f32.mrb[0].mxu0
        %v2327 = vadd.f32 %v1947, %v2326
        %v2328 = vpop.f32.mrb[0].mxu0
        %v2329 = vadd.f32 %v1951, %v2328
        %2330 = vmatprep.mubr.f32.mxu0 0.0
        %2331 = vmatmul.mubr.f32.gmra.mrb[0].mxu0 %v1985
        %v2332 = vpop.f32.mrb[0].mxu0
        %v2333 = vadd.f32 %v1947, %v2332
        %v2334 = vpop.f32.mrb[0].mxu0
        %v2335 = vadd.f32 %v1951, %v2334
        %2336 = vmatprep.mubr.f32.mxu0 0.0
        %2337 = vmatmul.mubr.f32.gmra.mrb[0].mxu0 %v1988
        %v2338 = vpop.f32.mrb[0].mxu0
        %v2339 = vadd.f32 %v1947, %v2338
        %v2340 = vpop.f32.mrb[0].mxu0
        %v2341 = vadd.f32 %v1951, %v2340
        %2342 = vmatprep.mubr.f32.mxu0 0.0
        %2343 = vmatmul.mubr.f32.gmra.mrb[0].mxu0 %v1991
        %v2344 = vpop.f32.mrb[0].mxu0
        %v2345 = vadd.f32 %v1947, %v2344
        %v2346 = vpop.f32.mrb[0].mxu0
        %v2347 = vadd.f32 %v1951, %v2346
        %2348 = vdwg.mxu0
        %2349 = vmatprep.subr.mxu0 %v1829
        %2350 = vmatpush1.msra.mxu0 %v1828
        %2351 = vmatprep.subr.mxu0 %v1841
        %2352 = vmatpush1.msra.mxu0 %v1840
        %2353 = vmatprep.subr.mxu0 %v1853
        %2354 = vmatpush1.msra.mxu0 %v1852
        %2355 = vmatprep.subr.mxu0 %v1865
        %2356 = vmatpush1.msra.mxu0 %v1864
        %2357 = vmatprep.subr.mxu0 %v1877
        %2358 = vmatpush1.msra.mxu0 %v1876
        %2359 = vmatprep.subr.mxu0 %v1889
        %2360 = vmatpush1.msra.mxu0 %v1888
        %2361 = vmatprep.subr.mxu0 %v1901
        %2362 = vmatpush1.msra.mxu0 %v1900
        %2363 = vmatprep.subr.mxu0 %v1913
        %2364 = vmatpush1.msra.mxu0 %v1912
        %2365 = vmatprep.subr.mxu0 0.0
        %2366 = vmatpush1.msra.mxu0 0.0
        %2367 = vmatprep.subr.mxu0 0.0
        %2368 = vmatpush1.msra.mxu0 0.0
        %2369 = vmatprep.subr.mxu0 0.0
        %2370 = vmatpush1.msra.mxu0 0.0
        %2371 = vmatprep.subr.mxu0 0.0
        %2372 = vmatpush1.msra.mxu0 0.0
        %2373 = vmatprep.subr.mxu0 0.0
        %2374 = vmatpush1.msra.mxu0 0.0
        %2375 = vmatprep.subr.mxu0 0.0
        %2376 = vmatpush1.msra.mxu0 0.0
        %2377 = vmatprep.subr.mxu0 0.0
        %2378 = vmatpush1.msra.mxu0 0.0
        %2379 = vmatprep.subr.mxu0 0.0
        %2380 = vmatpush1.msra.mxu0 0.0
        %2381 = vmatprep.subr.mxu0 0.0
        %2382 = vmatpush1.msra.mxu0 0.0
        %2383 = vmatprep.subr.mxu0 0.0
        %2384 = vmatpush1.msra.mxu0 0.0
        %2385 = vmatprep.subr.mxu0 0.0
        %2386 = vmatpush1.msra.mxu0 0.0
        %2387 = vmatprep.subr.mxu0 0.0
        %2388 = vmatpush1.msra.mxu0 0.0
        %2389 = vmatprep.subr.mxu0 0.0
        %2390 = vmatpush1.msra.mxu0 0.0
        %2391 = vmatprep.subr.mxu0 0.0
        %2392 = vmatpush1.msra.mxu0 0.0
        %2393 = vmatprep.subr.mxu0 0.0
        %2394 = vmatpush1.msra.mxu0 0.0
        %2395 = vmatprep.subr.mxu0 0.0
        %2396 = vmatpush1.msra.mxu0 0.0
        %2397 = vmatprep.subr.mxu0 0.0
        %2398 = vmatpush1.msra.mxu0 0.0
        %2399 = vmatprep.subr.mxu0 0.0
        %2400 = vmatpush1.msra.mxu0 0.0
        %2401 = vmatprep.subr.mxu0 0.0
        %2402 = vmatpush1.msra.mxu0 0.0
        %2403 = vmatprep.subr.mxu0 0.0
        %2404 = vmatpush1.msra.mxu0 0.0
        %2405 = vmatprep.subr.mxu0 0.0
        %2406 = vmatpush1.msra.mxu0 0.0
        %2407 = vmatprep.subr.mxu0 0.0
        %2408 = vmatpush1.msra.mxu0 0.0
        %2409 = vmatprep.subr.mxu0 0.0
        %2410 = vmatpush1.msra.mxu0 0.0
        %2411 = vmatprep.subr.mxu0 0.0
        %2412 = vmatpush1.msra.mxu0 0.0
        %2413 = vmatprep.mubr.f32.mxu0 0.0
        %2414 = vmatmul.mubr.f32.gmra.mrb[0].mxu0 %v1982
        %v2415 = vpop.f32.mrb[0].mxu0
        %v2416 = vadd.f32 %v1955, %v2415
        %v2417 = vpop.f32.mrb[0].mxu0
        %v2418 = vadd.f32 %v1959, %v2417
        %2419 = vmatprep.mubr.f32.mxu0 0.0
        %2420 = vmatmul.mubr.f32.gmra.mrb[0].mxu0 %v1985
        %v2421 = vpop.f32.mrb[0].mxu0
        %v2422 = vadd.f32 %v1955, %v2421
        %v2423 = vpop.f32.mrb[0].mxu0
        %v2424 = vadd.f32 %v1959, %v2423
        %2425 = vmatprep.mubr.f32.mxu0 0.0
        %2426 = vmatmul.mubr.f32.gmra.mrb[0].mxu0 %v1988
        %v2427 = vpop.f32.mrb[0].mxu0
        %v2428 = vadd.f32 %v1955, %v2427
        %v2429 = vpop.f32.mrb[0].mxu0
        %v2430 = vadd.f32 %v1959, %v2429
        %2431 = vmatprep.mubr.f32.mxu0 0.0
        %2432 = vmatmul.mubr.f32.gmra.mrb[0].mxu0 %v1991
        %v2433 = vpop.f32.mrb[0].mxu0
        %v2434 = vadd.f32 %v1955, %v2433
        %v2435 = vpop.f32.mrb[0].mxu0
        %v2436 = vadd.f32 %v1959, %v2435
        %2437 = vdwg.mxu0
        %2438 = vmatprep.subr.mxu0 %v1831
        %2439 = vmatpush1.msra.mxu0 %v1830
        %2440 = vmatprep.subr.mxu0 %v1843
        %2441 = vmatpush1.msra.mxu0 %v1842
        %2442 = vmatprep.subr.mxu0 %v1855
        %2443 = vmatpush1.msra.mxu0 %v1854
        %2444 = vmatprep.subr.mxu0 %v1867
        %2445 = vmatpush1.msra.mxu0 %v1866
        %2446 = vmatprep.subr.mxu0 %v1879
        %2447 = vmatpush1.msra.mxu0 %v1878
        %2448 = vmatprep.subr.mxu0 %v1891
        %2449 = vmatpush1.msra.mxu0 %v1890
        %2450 = vmatprep.subr.mxu0 %v1903
        %2451 = vmatpush1.msra.mxu0 %v1902
        %2452 = vmatprep.subr.mxu0 %v1915
        %2453 = vmatpush1.msra.mxu0 %v1914
        %2454 = vmatprep.subr.mxu0 0.0
        %2455 = vmatpush1.msra.mxu0 0.0
        %2456 = vmatprep.subr.mxu0 0.0
        %2457 = vmatpush1.msra.mxu0 0.0
        %2458 = vmatprep.subr.mxu0 0.0
        %2459 = vmatpush1.msra.mxu0 0.0
        %2460 = vmatprep.subr.mxu0 0.0
        %2461 = vmatpush1.msra.mxu0 0.0
        %2462 = vmatprep.subr.mxu0 0.0
        %2463 = vmatpush1.msra.mxu0 0.0
        %2464 = vmatprep.subr.mxu0 0.0
        %2465 = vmatpush1.msra.mxu0 0.0
        %2466 = vmatprep.subr.mxu0 0.0
        %2467 = vmatpush1.msra.mxu0 0.0
        %2468 = vmatprep.subr.mxu0 0.0
        %2469 = vmatpush1.msra.mxu0 0.0
        %2470 = vmatprep.subr.mxu0 0.0
        %2471 = vmatpush1.msra.mxu0 0.0
        %2472 = vmatprep.subr.mxu0 0.0
        %2473 = vmatpush1.msra.mxu0 0.0
        %2474 = vmatprep.subr.mxu0 0.0
        %2475 = vmatpush1.msra.mxu0 0.0
        %2476 = vmatprep.subr.mxu0 0.0
        %2477 = vmatpush1.msra.mxu0 0.0
        %2478 = vmatprep.subr.mxu0 0.0
        %2479 = vmatpush1.msra.mxu0 0.0
        %2480 = vmatprep.subr.mxu0 0.0
        %2481 = vmatpush1.msra.mxu0 0.0
        %2482 = vmatprep.subr.mxu0 0.0
        %2483 = vmatpush1.msra.mxu0 0.0
        %2484 = vmatprep.subr.mxu0 0.0
        %2485 = vmatpush1.msra.mxu0 0.0
        %2486 = vmatprep.subr.mxu0 0.0
        %2487 = vmatpush1.msra.mxu0 0.0
        %2488 = vmatprep.subr.mxu0 0.0
        %2489 = vmatpush1.msra.mxu0 0.0
        %2490 = vmatprep.subr.mxu0 0.0
        %2491 = vmatpush1.msra.mxu0 0.0
        %2492 = vmatprep.subr.mxu0 0.0
        %2493 = vmatpush1.msra.mxu0 0.0
        %2494 = vmatprep.subr.mxu0 0.0
        %2495 = vmatpush1.msra.mxu0 0.0
        %2496 = vmatprep.subr.mxu0 0.0
        %2497 = vmatpush1.msra.mxu0 0.0
        %2498 = vmatprep.subr.mxu0 0.0
        %2499 = vmatpush1.msra.mxu0 0.0
        %2500 = vmatprep.subr.mxu0 0.0
        %2501 = vmatpush1.msra.mxu0 0.0
        %2502 = vmatprep.mubr.f32.mxu0 0.0
        %2503 = vmatmul.mubr.f32.gmra.mrb[0].mxu0 %v1982
        %v2504 = vpop.f32.mrb[0].mxu0
        %v2505 = vadd.f32 %v1963, %v2504
        %v2506 = vpop.f32.mrb[0].mxu0
        %v2507 = vadd.f32 %v1967, %v2506
        %2508 = vmatprep.mubr.f32.mxu0 0.0
        %2509 = vmatmul.mubr.f32.gmra.mrb[0].mxu0 %v1985
        %v2510 = vpop.f32.mrb[0].mxu0
        %v2511 = vadd.f32 %v1963, %v2510
        %v2512 = vpop.f32.mrb[0].mxu0
        %v2513 = vadd.f32 %v1967, %v2512
        %2514 = vmatprep.mubr.f32.mxu0 0.0
        %2515 = vmatmul.mubr.f32.gmra.mrb[0].mxu0 %v1988
        %v2516 = vpop.f32.mrb[0].mxu0
        %v2517 = vadd.f32 %v1963, %v2516
        %v2518 = vpop.f32.mrb[0].mxu0
        %v2519 = vadd.f32 %v1967, %v2518
        %2520 = vmatprep.mubr.f32.mxu0 0.0
        %2521 = vmatmul.mubr.f32.gmra.mrb[0].mxu0 %v1991
        %v2522 = vpop.f32.mrb[0].mxu0
        %v2523 = vadd.f32 %v1963, %v2522
        %v2524 = vpop.f32.mrb[0].mxu0
        %v2525 = vadd.f32 %v1967, %v2524
        %2526 = vdwg.mxu0
        %v2527 = vmul.f32 %v2060, 0.25
        %v2528 = vmul.f32 %v2066, 0.25
        %v2529 = vmul.f32 %v2072, 0.25
        %v2530 = vmul.f32 %v2078, 0.25
        %2531 = vmatprep.subr.mxu0 0.0
        %2532 = vmatpush1.xpose.msra.mxu0 %v2062
        %2533 = vmatprep.subr.mxu0 0.0
        %2534 = vmatpush1.xpose.msra.mxu0 %v2068
        %2535 = vmatprep.subr.mxu0 0.0
        %2536 = vmatpush1.xpose.msra.mxu0 %v2074
        %2537 = vmatprep.subr.mxu0 0.0
        %2538 = vmatpush1.xpose.msra.mxu0 %v2080
        %2539 = vmatprep.subr.mxu0 0.0
        %2540 = vmatpush1.xpose.msra.mxu0 0.0
        %2541 = vmatprep.subr.mxu0 0.0
        %2542 = vmatpush1.xpose.msra.mxu0 0.0
        %2543 = vmatprep.subr.mxu0 0.0
        %2544 = vmatpush1.xpose.msra.mxu0 0.0
        %2545 = vmatprep.subr.mxu0 0.0
        %2546 = vmatpush1.xpose.msra.mxu0 0.0
        %2547 = vmatprep.subr.mxu0 0.0
        %2548 = vmatpush1.xpose.msra.mxu0 0.0
        %2549 = vmatprep.subr.mxu0 0.0
        %2550 = vmatpush1.xpose.msra.mxu0 0.0
        %2551 = vmatprep.subr.mxu0 0.0
        %2552 = vmatpush1.xpose.msra.mxu0 0.0
        %2553 = vmatprep.subr.mxu0 0.0
        %2554 = vmatpush1.xpose.msra.mxu0 0.0
        %2555 = vmatprep.subr.mxu0 0.0
        %2556 = vmatpush1.xpose.msra.mxu0 0.0
        %2557 = vmatprep.subr.mxu0 0.0
        %2558 = vmatpush1.xpose.msra.mxu0 0.0
        %2559 = vmatprep.subr.mxu0 0.0
        %2560 = vmatpush1.xpose.msra.mxu0 0.0
        %2561 = vmatprep.subr.mxu0 0.0
        %2562 = vmatpush1.xpose.msra.mxu0 0.0
        %2563 = vmatprep.subr.mxu0 0.0
        %2564 = vmatpush1.xpose.msra.mxu0 0.0
        %2565 = vmatprep.subr.mxu0 0.0
        %2566 = vmatpush1.xpose.msra.mxu0 0.0
        %2567 = vmatprep.subr.mxu0 0.0
        %2568 = vmatpush1.xpose.msra.mxu0 0.0
        %2569 = vmatprep.subr.mxu0 0.0
        %2570 = vmatpush1.xpose.msra.mxu0 0.0
        %2571 = vmatprep.subr.mxu0 0.0
        %2572 = vmatpush1.xpose.msra.mxu0 0.0
        %2573 = vmatprep.subr.mxu0 0.0
        %2574 = vmatpush1.xpose.msra.mxu0 0.0
        %2575 = vmatprep.subr.mxu0 0.0
        %2576 = vmatpush1.xpose.msra.mxu0 0.0
        %2577 = vmatprep.subr.mxu0 0.0
        %2578 = vmatpush1.xpose.msra.mxu0 0.0
        %2579 = vmatprep.subr.mxu0 0.0
        %2580 = vmatpush1.xpose.msra.mxu0 0.0
        %2581 = vmatprep.subr.mxu0 0.0
        %2582 = vmatpush1.xpose.msra.mxu0 0.0
        %2583 = vmatprep.subr.mxu0 0.0
        %2584 = vmatpush1.xpose.msra.mxu0 0.0
        %2585 = vmatprep.subr.mxu0 0.0
        %2586 = vmatpush1.xpose.msra.mxu0 0.0
        %2587 = vmatprep.subr.mxu0 0.0
        %2588 = vmatpush1.xpose.msra.mxu0 0.0
        %2589 = vmatprep.subr.mxu0 0.0
        %2590 = vmatpush1.xpose.msra.mxu0 0.0
        %2591 = vmatprep.subr.mxu0 0.0
        %2592 = vmatpush1.xpose.msra.mxu0 0.0
        %2593 = vmatprep.subr.mxu0 0.0
        %2594 = vmatpush1.xpose.msra.mxu0 0.0
        %2595 = vmatprep.mubr.f32.mxu0 0.0
        %2596 = vmatmul.mubr.f32.gmra.mrb[0].mxu0 %v2527
        %v2597 = vpop.f32.mrb[0].mxu0
        %v2598 = vadd.f32 0.0, %v2597
        %v2599 = vpop.f32.mrb[0].mxu0
        %2600 = vmatprep.mubr.f32.mxu0 0.0
        %2601 = vmatmul.mubr.f32.gmra.mrb[0].mxu0 %v2528
        %v2602 = vpop.f32.mrb[0].mxu0
        %v2603 = vadd.f32 0.0, %v2602
        %v2604 = vpop.f32.mrb[0].mxu0
        %2605 = vmatprep.mubr.f32.mxu0 0.0
        %2606 = vmatmul.mubr.f32.gmra.mrb[0].mxu0 %v2529
        %v2607 = vpop.f32.mrb[0].mxu0
        %v2608 = vadd.f32 0.0, %v2607
        %v2609 = vpop.f32.mrb[0].mxu0
        %2610 = vmatprep.mubr.f32.mxu0 0.0
        %2611 = vmatmul.mubr.f32.gmra.mrb[0].mxu0 %v2530
        %v2612 = vpop.f32.mrb[0].mxu0
        %v2613 = vadd.f32 0.0, %v2612
        %v2614 = vpop.f32.mrb[0].mxu0
        %2615 = vdwg.mxu0
        %vm2616 = vcmask 261120
        %v2617 = vsel %vm2616, %v2598, -inf
        %2618 = vmax.xlane.f32.xlu0 %v2617
        %v2619 = vpop.xlane.xlu0 %2618
        %v2620 = vsel %vm2616, %v2603, -inf
        %2621 = vmax.xlane.f32.xlu0 %v2620
        %v2622 = vpop.xlane.xlu0 %2621
        %v2623 = vsel %vm2616, %v2608, -inf
        %2624 = vmax.xlane.f32.xlu0 %v2623
        %v2625 = vpop.xlane.xlu0 %2624
        %v2626 = vsel %vm2616, %v2613, -inf
        %2627 = vmax.xlane.f32.xlu0 %v2626
        %v2628 = vpop.xlane.xlu0 %2627
        %v2629 = vsub.f32 %v2598, %v2619
        %v2630 = vsub.f32 %v2603, %v2622
        %v2631 = vsub.f32 %v2608, %v2625
        %v2632 = vsub.f32 %v2613, %v2628
        %v2633 = vmul.f32 %v2629, 1.442695
        %v2634 = vpow.pop %v2633
        %v2635 = vmul.f32 %v2630, 1.442695
        %v2636 = vpow.pop %v2635
        %v2637 = vmul.f32 %v2631, 1.442695
        %v2638 = vpow.pop %v2637
        %v2639 = vmul.f32 %v2632, 1.442695
        %v2640 = vpow.pop %v2639
        %v2641 = vsel %vm2616, %v2634, 0.0
        %2642 = vadd.xlane.f32.xlu0 %v2641
        %v2643 = vpop.xlane.xlu0 %2642
        %v2644 = vsel %vm2616, %v2636, 0.0
        %2645 = vadd.xlane.f32.xlu0 %v2644
        %v2646 = vpop.xlane.xlu0 %2645
        %v2647 = vsel %vm2616, %v2638, 0.0
        %2648 = vadd.xlane.f32.xlu0 %v2647
        %v2649 = vpop.xlane.xlu0 %2648
        %v2650 = vsel %vm2616, %v2640, 0.0
        %2651 = vadd.xlane.f32.xlu0 %v2650
        %v2652 = vpop.xlane.xlu0 %2651
        %v2653 = vrcp.pop %v2643
        %v2654 = vrcp.pop %v2646
        %v2655 = vrcp.pop %v2649
        %v2656 = vrcp.pop %v2652
        %v2657 = vmul.f32 %v2634, %v2653
        %v2658 = vmul.f32 %v2636, %v2654
        %v2659 = vmul.f32 %v2638, %v2655
        %v2660 = vmul.f32 %v2640, %v2656
        %v2662 = vsel %vm2616, %v2657, 0
        %v2665 = vsel %vm2616, %v2658, 0
        %v2668 = vsel %vm2616, %v2659, 0
        %v2671 = vsel %vm2616, %v2660, 0
        %2673 = vmatprep.subr.mxu0 0.0
        %2674 = vmatpush1.msra.mxu0 %v2149
        %2675 = vmatprep.subr.mxu0 0.0
        %2676 = vmatpush1.msra.mxu0 %v2155
        %2677 = vmatprep.subr.mxu0 0.0
        %2678 = vmatpush1.msra.mxu0 %v2161
        %2679 = vmatprep.subr.mxu0 0.0
        %2680 = vmatpush1.msra.mxu0 %v2167
        %2681 = vmatprep.subr.mxu0 0.0
        %2682 = vmatpush1.msra.mxu0 0.0
        %2683 = vmatprep.subr.mxu0 0.0
        %2684 = vmatpush1.msra.mxu0 0.0
        %2685 = vmatprep.subr.mxu0 0.0
        %2686 = vmatpush1.msra.mxu0 0.0
        %2687 = vmatprep.subr.mxu0 0.0
        %2688 = vmatpush1.msra.mxu0 0.0
        %2689 = vmatprep.subr.mxu0 0.0
        %2690 = vmatpush1.msra.mxu0 0.0
        %2691 = vmatprep.subr.mxu0 0.0
        %2692 = vmatpush1.msra.mxu0 0.0
        %2693 = vmatprep.subr.mxu0 0.0
        %2694 = vmatpush1.msra.mxu0 0.0
        %2695 = vmatprep.subr.mxu0 0.0
        %2696 = vmatpush1.msra.mxu0 0.0
        %2697 = vmatprep.subr.mxu0 0.0
        %2698 = vmatpush1.msra.mxu0 0.0
        %2699 = vmatprep.subr.mxu0 0.0
        %2700 = vmatpush1.msra.mxu0 0.0
        %2701 = vmatprep.subr.mxu0 0.0
        %2702 = vmatpush1.msra.mxu0 0.0
        %2703 = vmatprep.subr.mxu0 0.0
        %2704 = vmatpush1.msra.mxu0 0.0
        %2705 = vmatprep.subr.mxu0 0.0
        %2706 = vmatpush1.msra.mxu0 0.0
        %2707 = vmatprep.subr.mxu0 0.0
        %2708 = vmatpush1.msra.mxu0 0.0
        %2709 = vmatprep.subr.mxu0 0.0
        %2710 = vmatpush1.msra.mxu0 0.0
        %2711 = vmatprep.subr.mxu0 0.0
        %2712 = vmatpush1.msra.mxu0 0.0
        %2713 = vmatprep.subr.mxu0 0.0
        %2714 = vmatpush1.msra.mxu0 0.0
        %2715 = vmatprep.subr.mxu0 0.0
        %2716 = vmatpush1.msra.mxu0 0.0
        %2717 = vmatprep.subr.mxu0 0.0
        %2718 = vmatpush1.msra.mxu0 0.0
        %2719 = vmatprep.subr.mxu0 0.0
        %2720 = vmatpush1.msra.mxu0 0.0
        %2721 = vmatprep.subr.mxu0 0.0
        %2722 = vmatpush1.msra.mxu0 0.0
        %2723 = vmatprep.subr.mxu0 0.0
        %2724 = vmatpush1.msra.mxu0 0.0
        %2725 = vmatprep.subr.mxu0 0.0
        %2726 = vmatpush1.msra.mxu0 0.0
        %2727 = vmatprep.subr.mxu0 0.0
        %2728 = vmatpush1.msra.mxu0 0.0
        %2729 = vmatprep.subr.mxu0 0.0
        %2730 = vmatpush1.msra.mxu0 0.0
        %2731 = vmatprep.subr.mxu0 0.0
        %2732 = vmatpush1.msra.mxu0 0.0
        %2733 = vmatprep.subr.mxu0 0.0
        %2734 = vmatpush1.msra.mxu0 0.0
        %2735 = vmatprep.subr.mxu0 0.0
        %2736 = vmatpush1.msra.mxu0 0.0
        %2737 = vmatprep.mubr.f32.mxu0 0.0
        %2738 = vmatmul.mubr.f32.gmra.mrb[0].mxu0 %v2662
        %v2739 = vpop.f32.mrb[0].mxu0
        %v2740 = vadd.f32 0.0, %v2739
        %v2741 = vpop.f32.mrb[0].mxu0
        %2742 = vmatprep.mubr.f32.mxu0 0.0
        %2743 = vmatmul.mubr.f32.gmra.mrb[0].mxu0 %v2665
        %v2744 = vpop.f32.mrb[0].mxu0
        %v2745 = vadd.f32 0.0, %v2744
        %v2746 = vpop.f32.mrb[0].mxu0
        %2747 = vmatprep.mubr.f32.mxu0 0.0
        %2748 = vmatmul.mubr.f32.gmra.mrb[0].mxu0 %v2668
        %v2749 = vpop.f32.mrb[0].mxu0
        %v2750 = vadd.f32 0.0, %v2749
        %v2751 = vpop.f32.mrb[0].mxu0
        %2752 = vmatprep.mubr.f32.mxu0 0.0
        %2753 = vmatmul.mubr.f32.gmra.mrb[0].mxu0 %v2671
        %v2754 = vpop.f32.mrb[0].mxu0
        %v2755 = vadd.f32 0.0, %v2754
        %v2756 = vpop.f32.mrb[0].mxu0
        %2757 = vdwg.mxu0
        %v2758 = vmul.f32 %v2151, 0.25
        %v2759 = vmul.f32 %v2157, 0.25
        %v2760 = vmul.f32 %v2163, 0.25
        %v2761 = vmul.f32 %v2169, 0.25
        %2762 = vmatprep.subr.mxu0 0.0
        %2763 = vmatpush1.xpose.msra.mxu0 %v2238
        %2764 = vmatprep.subr.mxu0 0.0
        %2765 = vmatpush1.xpose.msra.mxu0 %v2244
        %2766 = vmatprep.subr.mxu0 0.0
        %2767 = vmatpush1.xpose.msra.mxu0 %v2250
        %2768 = vmatprep.subr.mxu0 0.0
        %2769 = vmatpush1.xpose.msra.mxu0 %v2256
        %2770 = vmatprep.subr.mxu0 0.0
        %2771 = vmatpush1.xpose.msra.mxu0 0.0
        %2772 = vmatprep.subr.mxu0 0.0
        %2773 = vmatpush1.xpose.msra.mxu0 0.0
        %2774 = vmatprep.subr.mxu0 0.0
        %2775 = vmatpush1.xpose.msra.mxu0 0.0
        %2776 = vmatprep.subr.mxu0 0.0
        %2777 = vmatpush1.xpose.msra.mxu0 0.0
        %2778 = vmatprep.subr.mxu0 0.0
        %2779 = vmatpush1.xpose.msra.mxu0 0.0
        %2780 = vmatprep.subr.mxu0 0.0
        %2781 = vmatpush1.xpose.msra.mxu0 0.0
        %2782 = vmatprep.subr.mxu0 0.0
        %2783 = vmatpush1.xpose.msra.mxu0 0.0
        %2784 = vmatprep.subr.mxu0 0.0
        %2785 = vmatpush1.xpose.msra.mxu0 0.0
        %2786 = vmatprep.subr.mxu0 0.0
        %2787 = vmatpush1.xpose.msra.mxu0 0.0
        %2788 = vmatprep.subr.mxu0 0.0
        %2789 = vmatpush1.xpose.msra.mxu0 0.0
        %2790 = vmatprep.subr.mxu0 0.0
        %2791 = vmatpush1.xpose.msra.mxu0 0.0
        %2792 = vmatprep.subr.mxu0 0.0
        %2793 = vmatpush1.xpose.msra.mxu0 0.0
        %2794 = vmatprep.subr.mxu0 0.0
        %2795 = vmatpush1.xpose.msra.mxu0 0.0
        %2796 = vmatprep.subr.mxu0 0.0
        %2797 = vmatpush1.xpose.msra.mxu0 0.0
        %2798 = vmatprep.subr.mxu0 0.0
        %2799 = vmatpush1.xpose.msra.mxu0 0.0
        %2800 = vmatprep.subr.mxu0 0.0
        %2801 = vmatpush1.xpose.msra.mxu0 0.0
        %2802 = vmatprep.subr.mxu0 0.0
        %2803 = vmatpush1.xpose.msra.mxu0 0.0
        %2804 = vmatprep.subr.mxu0 0.0
        %2805 = vmatpush1.xpose.msra.mxu0 0.0
        %2806 = vmatprep.subr.mxu0 0.0
        %2807 = vmatpush1.xpose.msra.mxu0 0.0
        %2808 = vmatprep.subr.mxu0 0.0
        %2809 = vmatpush1.xpose.msra.mxu0 0.0
        %2810 = vmatprep.subr.mxu0 0.0
        %2811 = vmatpush1.xpose.msra.mxu0 0.0
        %2812 = vmatprep.subr.mxu0 0.0
        %2813 = vmatpush1.xpose.msra.mxu0 0.0
        %2814 = vmatprep.subr.mxu0 0.0
        %2815 = vmatpush1.xpose.msra.mxu0 0.0
        %2816 = vmatprep.subr.mxu0 0.0
        %2817 = vmatpush1.xpose.msra.mxu0 0.0
        %2818 = vmatprep.subr.mxu0 0.0
        %2819 = vmatpush1.xpose.msra.mxu0 0.0
        %2820 = vmatprep.subr.mxu0 0.0
        %2821 = vmatpush1.xpose.msra.mxu0 0.0
        %2822 = vmatprep.subr.mxu0 0.0
        %2823 = vmatpush1.xpose.msra.mxu0 0.0
        %2824 = vmatprep.subr.mxu0 0.0
        %2825 = vmatpush1.xpose.msra.mxu0 0.0
        %2826 = vmatprep.mubr.f32.mxu0 0.0
        %2827 = vmatmul.mubr.f32.gmra.mrb[0].mxu0 %v2758
        %v2828 = vpop.f32.mrb[0].mxu0
        %v2829 = vadd.f32 0.0, %v2828
        %v2830 = vpop.f32.mrb[0].mxu0
        %2831 = vmatprep.mubr.f32.mxu0 0.0
        %2832 = vmatmul.mubr.f32.gmra.mrb[0].mxu0 %v2759
        %v2833 = vpop.f32.mrb[0].mxu0
        %v2834 = vadd.f32 0.0, %v2833
        %v2835 = vpop.f32.mrb[0].mxu0
        %2836 = vmatprep.mubr.f32.mxu0 0.0
        %2837 = vmatmul.mubr.f32.gmra.mrb[0].mxu0 %v2760
        %v2838 = vpop.f32.mrb[0].mxu0
        %v2839 = vadd.f32 0.0, %v2838
        %v2840 = vpop.f32.mrb[0].mxu0
        %2841 = vmatprep.mubr.f32.mxu0 0.0
        %2842 = vmatmul.mubr.f32.gmra.mrb[0].mxu0 %v2761
        %v2843 = vpop.f32.mrb[0].mxu0
        %v2844 = vadd.f32 0.0, %v2843
        %v2845 = vpop.f32.mrb[0].mxu0
        %2846 = vdwg.mxu0
        %v2847 = vsel %vm2616, %v2829, -inf
        %2848 = vmax.xlane.f32.xlu0 %v2847
        %v2849 = vpop.xlane.xlu0 %2848
        %v2850 = vsel %vm2616, %v2834, -inf
        %2851 = vmax.xlane.f32.xlu0 %v2850
        %v2852 = vpop.xlane.xlu0 %2851
        %v2853 = vsel %vm2616, %v2839, -inf
        %2854 = vmax.xlane.f32.xlu0 %v2853
        %v2855 = vpop.xlane.xlu0 %2854
        %v2856 = vsel %vm2616, %v2844, -inf
        %2857 = vmax.xlane.f32.xlu0 %v2856
        %v2858 = vpop.xlane.xlu0 %2857
        %v2859 = vsub.f32 %v2829, %v2849
        %v2860 = vsub.f32 %v2834, %v2852
        %v2861 = vsub.f32 %v2839, %v2855
        %v2862 = vsub.f32 %v2844, %v2858
        %v2863 = vmul.f32 %v2859, 1.442695
        %v2864 = vpow.pop %v2863
        %v2865 = vmul.f32 %v2860, 1.442695
        %v2866 = vpow.pop %v2865
        %v2867 = vmul.f32 %v2861, 1.442695
        %v2868 = vpow.pop %v2867
        %v2869 = vmul.f32 %v2862, 1.442695
        %v2870 = vpow.pop %v2869
        %v2871 = vsel %vm2616, %v2864, 0.0
        %2872 = vadd.xlane.f32.xlu0 %v2871
        %v2873 = vpop.xlane.xlu0 %2872
        %v2874 = vsel %vm2616, %v2866, 0.0
        %2875 = vadd.xlane.f32.xlu0 %v2874
        %v2876 = vpop.xlane.xlu0 %2875
        %v2877 = vsel %vm2616, %v2868, 0.0
        %2878 = vadd.xlane.f32.xlu0 %v2877
        %v2879 = vpop.xlane.xlu0 %2878
        %v2880 = vsel %vm2616, %v2870, 0.0
        %2881 = vadd.xlane.f32.xlu0 %v2880
        %v2882 = vpop.xlane.xlu0 %2881
        %v2883 = vrcp.pop %v2873
        %v2884 = vrcp.pop %v2876
        %v2885 = vrcp.pop %v2879
        %v2886 = vrcp.pop %v2882
        %v2887 = vmul.f32 %v2864, %v2883
        %v2888 = vmul.f32 %v2866, %v2884
        %v2889 = vmul.f32 %v2868, %v2885
        %v2890 = vmul.f32 %v2870, %v2886
        %v2892 = vsel %vm2616, %v2887, 0
        %v2895 = vsel %vm2616, %v2888, 0
        %v2898 = vsel %vm2616, %v2889, 0
        %v2901 = vsel %vm2616, %v2890, 0
        %2903 = vmatprep.subr.mxu0 0.0
        %2904 = vmatpush1.msra.mxu0 %v2240
        %2905 = vmatprep.subr.mxu0 0.0
        %2906 = vmatpush1.msra.mxu0 %v2246
        %2907 = vmatprep.subr.mxu0 0.0
        %2908 = vmatpush1.msra.mxu0 %v2252
        %2909 = vmatprep.subr.mxu0 0.0
        %2910 = vmatpush1.msra.mxu0 %v2258
        %2911 = vmatprep.subr.mxu0 0.0
        %2912 = vmatpush1.msra.mxu0 0.0
        %2913 = vmatprep.subr.mxu0 0.0
        %2914 = vmatpush1.msra.mxu0 0.0
        %2915 = vmatprep.subr.mxu0 0.0
        %2916 = vmatpush1.msra.mxu0 0.0
        %2917 = vmatprep.subr.mxu0 0.0
        %2918 = vmatpush1.msra.mxu0 0.0
        %2919 = vmatprep.subr.mxu0 0.0
        %2920 = vmatpush1.msra.mxu0 0.0
        %2921 = vmatprep.subr.mxu0 0.0
        %2922 = vmatpush1.msra.mxu0 0.0
        %2923 = vmatprep.subr.mxu0 0.0
        %2924 = vmatpush1.msra.mxu0 0.0
        %2925 = vmatprep.subr.mxu0 0.0
        %2926 = vmatpush1.msra.mxu0 0.0
        %2927 = vmatprep.subr.mxu0 0.0
        %2928 = vmatpush1.msra.mxu0 0.0
        %2929 = vmatprep.subr.mxu0 0.0
        %2930 = vmatpush1.msra.mxu0 0.0
        %2931 = vmatprep.subr.mxu0 0.0
        %2932 = vmatpush1.msra.mxu0 0.0
        %2933 = vmatprep.subr.mxu0 0.0
        %2934 = vmatpush1.msra.mxu0 0.0
        %2935 = vmatprep.subr.mxu0 0.0
        %2936 = vmatpush1.msra.mxu0 0.0
        %2937 = vmatprep.subr.mxu0 0.0
        %2938 = vmatpush1.msra.mxu0 0.0
        %2939 = vmatprep.subr.mxu0 0.0
        %2940 = vmatpush1.msra.mxu0 0.0
        %2941 = vmatprep.subr.mxu0 0.0
        %2942 = vmatpush1.msra.mxu0 0.0
        %2943 = vmatprep.subr.mxu0 0.0
        %2944 = vmatpush1.msra.mxu0 0.0
        %2945 = vmatprep.subr.mxu0 0.0
        %2946 = vmatpush1.msra.mxu0 0.0
        %2947 = vmatprep.subr.mxu0 0.0
        %2948 = vmatpush1.msra.mxu0 0.0
        %2949 = vmatprep.subr.mxu0 0.0
        %2950 = vmatpush1.msra.mxu0 0.0
        %2951 = vmatprep.subr.mxu0 0.0
        %2952 = vmatpush1.msra.mxu0 0.0
        %2953 = vmatprep.subr.mxu0 0.0
        %2954 = vmatpush1.msra.mxu0 0.0
        %2955 = vmatprep.subr.mxu0 0.0
        %2956 = vmatpush1.msra.mxu0 0.0
        %2957 = vmatprep.subr.mxu0 0.0
        %2958 = vmatpush1.msra.mxu0 0.0
        %2959 = vmatprep.subr.mxu0 0.0
        %2960 = vmatpush1.msra.mxu0 0.0
        %2961 = vmatprep.subr.mxu0 0.0
        %2962 = vmatpush1.msra.mxu0 0.0
        %2963 = vmatprep.subr.mxu0 0.0
        %2964 = vmatpush1.msra.mxu0 0.0
        %2965 = vmatprep.subr.mxu0 0.0
        %2966 = vmatpush1.msra.mxu0 0.0
        %2967 = vmatprep.mubr.f32.mxu0 0.0
        %2968 = vmatmul.mubr.f32.gmra.mrb[0].mxu0 %v2892
        %v2969 = vpop.f32.mrb[0].mxu0
        %v2970 = vadd.f32 0.0, %v2969
        %v2971 = vpop.f32.mrb[0].mxu0
        %2972 = vmatprep.mubr.f32.mxu0 0.0
        %2973 = vmatmul.mubr.f32.gmra.mrb[0].mxu0 %v2895
        %v2974 = vpop.f32.mrb[0].mxu0
        %v2975 = vadd.f32 0.0, %v2974
        %v2976 = vpop.f32.mrb[0].mxu0
        %2977 = vmatprep.mubr.f32.mxu0 0.0
        %2978 = vmatmul.mubr.f32.gmra.mrb[0].mxu0 %v2898
        %v2979 = vpop.f32.mrb[0].mxu0
        %v2980 = vadd.f32 0.0, %v2979
        %v2981 = vpop.f32.mrb[0].mxu0
        %2982 = vmatprep.mubr.f32.mxu0 0.0
        %2983 = vmatmul.mubr.f32.gmra.mrb[0].mxu0 %v2901
        %v2984 = vpop.f32.mrb[0].mxu0
        %v2985 = vadd.f32 0.0, %v2984
        %v2986 = vpop.f32.mrb[0].mxu0
        %2987 = vdwg.mxu0
        %v2988 = vmul.f32 %v2327, 0.25
        %v2989 = vmul.f32 %v2333, 0.25
        %v2990 = vmul.f32 %v2339, 0.25
        %v2991 = vmul.f32 %v2345, 0.25
        %2992 = vmatprep.subr.mxu0 0.0
        %2993 = vmatpush1.xpose.msra.mxu0 %v2329
        %2994 = vmatprep.subr.mxu0 0.0
        %2995 = vmatpush1.xpose.msra.mxu0 %v2335
        %2996 = vmatprep.subr.mxu0 0.0
        %2997 = vmatpush1.xpose.msra.mxu0 %v2341
        %2998 = vmatprep.subr.mxu0 0.0
        %2999 = vmatpush1.xpose.msra.mxu0 %v2347
        %3000 = vmatprep.subr.mxu0 0.0
        %3001 = vmatpush1.xpose.msra.mxu0 0.0
        %3002 = vmatprep.subr.mxu0 0.0
        %3003 = vmatpush1.xpose.msra.mxu0 0.0
        %3004 = vmatprep.subr.mxu0 0.0
        %3005 = vmatpush1.xpose.msra.mxu0 0.0
        %3006 = vmatprep.subr.mxu0 0.0
        %3007 = vmatpush1.xpose.msra.mxu0 0.0
        %3008 = vmatprep.subr.mxu0 0.0
        %3009 = vmatpush1.xpose.msra.mxu0 0.0
        %3010 = vmatprep.subr.mxu0 0.0
        %3011 = vmatpush1.xpose.msra.mxu0 0.0
        %3012 = vmatprep.subr.mxu0 0.0
        %3013 = vmatpush1.xpose.msra.mxu0 0.0
        %3014 = vmatprep.subr.mxu0 0.0
        %3015 = vmatpush1.xpose.msra.mxu0 0.0
        %3016 = vmatprep.subr.mxu0 0.0
        %3017 = vmatpush1.xpose.msra.mxu0 0.0
        %3018 = vmatprep.subr.mxu0 0.0
        %3019 = vmatpush1.xpose.msra.mxu0 0.0
        %3020 = vmatprep.subr.mxu0 0.0
        %3021 = vmatpush1.xpose.msra.mxu0 0.0
        %3022 = vmatprep.subr.mxu0 0.0
        %3023 = vmatpush1.xpose.msra.mxu0 0.0
        %3024 = vmatprep.subr.mxu0 0.0
        %3025 = vmatpush1.xpose.msra.mxu0 0.0
        %3026 = vmatprep.subr.mxu0 0.0
        %3027 = vmatpush1.xpose.msra.mxu0 0.0
        %3028 = vmatprep.subr.mxu0 0.0
        %3029 = vmatpush1.xpose.msra.mxu0 0.0
        %3030 = vmatprep.subr.mxu0 0.0
        %3031 = vmatpush1.xpose.msra.mxu0 0.0
        %3032 = vmatprep.subr.mxu0 0.0
        %3033 = vmatpush1.xpose.msra.mxu0 0.0
        %3034 = vmatprep.subr.mxu0 0.0
        %3035 = vmatpush1.xpose.msra.mxu0 0.0
        %3036 = vmatprep.subr.mxu0 0.0
        %3037 = vmatpush1.xpose.msra.mxu0 0.0
        %3038 = vmatprep.subr.mxu0 0.0
        %3039 = vmatpush1.xpose.msra.mxu0 0.0
        %3040 = vmatprep.subr.mxu0 0.0
        %3041 = vmatpush1.xpose.msra.mxu0 0.0
        %3042 = vmatprep.subr.mxu0 0.0
        %3043 = vmatpush1.xpose.msra.mxu0 0.0
        %3044 = vmatprep.subr.mxu0 0.0
        %3045 = vmatpush1.xpose.msra.mxu0 0.0
        %3046 = vmatprep.subr.mxu0 0.0
        %3047 = vmatpush1.xpose.msra.mxu0 0.0
        %3048 = vmatprep.subr.mxu0 0.0
        %3049 = vmatpush1.xpose.msra.mxu0 0.0
        %3050 = vmatprep.subr.mxu0 0.0
        %3051 = vmatpush1.xpose.msra.mxu0 0.0
        %3052 = vmatprep.subr.mxu0 0.0
        %3053 = vmatpush1.xpose.msra.mxu0 0.0
        %3054 = vmatprep.subr.mxu0 0.0
        %3055 = vmatpush1.xpose.msra.mxu0 0.0
        %3056 = vmatprep.mubr.f32.mxu0 0.0
        %3057 = vmatmul.mubr.f32.gmra.mrb[0].mxu0 %v2988
        %v3058 = vpop.f32.mrb[0].mxu0
        %v3059 = vadd.f32 0.0, %v3058
        %v3060 = vpop.f32.mrb[0].mxu0
        %3061 = vmatprep.mubr.f32.mxu0 0.0
        %3062 = vmatmul.mubr.f32.gmra.mrb[0].mxu0 %v2989
        %v3063 = vpop.f32.mrb[0].mxu0
        %v3064 = vadd.f32 0.0, %v3063
        %v3065 = vpop.f32.mrb[0].mxu0
        %3066 = vmatprep.mubr.f32.mxu0 0.0
        %3067 = vmatmul.mubr.f32.gmra.mrb[0].mxu0 %v2990
        %v3068 = vpop.f32.mrb[0].mxu0
        %v3069 = vadd.f32 0.0, %v3068
        %v3070 = vpop.f32.mrb[0].mxu0
        %3071 = vmatprep.mubr.f32.mxu0 0.0
        %3072 = vmatmul.mubr.f32.gmra.mrb[0].mxu0 %v2991
        %v3073 = vpop.f32.mrb[0].mxu0
        %v3074 = vadd.f32 0.0, %v3073
        %v3075 = vpop.f32.mrb[0].mxu0
        %3076 = vdwg.mxu0
        %v3077 = vsel %vm2616, %v3059, -inf
        %3078 = vmax.xlane.f32.xlu0 %v3077
        %v3079 = vpop.xlane.xlu0 %3078
        %v3080 = vsel %vm2616, %v3064, -inf
        %3081 = vmax.xlane.f32.xlu0 %v3080
        %v3082 = vpop.xlane.xlu0 %3081
        %v3083 = vsel %vm2616, %v3069, -inf
        %3084 = vmax.xlane.f32.xlu0 %v3083
        %v3085 = vpop.xlane.xlu0 %3084
        %v3086 = vsel %vm2616, %v3074, -inf
        %3087 = vmax.xlane.f32.xlu0 %v3086
        %v3088 = vpop.xlane.xlu0 %3087
        %v3089 = vsub.f32 %v3059, %v3079
        %v3090 = vsub.f32 %v3064, %v3082
        %v3091 = vsub.f32 %v3069, %v3085
        %v3092 = vsub.f32 %v3074, %v3088
        %v3093 = vmul.f32 %v3089, 1.442695
        %v3094 = vpow.pop %v3093
        %v3095 = vmul.f32 %v3090, 1.442695
        %v3096 = vpow.pop %v3095
        %v3097 = vmul.f32 %v3091, 1.442695
        %v3098 = vpow.pop %v3097
        %v3099 = vmul.f32 %v3092, 1.442695
        %v3100 = vpow.pop %v3099
        %v3101 = vsel %vm2616, %v3094, 0.0
        %3102 = vadd.xlane.f32.xlu0 %v3101
        %v3103 = vpop.xlane.xlu0 %3102
        %v3104 = vsel %vm2616, %v3096, 0.0
        %3105 = vadd.xlane.f32.xlu0 %v3104
        %v3106 = vpop.xlane.xlu0 %3105
        %v3107 = vsel %vm2616, %v3098, 0.0
        %3108 = vadd.xlane.f32.xlu0 %v3107
        %v3109 = vpop.xlane.xlu0 %3108
        %v3110 = vsel %vm2616, %v3100, 0.0
        %3111 = vadd.xlane.f32.xlu0 %v3110
        %v3112 = vpop.xlane.xlu0 %3111
        %v3113 = vrcp.pop %v3103
        %v3114 = vrcp.pop %v3106
        %v3115 = vrcp.pop %v3109
        %v3116 = vrcp.pop %v3112
        %v3117 = vmul.f32 %v3094, %v3113
        %v3118 = vmul.f32 %v3096, %v3114
        %v3119 = vmul.f32 %v3098, %v3115
        %v3120 = vmul.f32 %v3100, %v3116
        %v3122 = vsel %vm2616, %v3117, 0
        %v3125 = vsel %vm2616, %v3118, 0
        %v3128 = vsel %vm2616, %v3119, 0
        %v3131 = vsel %vm2616, %v3120, 0
        %3133 = vmatprep.subr.mxu0 0.0
        %3134 = vmatpush1.msra.mxu0 %v2416
        %3135 = vmatprep.subr.mxu0 0.0
        %3136 = vmatpush1.msra.mxu0 %v2422
        %3137 = vmatprep.subr.mxu0 0.0
        %3138 = vmatpush1.msra.mxu0 %v2428
        %3139 = vmatprep.subr.mxu0 0.0
        %3140 = vmatpush1.msra.mxu0 %v2434
        %3141 = vmatprep.subr.mxu0 0.0
        %3142 = vmatpush1.msra.mxu0 0.0
        %3143 = vmatprep.subr.mxu0 0.0
        %3144 = vmatpush1.msra.mxu0 0.0
        %3145 = vmatprep.subr.mxu0 0.0
        %3146 = vmatpush1.msra.mxu0 0.0
        %3147 = vmatprep.subr.mxu0 0.0
        %3148 = vmatpush1.msra.mxu0 0.0
        %3149 = vmatprep.subr.mxu0 0.0
        %3150 = vmatpush1.msra.mxu0 0.0
        %3151 = vmatprep.subr.mxu0 0.0
        %3152 = vmatpush1.msra.mxu0 0.0
        %3153 = vmatprep.subr.mxu0 0.0
        %3154 = vmatpush1.msra.mxu0 0.0
        %3155 = vmatprep.subr.mxu0 0.0
        %3156 = vmatpush1.msra.mxu0 0.0
        %3157 = vmatprep.subr.mxu0 0.0
        %3158 = vmatpush1.msra.mxu0 0.0
        %3159 = vmatprep.subr.mxu0 0.0
        %3160 = vmatpush1.msra.mxu0 0.0
        %3161 = vmatprep.subr.mxu0 0.0
        %3162 = vmatpush1.msra.mxu0 0.0
        %3163 = vmatprep.subr.mxu0 0.0
        %3164 = vmatpush1.msra.mxu0 0.0
        %3165 = vmatprep.subr.mxu0 0.0
        %3166 = vmatpush1.msra.mxu0 0.0
        %3167 = vmatprep.subr.mxu0 0.0
        %3168 = vmatpush1.msra.mxu0 0.0
        %3169 = vmatprep.subr.mxu0 0.0
        %3170 = vmatpush1.msra.mxu0 0.0
        %3171 = vmatprep.subr.mxu0 0.0
        %3172 = vmatpush1.msra.mxu0 0.0
        %3173 = vmatprep.subr.mxu0 0.0
        %3174 = vmatpush1.msra.mxu0 0.0
        %3175 = vmatprep.subr.mxu0 0.0
        %3176 = vmatpush1.msra.mxu0 0.0
        %3177 = vmatprep.subr.mxu0 0.0
        %3178 = vmatpush1.msra.mxu0 0.0
        %3179 = vmatprep.subr.mxu0 0.0
        %3180 = vmatpush1.msra.mxu0 0.0
        %3181 = vmatprep.subr.mxu0 0.0
        %3182 = vmatpush1.msra.mxu0 0.0
        %3183 = vmatprep.subr.mxu0 0.0
        %3184 = vmatpush1.msra.mxu0 0.0
        %3185 = vmatprep.subr.mxu0 0.0
        %3186 = vmatpush1.msra.mxu0 0.0
        %3187 = vmatprep.subr.mxu0 0.0
        %3188 = vmatpush1.msra.mxu0 0.0
        %3189 = vmatprep.subr.mxu0 0.0
        %3190 = vmatpush1.msra.mxu0 0.0
        %3191 = vmatprep.subr.mxu0 0.0
        %3192 = vmatpush1.msra.mxu0 0.0
        %3193 = vmatprep.subr.mxu0 0.0
        %3194 = vmatpush1.msra.mxu0 0.0
        %3195 = vmatprep.subr.mxu0 0.0
        %3196 = vmatpush1.msra.mxu0 0.0
        %3197 = vmatprep.mubr.f32.mxu0 0.0
        %3198 = vmatmul.mubr.f32.gmra.mrb[0].mxu0 %v3122
        %v3199 = vpop.f32.mrb[0].mxu0
        %v3200 = vadd.f32 0.0, %v3199
        %v3201 = vpop.f32.mrb[0].mxu0
        %3202 = vmatprep.mubr.f32.mxu0 0.0
        %3203 = vmatmul.mubr.f32.gmra.mrb[0].mxu0 %v3125
        %v3204 = vpop.f32.mrb[0].mxu0
        %v3205 = vadd.f32 0.0, %v3204
        %v3206 = vpop.f32.mrb[0].mxu0
        %3207 = vmatprep.mubr.f32.mxu0 0.0
        %3208 = vmatmul.mubr.f32.gmra.mrb[0].mxu0 %v3128
        %v3209 = vpop.f32.mrb[0].mxu0
        %v3210 = vadd.f32 0.0, %v3209
        %v3211 = vpop.f32.mrb[0].mxu0
        %3212 = vmatprep.mubr.f32.mxu0 0.0
        %3213 = vmatmul.mubr.f32.gmra.mrb[0].mxu0 %v3131
        %v3214 = vpop.f32.mrb[0].mxu0
        %v3215 = vadd.f32 0.0, %v3214
        %v3216 = vpop.f32.mrb[0].mxu0
        %3217 = vdwg.mxu0
        %v3218 = vmul.f32 %v2418, 0.25
        %v3219 = vmul.f32 %v2424, 0.25
        %v3220 = vmul.f32 %v2430, 0.25
        %v3221 = vmul.f32 %v2436, 0.25
        %3222 = vmatprep.subr.mxu0 0.0
        %3223 = vmatpush1.xpose.msra.mxu0 %v2505
        %3224 = vmatprep.subr.mxu0 0.0
        %3225 = vmatpush1.xpose.msra.mxu0 %v2511
        %3226 = vmatprep.subr.mxu0 0.0
        %3227 = vmatpush1.xpose.msra.mxu0 %v2517
        %3228 = vmatprep.subr.mxu0 0.0
        %3229 = vmatpush1.xpose.msra.mxu0 %v2523
        %3230 = vmatprep.subr.mxu0 0.0
        %3231 = vmatpush1.xpose.msra.mxu0 0.0
        %3232 = vmatprep.subr.mxu0 0.0
        %3233 = vmatpush1.xpose.msra.mxu0 0.0
        %3234 = vmatprep.subr.mxu0 0.0
        %3235 = vmatpush1.xpose.msra.mxu0 0.0
        %3236 = vmatprep.subr.mxu0 0.0
        %3237 = vmatpush1.xpose.msra.mxu0 0.0
        %3238 = vmatprep.subr.mxu0 0.0
        %3239 = vmatpush1.xpose.msra.mxu0 0.0
        %3240 = vmatprep.subr.mxu0 0.0
        %3241 = vmatpush1.xpose.msra.mxu0 0.0
        %3242 = vmatprep.subr.mxu0 0.0
        %3243 = vmatpush1.xpose.msra.mxu0 0.0
        %3244 = vmatprep.subr.mxu0 0.0
        %3245 = vmatpush1.xpose.msra.mxu0 0.0
        %3246 = vmatprep.subr.mxu0 0.0
        %3247 = vmatpush1.xpose.msra.mxu0 0.0
        %3248 = vmatprep.subr.mxu0 0.0
        %3249 = vmatpush1.xpose.msra.mxu0 0.0
        %3250 = vmatprep.subr.mxu0 0.0
        %3251 = vmatpush1.xpose.msra.mxu0 0.0
        %3252 = vmatprep.subr.mxu0 0.0
        %3253 = vmatpush1.xpose.msra.mxu0 0.0
        %3254 = vmatprep.subr.mxu0 0.0
        %3255 = vmatpush1.xpose.msra.mxu0 0.0
        %3256 = vmatprep.subr.mxu0 0.0
        %3257 = vmatpush1.xpose.msra.mxu0 0.0
        %3258 = vmatprep.subr.mxu0 0.0
        %3259 = vmatpush1.xpose.msra.mxu0 0.0
        %3260 = vmatprep.subr.mxu0 0.0
        %3261 = vmatpush1.xpose.msra.mxu0 0.0
        %3262 = vmatprep.subr.mxu0 0.0
        %3263 = vmatpush1.xpose.msra.mxu0 0.0
        %3264 = vmatprep.subr.mxu0 0.0
        %3265 = vmatpush1.xpose.msra.mxu0 0.0
        %3266 = vmatprep.subr.mxu0 0.0
        %3267 = vmatpush1.xpose.msra.mxu0 0.0
        %3268 = vmatprep.subr.mxu0 0.0
        %3269 = vmatpush1.xpose.msra.mxu0 0.0
        %3270 = vmatprep.subr.mxu0 0.0
        %3271 = vmatpush1.xpose.msra.mxu0 0.0
        %3272 = vmatprep.subr.mxu0 0.0
        %3273 = vmatpush1.xpose.msra.mxu0 0.0
        %3274 = vmatprep.subr.mxu0 0.0
        %3275 = vmatpush1.xpose.msra.mxu0 0.0
        %3276 = vmatprep.subr.mxu0 0.0
        %3277 = vmatpush1.xpose.msra.mxu0 0.0
        %3278 = vmatprep.subr.mxu0 0.0
        %3279 = vmatpush1.xpose.msra.mxu0 0.0
        %3280 = vmatprep.subr.mxu0 0.0
        %3281 = vmatpush1.xpose.msra.mxu0 0.0
        %3282 = vmatprep.subr.mxu0 0.0
        %3283 = vmatpush1.xpose.msra.mxu0 0.0
        %3284 = vmatprep.subr.mxu0 0.0
        %3285 = vmatpush1.xpose.msra.mxu0 0.0
        %3286 = vmatprep.mubr.f32.mxu0 0.0
        %3287 = vmatmul.mubr.f32.gmra.mrb[0].mxu0 %v3218
        %v3288 = vpop.f32.mrb[0].mxu0
        %v3289 = vadd.f32 0.0, %v3288
        %v3290 = vpop.f32.mrb[0].mxu0
        %3291 = vmatprep.mubr.f32.mxu0 0.0
        %3292 = vmatmul.mubr.f32.gmra.mrb[0].mxu0 %v3219
        %v3293 = vpop.f32.mrb[0].mxu0
        %v3294 = vadd.f32 0.0, %v3293
        %v3295 = vpop.f32.mrb[0].mxu0
        %3296 = vmatprep.mubr.f32.mxu0 0.0
        %3297 = vmatmul.mubr.f32.gmra.mrb[0].mxu0 %v3220
        %v3298 = vpop.f32.mrb[0].mxu0
        %v3299 = vadd.f32 0.0, %v3298
        %v3300 = vpop.f32.mrb[0].mxu0
        %3301 = vmatprep.mubr.f32.mxu0 0.0
        %3302 = vmatmul.mubr.f32.gmra.mrb[0].mxu0 %v3221
        %v3303 = vpop.f32.mrb[0].mxu0
        %v3304 = vadd.f32 0.0, %v3303
        %v3305 = vpop.f32.mrb[0].mxu0
        %3306 = vdwg.mxu0
        %v3307 = vsel %vm2616, %v3289, -inf
        %3308 = vmax.xlane.f32.xlu0 %v3307
        %v3309 = vpop.xlane.xlu0 %3308
        %v3310 = vsel %vm2616, %v3294, -inf
        %3311 = vmax.xlane.f32.xlu0 %v3310
        %v3312 = vpop.xlane.xlu0 %3311
        %v3313 = vsel %vm2616, %v3299, -inf
        %3314 = vmax.xlane.f32.xlu0 %v3313
        %v3315 = vpop.xlane.xlu0 %3314
        %v3316 = vsel %vm2616, %v3304, -inf
        %3317 = vmax.xlane.f32.xlu0 %v3316
        %v3318 = vpop.xlane.xlu0 %3317
        %v3319 = vsub.f32 %v3289, %v3309
        %v3320 = vsub.f32 %v3294, %v3312
        %v3321 = vsub.f32 %v3299, %v3315
        %v3322 = vsub.f32 %v3304, %v3318
        %v3323 = vmul.f32 %v3319, 1.442695
        %v3324 = vpow.pop %v3323
        %v3325 = vmul.f32 %v3320, 1.442695
        %v3326 = vpow.pop %v3325
        %v3327 = vmul.f32 %v3321, 1.442695
        %v3328 = vpow.pop %v3327
        %v3329 = vmul.f32 %v3322, 1.442695
        %v3330 = vpow.pop %v3329
        %v3331 = vsel %vm2616, %v3324, 0.0
        %3332 = vadd.xlane.f32.xlu0 %v3331
        %v3333 = vpop.xlane.xlu0 %3332
        %v3334 = vsel %vm2616, %v3326, 0.0
        %3335 = vadd.xlane.f32.xlu0 %v3334
        %v3336 = vpop.xlane.xlu0 %3335
        %v3337 = vsel %vm2616, %v3328, 0.0
        %3338 = vadd.xlane.f32.xlu0 %v3337
        %v3339 = vpop.xlane.xlu0 %3338
        %v3340 = vsel %vm2616, %v3330, 0.0
        %3341 = vadd.xlane.f32.xlu0 %v3340
        %v3342 = vpop.xlane.xlu0 %3341
        %v3343 = vrcp.pop %v3333
        %v3344 = vrcp.pop %v3336
        %v3345 = vrcp.pop %v3339
        %v3346 = vrcp.pop %v3342
        %v3347 = vmul.f32 %v3324, %v3343
        %v3348 = vmul.f32 %v3326, %v3344
        %v3349 = vmul.f32 %v3328, %v3345
        %v3350 = vmul.f32 %v3330, %v3346
        %v3352 = vsel %vm2616, %v3347, 0
        %v3355 = vsel %vm2616, %v3348, 0
        %v3358 = vsel %vm2616, %v3349, 0
        %v3361 = vsel %vm2616, %v3350, 0
        %3363 = vmatprep.subr.mxu0 0.0
        %3364 = vmatpush1.msra.mxu0 %v2507
        %3365 = vmatprep.subr.mxu0 0.0
        %3366 = vmatpush1.msra.mxu0 %v2513
        %3367 = vmatprep.subr.mxu0 0.0
        %3368 = vmatpush1.msra.mxu0 %v2519
        %3369 = vmatprep.subr.mxu0 0.0
        %3370 = vmatpush1.msra.mxu0 %v2525
        %3371 = vmatprep.subr.mxu0 0.0
        %3372 = vmatpush1.msra.mxu0 0.0
        %3373 = vmatprep.subr.mxu0 0.0
        %3374 = vmatpush1.msra.mxu0 0.0
        %3375 = vmatprep.subr.mxu0 0.0
        %3376 = vmatpush1.msra.mxu0 0.0
        %3377 = vmatprep.subr.mxu0 0.0
        %3378 = vmatpush1.msra.mxu0 0.0
        %3379 = vmatprep.subr.mxu0 0.0
        %3380 = vmatpush1.msra.mxu0 0.0
        %3381 = vmatprep.subr.mxu0 0.0
        %3382 = vmatpush1.msra.mxu0 0.0
        %3383 = vmatprep.subr.mxu0 0.0
        %3384 = vmatpush1.msra.mxu0 0.0
        %3385 = vmatprep.subr.mxu0 0.0
        %3386 = vmatpush1.msra.mxu0 0.0
        %3387 = vmatprep.subr.mxu0 0.0
        %3388 = vmatpush1.msra.mxu0 0.0
        %3389 = vmatprep.subr.mxu0 0.0
        %3390 = vmatpush1.msra.mxu0 0.0
        %3391 = vmatprep.subr.mxu0 0.0
        %3392 = vmatpush1.msra.mxu0 0.0
        %3393 = vmatprep.subr.mxu0 0.0
        %3394 = vmatpush1.msra.mxu0 0.0
        %3395 = vmatprep.subr.mxu0 0.0
        %3396 = vmatpush1.msra.mxu0 0.0
        %3397 = vmatprep.subr.mxu0 0.0
        %3398 = vmatpush1.msra.mxu0 0.0
        %3399 = vmatprep.subr.mxu0 0.0
        %3400 = vmatpush1.msra.mxu0 0.0
        %3401 = vmatprep.subr.mxu0 0.0
        %3402 = vmatpush1.msra.mxu0 0.0
        %3403 = vmatprep.subr.mxu0 0.0
        %3404 = vmatpush1.msra.mxu0 0.0
        %3405 = vmatprep.subr.mxu0 0.0
        %3406 = vmatpush1.msra.mxu0 0.0
        %3407 = vmatprep.subr.mxu0 0.0
        %3408 = vmatpush1.msra.mxu0 0.0
        %3409 = vmatprep.subr.mxu0 0.0
        %3410 = vmatpush1.msra.mxu0 0.0
        %3411 = vmatprep.subr.mxu0 0.0
        %3412 = vmatpush1.msra.mxu0 0.0
        %3413 = vmatprep.subr.mxu0 0.0
        %3414 = vmatpush1.msra.mxu0 0.0
        %3415 = vmatprep.subr.mxu0 0.0
        %3416 = vmatpush1.msra.mxu0 0.0
        %3417 = vmatprep.subr.mxu0 0.0
        %3418 = vmatpush1.msra.mxu0 0.0
        %3419 = vmatprep.subr.mxu0 0.0
        %3420 = vmatpush1.msra.mxu0 0.0
        %3421 = vmatprep.subr.mxu0 0.0
        %3422 = vmatpush1.msra.mxu0 0.0
        %3423 = vmatprep.subr.mxu0 0.0
        %3424 = vmatpush1.msra.mxu0 0.0
        %3425 = vmatprep.subr.mxu0 0.0
        %3426 = vmatpush1.msra.mxu0 0.0
        %3427 = vmatprep.mubr.f32.mxu0 0.0
        %3428 = vmatmul.mubr.f32.gmra.mrb[0].mxu0 %v3352
        %v3429 = vpop.f32.mrb[0].mxu0
        %v3430 = vadd.f32 0.0, %v3429
        %v3431 = vpop.f32.mrb[0].mxu0
        %3432 = vmatprep.mubr.f32.mxu0 0.0
        %3433 = vmatmul.mubr.f32.gmra.mrb[0].mxu0 %v3355
        %v3434 = vpop.f32.mrb[0].mxu0
        %v3435 = vadd.f32 0.0, %v3434
        %v3436 = vpop.f32.mrb[0].mxu0
        %3437 = vmatprep.mubr.f32.mxu0 0.0
        %3438 = vmatmul.mubr.f32.gmra.mrb[0].mxu0 %v3358
        %v3439 = vpop.f32.mrb[0].mxu0
        %v3440 = vadd.f32 0.0, %v3439
        %v3441 = vpop.f32.mrb[0].mxu0
        %3442 = vmatprep.mubr.f32.mxu0 0.0
        %3443 = vmatmul.mubr.f32.gmra.mrb[0].mxu0 %v3361
        %v3444 = vpop.f32.mrb[0].mxu0
        %v3445 = vadd.f32 0.0, %v3444
        %v3446 = vpop.f32.mrb[0].mxu0
        %3447 = vdwg.mxu0
        %v3448 = vld [vmem:[%s1419] sm:$0xff]
        %v3449 = vld [vmem:[%s1419 + $0x8] sm:$0xff]
        %v3450 = vld [vmem:[%s1419 + $0x10] sm:$0xff]
        %v3451 = vld [vmem:[%s1419 + $0x18] sm:$0xff]
        %v3452 = vld [vmem:[%s1419 + $0x20] sm:$0xff]
        %v3453 = vld [vmem:[%s1419 + $0x28] sm:$0xff]
        %v3454 = vld [vmem:[%s1419 + $0x30] sm:$0xff]
        %v3455 = vld [vmem:[%s1419 + $0x38] sm:$0xff]
        %v3456 = vld [vmem:[%s1419 + $0x40] sm:$0xff]
        %v3457 = vld [vmem:[%s1419 + $0x48] sm:$0xff]
        %v3458 = vld [vmem:[%s1419 + $0x50] sm:$0xff]
        %v3459 = vld [vmem:[%s1419 + $0x58] sm:$0xff]
        %v3460 = vld [vmem:[%s1419 + $0x60] sm:$0xff]
        %v3461 = vld [vmem:[%s1419 + $0x68] sm:$0xff]
        %v3462 = vld [vmem:[%s1419 + $0x70] sm:$0xff]
        %v3463 = vld [vmem:[%s1419 + $0x78] sm:$0xff]
        %v3464 = vld [vmem:[%s1419 + $0x80] sm:$0xff]
        %v3465 = vld [vmem:[%s1419 + $0x88] sm:$0xff]
        %v3466 = vld [vmem:[%s1419 + $0x90] sm:$0xff]
        %v3467 = vld [vmem:[%s1419 + $0x98] sm:$0xff]
        %v3468 = vld [vmem:[%s1419 + $0xa0] sm:$0xff]
        %v3469 = vld [vmem:[%s1419 + $0xa8] sm:$0xff]
        %v3470 = vld [vmem:[%s1419 + $0xb0] sm:$0xff]
        %v3471 = vld [vmem:[%s1419 + $0xb8] sm:$0xff]
        %v3472 = vld [vmem:[%s1419 + $0xc0] sm:$0xff]
        %v3473 = vld [vmem:[%s1419 + $0xc8] sm:$0xff]
        %v3474 = vld [vmem:[%s1419 + $0xd0] sm:$0xff]
        %v3475 = vld [vmem:[%s1419 + $0xd8] sm:$0xff]
        %v3476 = vld [vmem:[%s1419 + $0xe0] sm:$0xff]
        %v3477 = vld [vmem:[%s1419 + $0xe8] sm:$0xff]
        %v3478 = vld [vmem:[%s1419 + $0xf0] sm:$0xff]
        %v3479 = vld [vmem:[%s1419 + $0xf8] sm:$0xff]
        %v3480 = vld [vmem:[%s1419 + $0x100] sm:$0xff]
        %v3481 = vld [vmem:[%s1419 + $0x108] sm:$0xff]
        %v3482 = vld [vmem:[%s1419 + $0x110] sm:$0xff]
        %v3483 = vld [vmem:[%s1419 + $0x118] sm:$0xff]
        %v3484 = vld [vmem:[%s1419 + $0x120] sm:$0xff]
        %v3485 = vld [vmem:[%s1419 + $0x128] sm:$0xff]
        %v3486 = vld [vmem:[%s1419 + $0x130] sm:$0xff]
        %v3487 = vld [vmem:[%s1419 + $0x138] sm:$0xff]
        %v3488 = vld [vmem:[%s1419 + $0x140] sm:$0xff]
        %v3489 = vld [vmem:[%s1419 + $0x148] sm:$0xff]
        %v3490 = vld [vmem:[%s1419 + $0x150] sm:$0xff]
        %v3491 = vld [vmem:[%s1419 + $0x158] sm:$0xff]
        %v3492 = vld [vmem:[%s1419 + $0x160] sm:$0xff]
        %v3493 = vld [vmem:[%s1419 + $0x168] sm:$0xff]
        %v3494 = vld [vmem:[%s1419 + $0x170] sm:$0xff]
        %v3495 = vld [vmem:[%s1419 + $0x178] sm:$0xff]
        %v3496 = vld [vmem:[%s1419 + $0x180] sm:$0xff]
        %v3497 = vld [vmem:[%s1419 + $0x188] sm:$0xff]
        %v3498 = vld [vmem:[%s1419 + $0x190] sm:$0xff]
        %v3499 = vld [vmem:[%s1419 + $0x198] sm:$0xff]
        %v3500 = vld [vmem:[%s1419 + $0x1a0] sm:$0xff]
        %v3501 = vld [vmem:[%s1419 + $0x1a8] sm:$0xff]
        %v3502 = vld [vmem:[%s1419 + $0x1b0] sm:$0xff]
        %v3503 = vld [vmem:[%s1419 + $0x1b8] sm:$0xff]
        %v3504 = vld [vmem:[%s1419 + $0x1c0] sm:$0xff]
        %v3505 = vld [vmem:[%s1419 + $0x1c8] sm:$0xff]
        %v3506 = vld [vmem:[%s1419 + $0x1d0] sm:$0xff]
        %v3507 = vld [vmem:[%s1419 + $0x1d8] sm:$0xff]
        %v3508 = vld [vmem:[%s1419 + $0x1e0] sm:$0xff]
        %v3509 = vld [vmem:[%s1419 + $0x1e8] sm:$0xff]
        %v3510 = vld [vmem:[%s1419 + $0x1f0] sm:$0xff]
        %v3511 = vld [vmem:[%s1419 + $0x1f8] sm:$0xff]
        %v3512 = vld [vmem:[%s1422] sm:$0x1]
        %v3514 = vlaneseq
        %v3515 = vshrl.u32 %v3514, 7
        %v3516 = vsub.s32 0, %v3515
        %v3517 = vrot.slane %v3512, %v3516
        %3519 = vmatprep.subr.mxu0 0.0
        %3520 = vmatpush1.msra.mxu0 %v3448
        %3521 = vmatprep.subr.mxu0 0.0
        %3522 = vmatpush1.msra.mxu0 %v3449
        %3523 = vmatprep.subr.mxu0 0.0
        %3524 = vmatpush1.msra.mxu0 %v3450
        %3525 = vmatprep.subr.mxu0 0.0
        %3526 = vmatpush1.msra.mxu0 %v3451
        %3527 = vmatprep.subr.mxu0 0.0
        %3528 = vmatpush1.msra.mxu0 %v3452
        %3529 = vmatprep.subr.mxu0 0.0
        %3530 = vmatpush1.msra.mxu0 %v3453
        %3531 = vmatprep.subr.mxu0 0.0
        %3532 = vmatpush1.msra.mxu0 %v3454
        %3533 = vmatprep.subr.mxu0 0.0
        %3534 = vmatpush1.msra.mxu0 %v3455
        %3535 = vmatprep.subr.mxu0 0.0
        %3536 = vmatpush1.msra.mxu0 %v3456
        %3537 = vmatprep.subr.mxu0 0.0
        %3538 = vmatpush1.msra.mxu0 %v3457
        %3539 = vmatprep.subr.mxu0 0.0
        %3540 = vmatpush1.msra.mxu0 %v3458
        %3541 = vmatprep.subr.mxu0 0.0
        %3542 = vmatpush1.msra.mxu0 %v3459
        %3543 = vmatprep.subr.mxu0 0.0
        %3544 = vmatpush1.msra.mxu0 %v3460
        %3545 = vmatprep.subr.mxu0 0.0
        %3546 = vmatpush1.msra.mxu0 %v3461
        %3547 = vmatprep.subr.mxu0 0.0
        %3548 = vmatpush1.msra.mxu0 %v3462
        %3549 = vmatprep.subr.mxu0 0.0
        %3550 = vmatpush1.msra.mxu0 %v3463
        %3551 = vmatprep.subr.mxu0 0.0
        %3552 = vmatpush1.msra.mxu0 %v3464
        %3553 = vmatprep.subr.mxu0 0.0
        %3554 = vmatpush1.msra.mxu0 %v3465
        %3555 = vmatprep.subr.mxu0 0.0
        %3556 = vmatpush1.msra.mxu0 %v3466
        %3557 = vmatprep.subr.mxu0 0.0
        %3558 = vmatpush1.msra.mxu0 %v3467
        %3559 = vmatprep.subr.mxu0 0.0
        %3560 = vmatpush1.msra.mxu0 %v3468
        %3561 = vmatprep.subr.mxu0 0.0
        %3562 = vmatpush1.msra.mxu0 %v3469
        %3563 = vmatprep.subr.mxu0 0.0
        %3564 = vmatpush1.msra.mxu0 %v3470
        %3565 = vmatprep.subr.mxu0 0.0
        %3566 = vmatpush1.msra.mxu0 %v3471
        %3567 = vmatprep.subr.mxu0 0.0
        %3568 = vmatpush1.msra.mxu0 %v3472
        %3569 = vmatprep.subr.mxu0 0.0
        %3570 = vmatpush1.msra.mxu0 %v3473
        %3571 = vmatprep.subr.mxu0 0.0
        %3572 = vmatpush1.msra.mxu0 %v3474
        %3573 = vmatprep.subr.mxu0 0.0
        %3574 = vmatpush1.msra.mxu0 %v3475
        %3575 = vmatprep.subr.mxu0 0.0
        %3576 = vmatpush1.msra.mxu0 %v3476
        %3577 = vmatprep.subr.mxu0 0.0
        %3578 = vmatpush1.msra.mxu0 %v3477
        %3579 = vmatprep.subr.mxu0 0.0
        %3580 = vmatpush1.msra.mxu0 %v3478
        %3581 = vmatprep.subr.mxu0 0.0
        %3582 = vmatpush1.msra.mxu0 %v3479
        %3583 = vmatprep.mubr.f32.mxu0 %v2970
        %3584 = vmatmul.mubr.f32.gmra.mrb[0].mxu0 %v2740
        %v3585 = vpop.f32.mrb[0].mxu0
        %v3586 = vadd.f32 %v3517, %v3585
        %v3587 = vpop.f32.mrb[0].mxu0
        %3588 = vmatprep.mubr.f32.mxu0 %v2975
        %3589 = vmatmul.mubr.f32.gmra.mrb[0].mxu0 %v2745
        %v3590 = vpop.f32.mrb[0].mxu0
        %v3591 = vadd.f32 %v3517, %v3590
        %v3592 = vpop.f32.mrb[0].mxu0
        %3593 = vmatprep.mubr.f32.mxu0 %v2980
        %3594 = vmatmul.mubr.f32.gmra.mrb[0].mxu0 %v2750
        %v3595 = vpop.f32.mrb[0].mxu0
        %v3596 = vadd.f32 %v3517, %v3595
        %v3597 = vpop.f32.mrb[0].mxu0
        %3598 = vmatprep.mubr.f32.mxu0 %v2985
        %3599 = vmatmul.mubr.f32.gmra.mrb[0].mxu0 %v2755
        %v3600 = vpop.f32.mrb[0].mxu0
        %v3601 = vadd.f32 %v3517, %v3600
        %v3602 = vpop.f32.mrb[0].mxu0
        %3603 = vdwg.mxu0
        %3604 = vmatprep.subr.mxu0 0.0
        %3605 = vmatpush1.msra.mxu0 %v3480
        %3606 = vmatprep.subr.mxu0 0.0
        %3607 = vmatpush1.msra.mxu0 %v3481
        %3608 = vmatprep.subr.mxu0 0.0
        %3609 = vmatpush1.msra.mxu0 %v3482
        %3610 = vmatprep.subr.mxu0 0.0
        %3611 = vmatpush1.msra.mxu0 %v3483
        %3612 = vmatprep.subr.mxu0 0.0
        %3613 = vmatpush1.msra.mxu0 %v3484
        %3614 = vmatprep.subr.mxu0 0.0
        %3615 = vmatpush1.msra.mxu0 %v3485
        %3616 = vmatprep.subr.mxu0 0.0
        %3617 = vmatpush1.msra.mxu0 %v3486
        %3618 = vmatprep.subr.mxu0 0.0
        %3619 = vmatpush1.msra.mxu0 %v3487
        %3620 = vmatprep.subr.mxu0 0.0
        %3621 = vmatpush1.msra.mxu0 %v3488
        %3622 = vmatprep.subr.mxu0 0.0
        %3623 = vmatpush1.msra.mxu0 %v3489
        %3624 = vmatprep.subr.mxu0 0.0
        %3625 = vmatpush1.msra.mxu0 %v3490
        %3626 = vmatprep.subr.mxu0 0.0
        %3627 = vmatpush1.msra.mxu0 %v3491
        %3628 = vmatprep.subr.mxu0 0.0
        %3629 = vmatpush1.msra.mxu0 %v3492
        %3630 = vmatprep.subr.mxu0 0.0
        %3631 = vmatpush1.msra.mxu0 %v3493
        %3632 = vmatprep.subr.mxu0 0.0
        %3633 = vmatpush1.msra.mxu0 %v3494
        %3634 = vmatprep.subr.mxu0 0.0
        %3635 = vmatpush1.msra.mxu0 %v3495
        %3636 = vmatprep.subr.mxu0 0.0
        %3637 = vmatpush1.msra.mxu0 %v3496
        %3638 = vmatprep.subr.mxu0 0.0
        %3639 = vmatpush1.msra.mxu0 %v3497
        %3640 = vmatprep.subr.mxu0 0.0
        %3641 = vmatpush1.msra.mxu0 %v3498
        %3642 = vmatprep.subr.mxu0 0.0
        %3643 = vmatpush1.msra.mxu0 %v3499
        %3644 = vmatprep.subr.mxu0 0.0
        %3645 = vmatpush1.msra.mxu0 %v3500
        %3646 = vmatprep.subr.mxu0 0.0
        %3647 = vmatpush1.msra.mxu0 %v3501
        %3648 = vmatprep.subr.mxu0 0.0
        %3649 = vmatpush1.msra.mxu0 %v3502
        %3650 = vmatprep.subr.mxu0 0.0
        %3651 = vmatpush1.msra.mxu0 %v3503
        %3652 = vmatprep.subr.mxu0 0.0
        %3653 = vmatpush1.msra.mxu0 %v3504
        %3654 = vmatprep.subr.mxu0 0.0
        %3655 = vmatpush1.msra.mxu0 %v3505
        %3656 = vmatprep.subr.mxu0 0.0
        %3657 = vmatpush1.msra.mxu0 %v3506
        %3658 = vmatprep.subr.mxu0 0.0
        %3659 = vmatpush1.msra.mxu0 %v3507
        %3660 = vmatprep.subr.mxu0 0.0
        %3661 = vmatpush1.msra.mxu0 %v3508
        %3662 = vmatprep.subr.mxu0 0.0
        %3663 = vmatpush1.msra.mxu0 %v3509
        %3664 = vmatprep.subr.mxu0 0.0
        %3665 = vmatpush1.msra.mxu0 %v3510
        %3666 = vmatprep.subr.mxu0 0.0
        %3667 = vmatpush1.msra.mxu0 %v3511
        %3668 = vmatprep.mubr.f32.mxu0 %v3430
        %3669 = vmatmul.mubr.f32.gmra.mrb[0].mxu0 %v3200
        %v3670 = vpop.f32.mrb[0].mxu0
        %v3671 = vadd.f32 %v3586, %v3670
        %v3672 = vpop.f32.mrb[0].mxu0
        %3673 = vmatprep.mubr.f32.mxu0 %v3435
        %3674 = vmatmul.mubr.f32.gmra.mrb[0].mxu0 %v3205
        %v3675 = vpop.f32.mrb[0].mxu0
        %v3676 = vadd.f32 %v3591, %v3675
        %v3677 = vpop.f32.mrb[0].mxu0
        %3678 = vmatprep.mubr.f32.mxu0 %v3440
        %3679 = vmatmul.mubr.f32.gmra.mrb[0].mxu0 %v3210
        %v3680 = vpop.f32.mrb[0].mxu0
        %v3681 = vadd.f32 %v3596, %v3680
        %v3682 = vpop.f32.mrb[0].mxu0
        %3683 = vmatprep.mubr.f32.mxu0 %v3445
        %3684 = vmatmul.mubr.f32.gmra.mrb[0].mxu0 %v3215
        %v3685 = vpop.f32.mrb[0].mxu0
        %v3686 = vadd.f32 %v3601, %v3685
        %v3687 = vpop.f32.mrb[0].mxu0
        %3688 = vdwg.mxu0
        %v3689 = vadd.f32 %v1816, %v3671
        %v3690 = vadd.f32 %v1817, %v3676
        %v3691 = vadd.f32 %v1818, %v3681
        %v3692 = vadd.f32 %v1819, %v3686
        %v3693 = vld [vmem:[%s1265] sm:$0x1]
        %v3694 = vld [vmem:[%s1425] sm:$0x1]
        %v3695 = vsel %vm1980, %v3689, 0.0
        %3696 = vadd.xlane.f32.xlu0 %v3695
        %v3697 = vpop.xlane.xlu0 %3696
        %v3698 = vsel %vm1980, %v3690, 0.0
        %3699 = vadd.xlane.f32.xlu0 %v3698
        %v3700 = vpop.xlane.xlu0 %3699
        %v3701 = vsel %vm1980, %v3691, 0.0
        %3702 = vadd.xlane.f32.xlu0 %v3701
        %v3703 = vpop.xlane.xlu0 %3702
        %v3704 = vsel %vm1980, %v3692, 0.0
        %3705 = vadd.xlane.f32.xlu0 %v3704
        %v3706 = vpop.xlane.xlu0 %3705
        %v3707 = vrcp.pop 64.0
        %v3708 = vmul.f32 %v3697, %v3707
        %v3709 = vmul.f32 %v3700, %v3707
        %v3710 = vmul.f32 %v3703, %v3707
        %v3711 = vmul.f32 %v3706, %v3707
        %v3712 = vsub.f32 %v3689, %v3708
        %v3713 = vsub.f32 %v3690, %v3709
        %v3714 = vsub.f32 %v3691, %v3710
        %v3715 = vsub.f32 %v3692, %v3711
        %v3716 = vmul.f32 %v3712, %v3712
        %v3717 = vmul.f32 %v3713, %v3713
        %v3718 = vmul.f32 %v3714, %v3714
        %v3719 = vmul.f32 %v3715, %v3715
        %v3720 = vsel %vm1980, %v3716, 0.0
        %3721 = vadd.xlane.f32.xlu0 %v3720
        %v3722 = vpop.xlane.xlu0 %3721
        %v3723 = vsel %vm1980, %v3717, 0.0
        %3724 = vadd.xlane.f32.xlu0 %v3723
        %v3725 = vpop.xlane.xlu0 %3724
        %v3726 = vsel %vm1980, %v3718, 0.0
        %3727 = vadd.xlane.f32.xlu0 %v3726
        %v3728 = vpop.xlane.xlu0 %3727
        %v3729 = vsel %vm1980, %v3719, 0.0
        %3730 = vadd.xlane.f32.xlu0 %v3729
        %v3731 = vpop.xlane.xlu0 %3730
        %v3732 = vmul.f32 %v3722, %v3707
        %v3733 = vmul.f32 %v3725, %v3707
        %v3734 = vmul.f32 %v3728, %v3707
        %v3735 = vmul.f32 %v3731, %v3707
        %v3736 = vadd.f32 %v3732, 1e-05
        %v3737 = vadd.f32 %v3733, 1e-05
        %v3738 = vadd.f32 %v3734, 1e-05
        %v3739 = vadd.f32 %v3735, 1e-05
        %v3740 = vrsqrt.pop %v3736
        %v3741 = vrsqrt.pop %v3737
        %v3742 = vrsqrt.pop %v3738
        %v3743 = vrsqrt.pop %v3739
        %v3744 = vmul.f32 %v3712, %v3740
        %v3745 = vmul.f32 %v3713, %v3741
        %v3746 = vmul.f32 %v3714, %v3742
        %v3747 = vmul.f32 %v3715, %v3743
        %v3749 = vlaneseq
        %v3750 = vshrl.u32 %v3749, 7
        %v3751 = vsub.s32 0, %v3750
        %v3752 = vrot.slane %v3693, %v3751
        %v3754 = vmul.f32 %v3744, %v3752
        %v3755 = vmul.f32 %v3745, %v3752
        %v3756 = vmul.f32 %v3746, %v3752
        %v3757 = vmul.f32 %v3747, %v3752
        %v3759 = vlaneseq
        %v3760 = vshrl.u32 %v3759, 7
        %v3761 = vsub.s32 0, %v3760
        %v3762 = vrot.slane %v3694, %v3761
        %v3764 = vadd.f32 %v3754, %v3762
        %v3765 = vadd.f32 %v3755, %v3762
        %v3766 = vadd.f32 %v3756, %v3762
        %v3767 = vadd.f32 %v3757, %v3762
        %v3768 = vld [vmem:[%s1430] sm:$0xff]
        %v3769 = vld [vmem:[%s1430 + $0x8] sm:$0xff]
        %v3770 = vld [vmem:[%s1430 + $0x10] sm:$0xff]
        %v3771 = vld [vmem:[%s1430 + $0x18] sm:$0xff]
        %v3772 = vld [vmem:[%s1430 + $0x20] sm:$0xff]
        %v3773 = vld [vmem:[%s1430 + $0x28] sm:$0xff]
        %v3774 = vld [vmem:[%s1430 + $0x30] sm:$0xff]
        %v3775 = vld [vmem:[%s1430 + $0x38] sm:$0xff]
        %v3776 = vld [vmem:[%s1433] sm:$0x1]
        %v3778 = vlaneseq
        %v3779 = vshrl.u32 %v3778, 7
        %v3780 = vsub.s32 0, %v3779
        %v3781 = vrot.slane %v3776, %v3780
        %v3784 = vsel %vm1980, %v3764, 0
        %v3787 = vsel %vm1980, %v3765, 0
        %v3790 = vsel %vm1980, %v3766, 0
        %v3793 = vsel %vm1980, %v3767, 0
        %3795 = vmatprep.subr.mxu0 0.0
        %3796 = vmatpush1.msra.mxu0 %v3768
        %3797 = vmatprep.subr.mxu0 0.0
        %3798 = vmatpush1.msra.mxu0 %v3769
        %3799 = vmatprep.subr.mxu0 0.0
        %3800 = vmatpush1.msra.mxu0 %v3770
        %3801 = vmatprep.subr.mxu0 0.0
        %3802 = vmatpush1.msra.mxu0 %v3771
        %3803 = vmatprep.subr.mxu0 0.0
        %3804 = vmatpush1.msra.mxu0 %v3772
        %3805 = vmatprep.subr.mxu0 0.0
        %3806 = vmatpush1.msra.mxu0 %v3773
        %3807 = vmatprep.subr.mxu0 0.0
        %3808 = vmatpush1.msra.mxu0 %v3774
        %3809 = vmatprep.subr.mxu0 0.0
        %3810 = vmatpush1.msra.mxu0 %v3775
        %3811 = vmatprep.subr.mxu0 0.0
        %3812 = vmatpush1.msra.mxu0 0.0
        %3813 = vmatprep.subr.mxu0 0.0
        %3814 = vmatpush1.msra.mxu0 0.0
        %3815 = vmatprep.subr.mxu0 0.0
        %3816 = vmatpush1.msra.mxu0 0.0
        %3817 = vmatprep.subr.mxu0 0.0
        %3818 = vmatpush1.msra.mxu0 0.0
        %3819 = vmatprep.subr.mxu0 0.0
        %3820 = vmatpush1.msra.mxu0 0.0
        %3821 = vmatprep.subr.mxu0 0.0
        %3822 = vmatpush1.msra.mxu0 0.0
        %3823 = vmatprep.subr.mxu0 0.0
        %3824 = vmatpush1.msra.mxu0 0.0
        %3825 = vmatprep.subr.mxu0 0.0
        %3826 = vmatpush1.msra.mxu0 0.0
        %3827 = vmatprep.subr.mxu0 0.0
        %3828 = vmatpush1.msra.mxu0 0.0
        %3829 = vmatprep.subr.mxu0 0.0
        %3830 = vmatpush1.msra.mxu0 0.0
        %3831 = vmatprep.subr.mxu0 0.0
        %3832 = vmatpush1.msra.mxu0 0.0
        %3833 = vmatprep.subr.mxu0 0.0
        %3834 = vmatpush1.msra.mxu0 0.0
        %3835 = vmatprep.subr.mxu0 0.0
        %3836 = vmatpush1.msra.mxu0 0.0
        %3837 = vmatprep.subr.mxu0 0.0
        %3838 = vmatpush1.msra.mxu0 0.0
        %3839 = vmatprep.subr.mxu0 0.0
        %3840 = vmatpush1.msra.mxu0 0.0
        %3841 = vmatprep.subr.mxu0 0.0
        %3842 = vmatpush1.msra.mxu0 0.0
        %3843 = vmatprep.subr.mxu0 0.0
        %3844 = vmatpush1.msra.mxu0 0.0
        %3845 = vmatprep.subr.mxu0 0.0
        %3846 = vmatpush1.msra.mxu0 0.0
        %3847 = vmatprep.subr.mxu0 0.0
        %3848 = vmatpush1.msra.mxu0 0.0
        %3849 = vmatprep.subr.mxu0 0.0
        %3850 = vmatpush1.msra.mxu0 0.0
        %3851 = vmatprep.subr.mxu0 0.0
        %3852 = vmatpush1.msra.mxu0 0.0
        %3853 = vmatprep.subr.mxu0 0.0
        %3854 = vmatpush1.msra.mxu0 0.0
        %3855 = vmatprep.subr.mxu0 0.0
        %3856 = vmatpush1.msra.mxu0 0.0
        %3857 = vmatprep.subr.mxu0 0.0
        %3858 = vmatpush1.msra.mxu0 0.0
        %3859 = vmatprep.mubr.f32.mxu0 0.0
        %3860 = vmatmul.mubr.f32.gmra.mrb[0].mxu0 %v3784
        %v3861 = vpop.f32.mrb[0].mxu0
        %v3862 = vadd.f32 %v3781, %v3861
        %v3863 = vpop.f32.mrb[0].mxu0
        %3864 = vmatprep.mubr.f32.mxu0 0.0
        %3865 = vmatmul.mubr.f32.gmra.mrb[0].mxu0 %v3787
        %v3866 = vpop.f32.mrb[0].mxu0
        %v3867 = vadd.f32 %v3781, %v3866
        %v3868 = vpop.f32.mrb[0].mxu0
        %3869 = vmatprep.mubr.f32.mxu0 0.0
        %3870 = vmatmul.mubr.f32.gmra.mrb[0].mxu0 %v3790
        %v3871 = vpop.f32.mrb[0].mxu0
        %v3872 = vadd.f32 %v3781, %v3871
        %v3873 = vpop.f32.mrb[0].mxu0
        %3874 = vmatprep.mubr.f32.mxu0 0.0
        %3875 = vmatmul.mubr.f32.gmra.mrb[0].mxu0 %v3793
        %v3876 = vpop.f32.mrb[0].mxu0
        %v3877 = vadd.f32 %v3781, %v3876
        %v3878 = vpop.f32.mrb[0].mxu0
        %3879 = vdwg.mxu0
        %v3880 = vmax.f32 %v3862, 0.0
        %v3881 = vmax.f32 %v3867, 0.0
        %v3882 = vmax.f32 %v3872, 0.0
        %v3883 = vmax.f32 %v3877, 0.0
        %v3884 = vld [vmem:[%s1438] sm:$0xff]
        %v3885 = vld [vmem:[%s1438 + $0x8] sm:$0xff]
        %v3886 = vld [vmem:[%s1438 + $0x10] sm:$0xff]
        %v3887 = vld [vmem:[%s1438 + $0x18] sm:$0xff]
        %v3888 = vld [vmem:[%s1438 + $0x20] sm:$0xff]
        %v3889 = vld [vmem:[%s1438 + $0x28] sm:$0xff]
        %v3890 = vld [vmem:[%s1438 + $0x30] sm:$0xff]
        %v3891 = vld [vmem:[%s1438 + $0x38] sm:$0xff]
        %v3892 = vld [vmem:[%s1438 + $0x40] sm:$0xff]
        %v3893 = vld [vmem:[%s1438 + $0x48] sm:$0xff]
        %v3894 = vld [vmem:[%s1438 + $0x50] sm:$0xff]
        %v3895 = vld [vmem:[%s1438 + $0x58] sm:$0xff]
        %v3896 = vld [vmem:[%s1438 + $0x60] sm:$0xff]
        %v3897 = vld [vmem:[%s1438 + $0x68] sm:$0xff]
        %v3898 = vld [vmem:[%s1438 + $0x70] sm:$0xff]
        %v3899 = vld [vmem:[%s1438 + $0x78] sm:$0xff]
        %v3900 = vld [vmem:[%s1441] sm:$0x1]
        %v3902 = vlaneseq
        %v3903 = vshrl.u32 %v3902, 7
        %v3904 = vsub.s32 0, %v3903
        %v3905 = vrot.slane %v3900, %v3904
        %3907 = vmatprep.subr.mxu0 0.0
        %3908 = vmatpush1.msra.mxu0 %v3884
        %3909 = vmatprep.subr.mxu0 0.0
        %3910 = vmatpush1.msra.mxu0 %v3885
        %3911 = vmatprep.subr.mxu0 0.0
        %3912 = vmatpush1.msra.mxu0 %v3886
        %3913 = vmatprep.subr.mxu0 0.0
        %3914 = vmatpush1.msra.mxu0 %v3887
        %3915 = vmatprep.subr.mxu0 0.0
        %3916 = vmatpush1.msra.mxu0 %v3888
        %3917 = vmatprep.subr.mxu0 0.0
        %3918 = vmatpush1.msra.mxu0 %v3889
        %3919 = vmatprep.subr.mxu0 0.0
        %3920 = vmatpush1.msra.mxu0 %v3890
        %3921 = vmatprep.subr.mxu0 0.0
        %3922 = vmatpush1.msra.mxu0 %v3891
        %3923 = vmatprep.subr.mxu0 0.0
        %3924 = vmatpush1.msra.mxu0 %v3892
        %3925 = vmatprep.subr.mxu0 0.0
        %3926 = vmatpush1.msra.mxu0 %v3893
        %3927 = vmatprep.subr.mxu0 0.0
        %3928 = vmatpush1.msra.mxu0 %v3894
        %3929 = vmatprep.subr.mxu0 0.0
        %3930 = vmatpush1.msra.mxu0 %v3895
        %3931 = vmatprep.subr.mxu0 0.0
        %3932 = vmatpush1.msra.mxu0 %v3896
        %3933 = vmatprep.subr.mxu0 0.0
        %3934 = vmatpush1.msra.mxu0 %v3897
        %3935 = vmatprep.subr.mxu0 0.0
        %3936 = vmatpush1.msra.mxu0 %v3898
        %3937 = vmatprep.subr.mxu0 0.0
        %3938 = vmatpush1.msra.mxu0 %v3899
        %3939 = vmatprep.subr.mxu0 0.0
        %3940 = vmatpush1.msra.mxu0 0.0
        %3941 = vmatprep.subr.mxu0 0.0
        %3942 = vmatpush1.msra.mxu0 0.0
        %3943 = vmatprep.subr.mxu0 0.0
        %3944 = vmatpush1.msra.mxu0 0.0
        %3945 = vmatprep.subr.mxu0 0.0
        %3946 = vmatpush1.msra.mxu0 0.0
        %3947 = vmatprep.subr.mxu0 0.0
        %3948 = vmatpush1.msra.mxu0 0.0
        %3949 = vmatprep.subr.mxu0 0.0
        %3950 = vmatpush1.msra.mxu0 0.0
        %3951 = vmatprep.subr.mxu0 0.0
        %3952 = vmatpush1.msra.mxu0 0.0
        %3953 = vmatprep.subr.mxu0 0.0
        %3954 = vmatpush1.msra.mxu0 0.0
        %3955 = vmatprep.subr.mxu0 0.0
        %3956 = vmatpush1.msra.mxu0 0.0
        %3957 = vmatprep.subr.mxu0 0.0
        %3958 = vmatpush1.msra.mxu0 0.0
        %3959 = vmatprep.subr.mxu0 0.0
        %3960 = vmatpush1.msra.mxu0 0.0
        %3961 = vmatprep.subr.mxu0 0.0
        %3962 = vmatpush1.msra.mxu0 0.0
        %3963 = vmatprep.subr.mxu0 0.0
        %3964 = vmatpush1.msra.mxu0 0.0
        %3965 = vmatprep.subr.mxu0 0.0
        %3966 = vmatpush1.msra.mxu0 0.0
        %3967 = vmatprep.subr.mxu0 0.0
        %3968 = vmatpush1.msra.mxu0 0.0
        %3969 = vmatprep.subr.mxu0 0.0
        %3970 = vmatpush1.msra.mxu0 0.0
        %3971 = vmatprep.mubr.f32.mxu0 0.0
        %3972 = vmatmul.mubr.f32.gmra.mrb[0].mxu0 %v3880
        %v3973 = vpop.f32.mrb[0].mxu0
        %v3974 = vadd.f32 %v3905, %v3973
        %v3975 = vpop.f32.mrb[0].mxu0
        %3976 = vmatprep.mubr.f32.mxu0 0.0
        %3977 = vmatmul.mubr.f32.gmra.mrb[0].mxu0 %v3881
        %v3978 = vpop.f32.mrb[0].mxu0
        %v3979 = vadd.f32 %v3905, %v3978
        %v3980 = vpop.f32.mrb[0].mxu0
        %3981 = vmatprep.mubr.f32.mxu0 0.0
        %3982 = vmatmul.mubr.f32.gmra.mrb[0].mxu0 %v3882
        %v3983 = vpop.f32.mrb[0].mxu0
        %v3984 = vadd.f32 %v3905, %v3983
        %v3985 = vpop.f32.mrb[0].mxu0
        %3986 = vmatprep.mubr.f32.mxu0 0.0
        %3987 = vmatmul.mubr.f32.gmra.mrb[0].mxu0 %v3883
        %v3988 = vpop.f32.mrb[0].mxu0
        %v3989 = vadd.f32 %v3905, %v3988
        %v3990 = vpop.f32.mrb[0].mxu0
        %3991 = vdwg.mxu0
        %v3992 = vadd.f32 %v3764, %v3974
        %v3993 = vadd.f32 %v3765, %v3979
        %v3994 = vadd.f32 %v3766, %v3984
        %v3995 = vadd.f32 %v3767, %v3989
        %v3996 = vld [vmem:[%s1273] sm:$0x1]
        %v3997 = vld [vmem:[%s1281] sm:$0x1]
        %v3998 = vsel %vm1980, %v3992, 0.0
        %3999 = vadd.xlane.f32.xlu0 %v3998
        %v4000 = vpop.xlane.xlu0 %3999
        %v4001 = vsel %vm1980, %v3993, 0.0
        %4002 = vadd.xlane.f32.xlu0 %v4001
        %v4003 = vpop.xlane.xlu0 %4002
        %v4004 = vsel %vm1980, %v3994, 0.0
        %4005 = vadd.xlane.f32.xlu0 %v4004
        %v4006 = vpop.xlane.xlu0 %4005
        %v4007 = vsel %vm1980, %v3995, 0.0
        %4008 = vadd.xlane.f32.xlu0 %v4007
        %v4009 = vpop.xlane.xlu0 %4008
        %v4010 = vmul.f32 %v4000, %v3707
        %v4011 = vmul.f32 %v4003, %v3707
        %v4012 = vmul.f32 %v4006, %v3707
        %v4013 = vmul.f32 %v4009, %v3707
        %v4014 = vsub.f32 %v3992, %v4010
        %v4015 = vsub.f32 %v3993, %v4011
        %v4016 = vsub.f32 %v3994, %v4012
        %v4017 = vsub.f32 %v3995, %v4013
        %v4018 = vmul.f32 %v4014, %v4014
        %v4019 = vmul.f32 %v4015, %v4015
        %v4020 = vmul.f32 %v4016, %v4016
        %v4021 = vmul.f32 %v4017, %v4017
        %v4022 = vsel %vm1980, %v4018, 0.0
        %4023 = vadd.xlane.f32.xlu0 %v4022
        %v4024 = vpop.xlane.xlu0 %4023
        %v4025 = vsel %vm1980, %v4019, 0.0
        %4026 = vadd.xlane.f32.xlu0 %v4025
        %v4027 = vpop.xlane.xlu0 %4026
        %v4028 = vsel %vm1980, %v4020, 0.0
        %4029 = vadd.xlane.f32.xlu0 %v4028
        %v4030 = vpop.xlane.xlu0 %4029
        %v4031 = vsel %vm1980, %v4021, 0.0
        %4032 = vadd.xlane.f32.xlu0 %v4031
        %v4033 = vpop.xlane.xlu0 %4032
        %v4034 = vmul.f32 %v4024, %v3707
        %v4035 = vmul.f32 %v4027, %v3707
        %v4036 = vmul.f32 %v4030, %v3707
        %v4037 = vmul.f32 %v4033, %v3707
        %v4038 = vadd.f32 %v4034, 1e-05
        %v4039 = vadd.f32 %v4035, 1e-05
        %v4040 = vadd.f32 %v4036, 1e-05
        %v4041 = vadd.f32 %v4037, 1e-05
        %v4042 = vrsqrt.pop %v4038
        %v4043 = vrsqrt.pop %v4039
        %v4044 = vrsqrt.pop %v4040
        %v4045 = vrsqrt.pop %v4041
        %v4046 = vmul.f32 %v4014, %v4042
        %v4047 = vmul.f32 %v4015, %v4043
        %v4048 = vmul.f32 %v4016, %v4044
        %v4049 = vmul.f32 %v4017, %v4045
        %v4051 = vlaneseq
        %v4052 = vshrl.u32 %v4051, 7
        %v4053 = vsub.s32 0, %v4052
        %v4054 = vrot.slane %v3996, %v4053
        %v4056 = vmul.f32 %v4046, %v4054
        %v4057 = vmul.f32 %v4047, %v4054
        %v4058 = vmul.f32 %v4048, %v4054
        %v4059 = vmul.f32 %v4049, %v4054
        %v4061 = vlaneseq
        %v4062 = vshrl.u32 %v4061, 7
        %v4063 = vsub.s32 0, %v4062
        %v4064 = vrot.slane %v3997, %v4063
        %v4066 = vadd.f32 %v4056, %v4064
        %v4067 = vadd.f32 %v4057, %v4064
        %v4068 = vadd.f32 %v4058, %v4064
        %v4069 = vadd.f32 %v4059, %v4064
        %4070 = vst.msk [vmem:[#allocation2] sm:$0xff] %vm1980, %v4066
        %4071 = vst.msk [vmem:[#allocation2 + $0x8] sm:$0xff] %vm1980, %v4067
        %4072 = vst.msk [vmem:[#allocation2 + $0x10] sm:$0xff] %vm1980, %v4068
        %4073 = vst.msk [vmem:[#allocation2 + $0x18] sm:$0xff] %vm1980, %v4069
        %p4074 = scmp.eq.s32.totalorder %s90, 1
        // Predicated region
        $region225: #{tpu_custom_call.1} parent=159 // pred_check
          %p4075 = pneg %p4074
        $region226: #{tpu_custom_call.1} parent=159 // pred_check_branch
          %4077 = sbr.rel (%p4075) target = $region228
        $region227: #{tpu_custom_call.1} parent=159 // pred_region
          %v4078 = vld [vmem:[%s17] sm:$0xff]
          %v4079 = vld [vmem:[%s17 + $0x8] sm:$0xff]
          %v4080 = vld [vmem:[%s17 + $0x10] sm:$0xff]
          %v4081 = vld [vmem:[%s17 + $0x18] sm:$0xff]
          %v4082 = vld [vmem:[%s17 + $0x20] sm:$0xff]
          %v4083 = vld [vmem:[%s17 + $0x28] sm:$0xff]
          %v4084 = vld [vmem:[%s17 + $0x30] sm:$0xff]
          %v4085 = vld [vmem:[%s17 + $0x38] sm:$0xff]
          %v4086 = vld [vmem:[#allocation11] sm:$0x1]
          %v4088 = vlaneseq
          %v4089 = vshrl.u32 %v4088, 7
          %v4090 = vsub.s32 0, %v4089
          %v4091 = vrot.slane %v4086, %v4090
          %v4094 = vsel %vm1980, %v4066, 0
          %v4097 = vsel %vm1980, %v4067, 0
          %v4100 = vsel %vm1980, %v4068, 0
          %v4103 = vsel %vm1980, %v4069, 0
          %4105 = vmatprep.subr.mxu0 0.0
          %4106 = vmatpush1.msra.mxu0 %v4078
          %4107 = vmatprep.subr.mxu0 0.0
          %4108 = vmatpush1.msra.mxu0 %v4079
          %4109 = vmatprep.subr.mxu0 0.0
          %4110 = vmatpush1.msra.mxu0 %v4080
          %4111 = vmatprep.subr.mxu0 0.0
          %4112 = vmatpush1.msra.mxu0 %v4081
          %4113 = vmatprep.subr.mxu0 0.0
          %4114 = vmatpush1.msra.mxu0 %v4082
          %4115 = vmatprep.subr.mxu0 0.0
          %4116 = vmatpush1.msra.mxu0 %v4083
          %4117 = vmatprep.subr.mxu0 0.0
          %4118 = vmatpush1.msra.mxu0 %v4084
          %4119 = vmatprep.subr.mxu0 0.0
          %4120 = vmatpush1.msra.mxu0 %v4085
          %4121 = vmatprep.subr.mxu0 0.0
          %4122 = vmatpush1.msra.mxu0 0.0
          %4123 = vmatprep.subr.mxu0 0.0
          %4124 = vmatpush1.msra.mxu0 0.0
          %4125 = vmatprep.subr.mxu0 0.0
          %4126 = vmatpush1.msra.mxu0 0.0
          %4127 = vmatprep.subr.mxu0 0.0
          %4128 = vmatpush1.msra.mxu0 0.0
          %4129 = vmatprep.subr.mxu0 0.0
          %4130 = vmatpush1.msra.mxu0 0.0
          %4131 = vmatprep.subr.mxu0 0.0
          %4132 = vmatpush1.msra.mxu0 0.0
          %4133 = vmatprep.subr.mxu0 0.0
          %4134 = vmatpush1.msra.mxu0 0.0
          %4135 = vmatprep.subr.mxu0 0.0
          %4136 = vmatpush1.msra.mxu0 0.0
          %4137 = vmatprep.subr.mxu0 0.0
          %4138 = vmatpush1.msra.mxu0 0.0
          %4139 = vmatprep.subr.mxu0 0.0
          %4140 = vmatpush1.msra.mxu0 0.0
          %4141 = vmatprep.subr.mxu0 0.0
          %4142 = vmatpush1.msra.mxu0 0.0
          %4143 = vmatprep.subr.mxu0 0.0
          %4144 = vmatpush1.msra.mxu0 0.0
          %4145 = vmatprep.subr.mxu0 0.0
          %4146 = vmatpush1.msra.mxu0 0.0
          %4147 = vmatprep.subr.mxu0 0.0
          %4148 = vmatpush1.msra.mxu0 0.0
          %4149 = vmatprep.subr.mxu0 0.0
          %4150 = vmatpush1.msra.mxu0 0.0
          %4151 = vmatprep.subr.mxu0 0.0
          %4152 = vmatpush1.msra.mxu0 0.0
          %4153 = vmatprep.subr.mxu0 0.0
          %4154 = vmatpush1.msra.mxu0 0.0
          %4155 = vmatprep.subr.mxu0 0.0
          %4156 = vmatpush1.msra.mxu0 0.0
          %4157 = vmatprep.subr.mxu0 0.0
          %4158 = vmatpush1.msra.mxu0 0.0
          %4159 = vmatprep.subr.mxu0 0.0
          %4160 = vmatpush1.msra.mxu0 0.0
          %4161 = vmatprep.subr.mxu0 0.0
          %4162 = vmatpush1.msra.mxu0 0.0
          %4163 = vmatprep.subr.mxu0 0.0
          %4164 = vmatpush1.msra.mxu0 0.0
          %4165 = vmatprep.subr.mxu0 0.0
          %4166 = vmatpush1.msra.mxu0 0.0
          %4167 = vmatprep.subr.mxu0 0.0
          %4168 = vmatpush1.msra.mxu0 0.0
          %4169 = vmatprep.mubr.f32.mxu0 0.0
          %4170 = vmatmul.mubr.f32.gmra.mrb[0].mxu0 %v4094
          %v4171 = vpop.f32.mrb[0].mxu0
          %v4172 = vadd.f32 %v4091, %v4171
          %v4173 = vpop.f32.mrb[0].mxu0
          %4174 = vmatprep.mubr.f32.mxu0 0.0
          %4175 = vmatmul.mubr.f32.gmra.mrb[0].mxu0 %v4097
          %v4176 = vpop.f32.mrb[0].mxu0
          %v4177 = vadd.f32 %v4091, %v4176
          %v4178 = vpop.f32.mrb[0].mxu0
          %4179 = vmatprep.mubr.f32.mxu0 0.0
          %4180 = vmatmul.mubr.f32.gmra.mrb[0].mxu0 %v4100
          %v4181 = vpop.f32.mrb[0].mxu0
          %v4182 = vadd.f32 %v4091, %v4181
          %v4183 = vpop.f32.mrb[0].mxu0
          %4184 = vmatprep.mubr.f32.mxu0 0.0
          %4185 = vmatmul.mubr.f32.gmra.mrb[0].mxu0 %v4103
          %v4186 = vpop.f32.mrb[0].mxu0
          %v4187 = vadd.f32 %v4091, %v4186
          %v4188 = vpop.f32.mrb[0].mxu0
          %4189 = vdwg.mxu0
          %v4190 = vld [vmem:[%s21] sm:$0xff]
          %v4191 = vld [vmem:[%s21 + $0x8] sm:$0xff]
          %v4192 = vld [vmem:[%s21 + $0x10] sm:$0xff]
          %v4193 = vld [vmem:[%s21 + $0x18] sm:$0xff]
          %v4194 = vld [vmem:[%s21 + $0x20] sm:$0x7]
          %v4195 = vld [vmem:[#allocation12] sm:$0x1]
          %v4197 = vlaneseq
          %v4198 = vshrl.u32 %v4197, 7
          %v4199 = vsub.s32 0, %v4198
          %v4200 = vrot.slane %v4195, %v4199
          %vm4202 = vcmask 285696
          %v4204 = vsel %vm4202, %v1442, 0
          %v4207 = vsel %vm4202, %v1443, 0
          %v4210 = vsel %vm4202, %v1444, 0
          %v4213 = vsel %vm4202, %v1445, 0
          %vm4215 = vcmask 1042432
          %v4217 = vsel %vm4215, %v4194, 0
          %4219 = vmatprep.subr.mxu0 0.0
          %4220 = vmatpush1.msra.mxu0 %v4190
          %4221 = vmatprep.subr.mxu0 0.0
          %4222 = vmatpush1.msra.mxu0 %v4191
          %4223 = vmatprep.subr.mxu0 0.0
          %4224 = vmatpush1.msra.mxu0 %v4192
          %4225 = vmatprep.subr.mxu0 0.0
          %4226 = vmatpush1.msra.mxu0 %v4193
          %4227 = vmatprep.subr.mxu0 0.0
          %4228 = vmatpush1.msra.mxu0 %v4217
          %4229 = vmatprep.subr.mxu0 0.0
          %4230 = vmatpush1.msra.mxu0 0.0
          %4231 = vmatprep.subr.mxu0 0.0
          %4232 = vmatpush1.msra.mxu0 0.0
          %4233 = vmatprep.subr.mxu0 0.0
          %4234 = vmatpush1.msra.mxu0 0.0
          %4235 = vmatprep.subr.mxu0 0.0
          %4236 = vmatpush1.msra.mxu0 0.0
          %4237 = vmatprep.subr.mxu0 0.0
          %4238 = vmatpush1.msra.mxu0 0.0
          %4239 = vmatprep.subr.mxu0 0.0
          %4240 = vmatpush1.msra.mxu0 0.0
          %4241 = vmatprep.subr.mxu0 0.0
          %4242 = vmatpush1.msra.mxu0 0.0
          %4243 = vmatprep.subr.mxu0 0.0
          %4244 = vmatpush1.msra.mxu0 0.0
          %4245 = vmatprep.subr.mxu0 0.0
          %4246 = vmatpush1.msra.mxu0 0.0
          %4247 = vmatprep.subr.mxu0 0.0
          %4248 = vmatpush1.msra.mxu0 0.0
          %4249 = vmatprep.subr.mxu0 0.0
          %4250 = vmatpush1.msra.mxu0 0.0
          %4251 = vmatprep.subr.mxu0 0.0
          %4252 = vmatpush1.msra.mxu0 0.0
          %4253 = vmatprep.subr.mxu0 0.0
          %4254 = vmatpush1.msra.mxu0 0.0
          %4255 = vmatprep.subr.mxu0 0.0
          %4256 = vmatpush1.msra.mxu0 0.0
          %4257 = vmatprep.subr.mxu0 0.0
          %4258 = vmatpush1.msra.mxu0 0.0
          %4259 = vmatprep.subr.mxu0 0.0
          %4260 = vmatpush1.msra.mxu0 0.0
          %4261 = vmatprep.subr.mxu0 0.0
          %4262 = vmatpush1.msra.mxu0 0.0
          %4263 = vmatprep.subr.mxu0 0.0
          %4264 = vmatpush1.msra.mxu0 0.0
          %4265 = vmatprep.subr.mxu0 0.0
          %4266 = vmatpush1.msra.mxu0 0.0
          %4267 = vmatprep.subr.mxu0 0.0
          %4268 = vmatpush1.msra.mxu0 0.0
          %4269 = vmatprep.subr.mxu0 0.0
          %4270 = vmatpush1.msra.mxu0 0.0
          %4271 = vmatprep.subr.mxu0 0.0
          %4272 = vmatpush1.msra.mxu0 0.0
          %4273 = vmatprep.subr.mxu0 0.0
          %4274 = vmatpush1.msra.mxu0 0.0
          %4275 = vmatprep.subr.mxu0 0.0
          %4276 = vmatpush1.msra.mxu0 0.0
          %4277 = vmatprep.subr.mxu0 0.0
          %4278 = vmatpush1.msra.mxu0 0.0
          %4279 = vmatprep.subr.mxu0 0.0
          %4280 = vmatpush1.msra.mxu0 0.0
          %4281 = vmatprep.subr.mxu0 0.0
          %4282 = vmatpush1.msra.mxu0 0.0
          %4283 = vmatprep.mubr.f32.mxu0 0.0
          %4284 = vmatmul.mubr.f32.gmra.mrb[0].mxu0 %v4204
          %v4285 = vpop.f32.mrb[0].mxu0
          %v4286 = vadd.f32 %v4200, %v4285
          %v4287 = vpop.f32.mrb[0].mxu0
          %4288 = vmatprep.mubr.f32.mxu0 0.0
          %4289 = vmatmul.mubr.f32.gmra.mrb[0].mxu0 %v4207
          %v4290 = vpop.f32.mrb[0].mxu0
          %v4291 = vadd.f32 %v4200, %v4290
          %v4292 = vpop.f32.mrb[0].mxu0
          %4293 = vmatprep.mubr.f32.mxu0 0.0
          %4294 = vmatmul.mubr.f32.gmra.mrb[0].mxu0 %v4210
          %v4295 = vpop.f32.mrb[0].mxu0
          %v4296 = vadd.f32 %v4200, %v4295
          %v4297 = vpop.f32.mrb[0].mxu0
          %4298 = vmatprep.mubr.f32.mxu0 0.0
          %4299 = vmatmul.mubr.f32.gmra.mrb[0].mxu0 %v4213
          %v4300 = vpop.f32.mrb[0].mxu0
          %v4301 = vadd.f32 %v4200, %v4300
          %v4302 = vpop.f32.mrb[0].mxu0
          %4303 = vdwg.mxu0
          %v4304 = vxor.u32 %v4286, 2147483648
          %v4305 = vxor.u32 %v4291, 2147483648
          %v4306 = vxor.u32 %v4296, 2147483648
          %v4307 = vxor.u32 %v4301, 2147483648
          %v4308 = vmul.f32 %v4304, 1.442695
          %v4309 = vpow.pop %v4308
          %v4310 = vmul.f32 %v4305, 1.442695
          %v4311 = vpow.pop %v4310
          %v4312 = vmul.f32 %v4306, 1.442695
          %v4313 = vpow.pop %v4312
          %v4314 = vmul.f32 %v4307, 1.442695
          %v4315 = vpow.pop %v4314
          %v4316 = vadd.f32 %v4309, 1.0
          %v4317 = vadd.f32 %v4311, 1.0
          %v4318 = vadd.f32 %v4313, 1.0
          %v4319 = vadd.f32 %v4315, 1.0
          %v4320 = vrcp.pop %v4316
          %v4321 = vmul.f32 1.0, %v4320
          %v4322 = vrcp.pop %v4317
          %v4323 = vmul.f32 1.0, %v4322
          %v4324 = vrcp.pop %v4318
          %v4325 = vmul.f32 1.0, %v4324
          %v4326 = vrcp.pop %v4319
          %v4327 = vmul.f32 1.0, %v4326
          %v4328 = vld [vmem:[%s25] sm:$0xff]
          %v4329 = vld [vmem:[%s25 + $0x8] sm:$0xff]
          %v4330 = vld [vmem:[%s25 + $0x10] sm:$0xff]
          %v4331 = vld [vmem:[%s25 + $0x18] sm:$0xff]
          %v4332 = vld [vmem:[%s25 + $0x20] sm:$0x7]
          %v4334 = vsel %vm4215, %v4332, 0
          %4336 = vmatprep.subr.mxu0 0.0
          %4337 = vmatpush1.msra.mxu0 %v4328
          %4338 = vmatprep.subr.mxu0 0.0
          %4339 = vmatpush1.msra.mxu0 %v4329
          %4340 = vmatprep.subr.mxu0 0.0
          %4341 = vmatpush1.msra.mxu0 %v4330
          %4342 = vmatprep.subr.mxu0 0.0
          %4343 = vmatpush1.msra.mxu0 %v4331
          %4344 = vmatprep.subr.mxu0 0.0
          %4345 = vmatpush1.msra.mxu0 %v4334
          %4346 = vmatprep.subr.mxu0 0.0
          %4347 = vmatpush1.msra.mxu0 0.0
          %4348 = vmatprep.subr.mxu0 0.0
          %4349 = vmatpush1.msra.mxu0 0.0
          %4350 = vmatprep.subr.mxu0 0.0
          %4351 = vmatpush1.msra.mxu0 0.0
          %4352 = vmatprep.subr.mxu0 0.0
          %4353 = vmatpush1.msra.mxu0 0.0
          %4354 = vmatprep.subr.mxu0 0.0
          %4355 = vmatpush1.msra.mxu0 0.0
          %4356 = vmatprep.subr.mxu0 0.0
          %4357 = vmatpush1.msra.mxu0 0.0
          %4358 = vmatprep.subr.mxu0 0.0
          %4359 = vmatpush1.msra.mxu0 0.0
          %4360 = vmatprep.subr.mxu0 0.0
          %4361 = vmatpush1.msra.mxu0 0.0
          %4362 = vmatprep.subr.mxu0 0.0
          %4363 = vmatpush1.msra.mxu0 0.0
          %4364 = vmatprep.subr.mxu0 0.0
          %4365 = vmatpush1.msra.mxu0 0.0
          %4366 = vmatprep.subr.mxu0 0.0
          %4367 = vmatpush1.msra.mxu0 0.0
          %4368 = vmatprep.subr.mxu0 0.0
          %4369 = vmatpush1.msra.mxu0 0.0
          %4370 = vmatprep.subr.mxu0 0.0
          %4371 = vmatpush1.msra.mxu0 0.0
          %4372 = vmatprep.subr.mxu0 0.0
          %4373 = vmatpush1.msra.mxu0 0.0
          %4374 = vmatprep.subr.mxu0 0.0
          %4375 = vmatpush1.msra.mxu0 0.0
          %4376 = vmatprep.subr.mxu0 0.0
          %4377 = vmatpush1.msra.mxu0 0.0
          %4378 = vmatprep.subr.mxu0 0.0
          %4379 = vmatpush1.msra.mxu0 0.0
          %4380 = vmatprep.subr.mxu0 0.0
          %4381 = vmatpush1.msra.mxu0 0.0
          %4382 = vmatprep.subr.mxu0 0.0
          %4383 = vmatpush1.msra.mxu0 0.0
          %4384 = vmatprep.subr.mxu0 0.0
          %4385 = vmatpush1.msra.mxu0 0.0
          %4386 = vmatprep.subr.mxu0 0.0
          %4387 = vmatpush1.msra.mxu0 0.0
          %4388 = vmatprep.subr.mxu0 0.0
          %4389 = vmatpush1.msra.mxu0 0.0
          %4390 = vmatprep.subr.mxu0 0.0
          %4391 = vmatpush1.msra.mxu0 0.0
          %4392 = vmatprep.subr.mxu0 0.0
          %4393 = vmatpush1.msra.mxu0 0.0
          %4394 = vmatprep.subr.mxu0 0.0
          %4395 = vmatpush1.msra.mxu0 0.0
          %4396 = vmatprep.subr.mxu0 0.0
          %4397 = vmatpush1.msra.mxu0 0.0
          %4398 = vmatprep.subr.mxu0 0.0
          %4399 = vmatpush1.msra.mxu0 0.0
          %4400 = vmatprep.mubr.f32.mxu0 0.0
          %4401 = vmatmul.mubr.f32.gmra.mrb[0].mxu0 %v4204
          %v4402 = vpop.f32.mrb[0].mxu0
          %v4403 = vadd.f32 0.0, %v4402
          %v4404 = vpop.f32.mrb[0].mxu0
          %4405 = vmatprep.mubr.f32.mxu0 0.0
          %4406 = vmatmul.mubr.f32.gmra.mrb[0].mxu0 %v4207
          %v4407 = vpop.f32.mrb[0].mxu0
          %v4408 = vadd.f32 0.0, %v4407
          %v4409 = vpop.f32.mrb[0].mxu0
          %4410 = vmatprep.mubr.f32.mxu0 0.0
          %4411 = vmatmul.mubr.f32.gmra.mrb[0].mxu0 %v4210
          %v4412 = vpop.f32.mrb[0].mxu0
          %v4413 = vadd.f32 0.0, %v4412
          %v4414 = vpop.f32.mrb[0].mxu0
          %4415 = vmatprep.mubr.f32.mxu0 0.0
          %4416 = vmatmul.mubr.f32.gmra.mrb[0].mxu0 %v4213
          %v4417 = vpop.f32.mrb[0].mxu0
          %v4418 = vadd.f32 0.0, %v4417
          %v4419 = vpop.f32.mrb[0].mxu0
          %4420 = vdwg.mxu0
          %v4421 = vmul.f32 %v4172, %v4321
          %v4422 = vmul.f32 %v4177, %v4323
          %v4423 = vmul.f32 %v4182, %v4325
          %v4424 = vmul.f32 %v4187, %v4327
          %v4425 = vadd.f32 %v4421, %v4403
          %v4426 = vadd.f32 %v4422, %v4408
          %v4427 = vadd.f32 %v4423, %v4413
          %v4428 = vadd.f32 %v4424, %v4418
          %v4429 = vld [vmem:[%s27] sm:$0xff]
          %v4430 = vld [vmem:[%s27 + $0x8] sm:$0xff]
          %v4431 = vld [vmem:[%s27 + $0x10] sm:$0xff]
          %v4432 = vld [vmem:[%s27 + $0x18] sm:$0xff]
          %v4433 = vld [vmem:[#allocation14] sm:$0x1]
          %v4435 = vlaneseq
          %v4436 = vshrl.u32 %v4435, 7
          %v4437 = vsub.s32 0, %v4436
          %v4438 = vrot.slane %v4433, %v4437
          %v4441 = vsel %vm2616, %v4425, 0
          %v4444 = vsel %vm2616, %v4426, 0
          %v4447 = vsel %vm2616, %v4427, 0
          %v4450 = vsel %vm2616, %v4428, 0
          %4452 = vmatprep.subr.mxu0 0.0
          %4453 = vmatpush1.msra.mxu0 %v4429
          %4454 = vmatprep.subr.mxu0 0.0
          %4455 = vmatpush1.msra.mxu0 %v4430
          %4456 = vmatprep.subr.mxu0 0.0
          %4457 = vmatpush1.msra.mxu0 %v4431
          %4458 = vmatprep.subr.mxu0 0.0
          %4459 = vmatpush1.msra.mxu0 %v4432
          %4460 = vmatprep.subr.mxu0 0.0
          %4461 = vmatpush1.msra.mxu0 0.0
          %4462 = vmatprep.subr.mxu0 0.0
          %4463 = vmatpush1.msra.mxu0 0.0
          %4464 = vmatprep.subr.mxu0 0.0
          %4465 = vmatpush1.msra.mxu0 0.0
          %4466 = vmatprep.subr.mxu0 0.0
          %4467 = vmatpush1.msra.mxu0 0.0
          %4468 = vmatprep.subr.mxu0 0.0
          %4469 = vmatpush1.msra.mxu0 0.0
          %4470 = vmatprep.subr.mxu0 0.0
          %4471 = vmatpush1.msra.mxu0 0.0
          %4472 = vmatprep.subr.mxu0 0.0
          %4473 = vmatpush1.msra.mxu0 0.0
          %4474 = vmatprep.subr.mxu0 0.0
          %4475 = vmatpush1.msra.mxu0 0.0
          %4476 = vmatprep.subr.mxu0 0.0
          %4477 = vmatpush1.msra.mxu0 0.0
          %4478 = vmatprep.subr.mxu0 0.0
          %4479 = vmatpush1.msra.mxu0 0.0
          %4480 = vmatprep.subr.mxu0 0.0
          %4481 = vmatpush1.msra.mxu0 0.0
          %4482 = vmatprep.subr.mxu0 0.0
          %4483 = vmatpush1.msra.mxu0 0.0
          %4484 = vmatprep.subr.mxu0 0.0
          %4485 = vmatpush1.msra.mxu0 0.0
          %4486 = vmatprep.subr.mxu0 0.0
          %4487 = vmatpush1.msra.mxu0 0.0
          %4488 = vmatprep.subr.mxu0 0.0
          %4489 = vmatpush1.msra.mxu0 0.0
          %4490 = vmatprep.subr.mxu0 0.0
          %4491 = vmatpush1.msra.mxu0 0.0
          %4492 = vmatprep.subr.mxu0 0.0
          %4493 = vmatpush1.msra.mxu0 0.0
          %4494 = vmatprep.subr.mxu0 0.0
          %4495 = vmatpush1.msra.mxu0 0.0
          %4496 = vmatprep.subr.mxu0 0.0
          %4497 = vmatpush1.msra.mxu0 0.0
          %4498 = vmatprep.subr.mxu0 0.0
          %4499 = vmatpush1.msra.mxu0 0.0
          %4500 = vmatprep.subr.mxu0 0.0
          %4501 = vmatpush1.msra.mxu0 0.0
          %4502 = vmatprep.subr.mxu0 0.0
          %4503 = vmatpush1.msra.mxu0 0.0
          %4504 = vmatprep.subr.mxu0 0.0
          %4505 = vmatpush1.msra.mxu0 0.0
          %4506 = vmatprep.subr.mxu0 0.0
          %4507 = vmatpush1.msra.mxu0 0.0
          %4508 = vmatprep.subr.mxu0 0.0
          %4509 = vmatpush1.msra.mxu0 0.0
          %4510 = vmatprep.subr.mxu0 0.0
          %4511 = vmatpush1.msra.mxu0 0.0
          %4512 = vmatprep.subr.mxu0 0.0
          %4513 = vmatpush1.msra.mxu0 0.0
          %4514 = vmatprep.subr.mxu0 0.0
          %4515 = vmatpush1.msra.mxu0 0.0
          %4516 = vmatprep.mubr.f32.mxu0 0.0
          %4517 = vmatmul.mubr.f32.gmra.mrb[0].mxu0 %v4441
          %v4518 = vpop.f32.mrb[0].mxu0
          %v4519 = vadd.f32 %v4438, %v4518
          %v4520 = vpop.f32.mrb[0].mxu0
          %4521 = vmatprep.mubr.f32.mxu0 0.0
          %4522 = vmatmul.mubr.f32.gmra.mrb[0].mxu0 %v4444
          %v4523 = vpop.f32.mrb[0].mxu0
          %v4524 = vadd.f32 %v4438, %v4523
          %v4525 = vpop.f32.mrb[0].mxu0
          %4526 = vmatprep.mubr.f32.mxu0 0.0
          %4527 = vmatmul.mubr.f32.gmra.mrb[0].mxu0 %v4447
          %v4528 = vpop.f32.mrb[0].mxu0
          %v4529 = vadd.f32 %v4438, %v4528
          %v4530 = vpop.f32.mrb[0].mxu0
          %4531 = vmatprep.mubr.f32.mxu0 0.0
          %4532 = vmatmul.mubr.f32.gmra.mrb[0].mxu0 %v4450
          %v4533 = vpop.f32.mrb[0].mxu0
          %v4534 = vadd.f32 %v4438, %v4533
          %v4535 = vpop.f32.mrb[0].mxu0
          %4536 = vdwg.mxu0
          %v4537 = vld [vmem:[%s31] sm:$0xff]
          %v4538 = vld [vmem:[%s31 + $0x8] sm:$0xff]
          %v4539 = vld [vmem:[%s31 + $0x10] sm:$0xff]
          %v4540 = vld [vmem:[%s31 + $0x18] sm:$0xff]
          %v4541 = vld [vmem:[%s31 + $0x20] sm:$0x7]
          %v4542 = vld [vmem:[#allocation15] sm:$0x1]
          %v4544 = vlaneseq
          %v4545 = vshrl.u32 %v4544, 7
          %v4546 = vsub.s32 0, %v4545
          %v4547 = vrot.slane %v4542, %v4546
          %v4550 = vsel %vm4215, %v4541, 0
          %4552 = vmatprep.subr.mxu0 0.0
          %4553 = vmatpush1.msra.mxu0 %v4537
          %4554 = vmatprep.subr.mxu0 0.0
          %4555 = vmatpush1.msra.mxu0 %v4538
          %4556 = vmatprep.subr.mxu0 0.0
          %4557 = vmatpush1.msra.mxu0 %v4539
          %4558 = vmatprep.subr.mxu0 0.0
          %4559 = vmatpush1.msra.mxu0 %v4540
          %4560 = vmatprep.subr.mxu0 0.0
          %4561 = vmatpush1.msra.mxu0 %v4550
          %4562 = vmatprep.subr.mxu0 0.0
          %4563 = vmatpush1.msra.mxu0 0.0
          %4564 = vmatprep.subr.mxu0 0.0
          %4565 = vmatpush1.msra.mxu0 0.0
          %4566 = vmatprep.subr.mxu0 0.0
          %4567 = vmatpush1.msra.mxu0 0.0
          %4568 = vmatprep.subr.mxu0 0.0
          %4569 = vmatpush1.msra.mxu0 0.0
          %4570 = vmatprep.subr.mxu0 0.0
          %4571 = vmatpush1.msra.mxu0 0.0
          %4572 = vmatprep.subr.mxu0 0.0
          %4573 = vmatpush1.msra.mxu0 0.0
          %4574 = vmatprep.subr.mxu0 0.0
          %4575 = vmatpush1.msra.mxu0 0.0
          %4576 = vmatprep.subr.mxu0 0.0
          %4577 = vmatpush1.msra.mxu0 0.0
          %4578 = vmatprep.subr.mxu0 0.0
          %4579 = vmatpush1.msra.mxu0 0.0
          %4580 = vmatprep.subr.mxu0 0.0
          %4581 = vmatpush1.msra.mxu0 0.0
          %4582 = vmatprep.subr.mxu0 0.0
          %4583 = vmatpush1.msra.mxu0 0.0
          %4584 = vmatprep.subr.mxu0 0.0
          %4585 = vmatpush1.msra.mxu0 0.0
          %4586 = vmatprep.subr.mxu0 0.0
          %4587 = vmatpush1.msra.mxu0 0.0
          %4588 = vmatprep.subr.mxu0 0.0
          %4589 = vmatpush1.msra.mxu0 0.0
          %4590 = vmatprep.subr.mxu0 0.0
          %4591 = vmatpush1.msra.mxu0 0.0
          %4592 = vmatprep.subr.mxu0 0.0
          %4593 = vmatpush1.msra.mxu0 0.0
          %4594 = vmatprep.subr.mxu0 0.0
          %4595 = vmatpush1.msra.mxu0 0.0
          %4596 = vmatprep.subr.mxu0 0.0
          %4597 = vmatpush1.msra.mxu0 0.0
          %4598 = vmatprep.subr.mxu0 0.0
          %4599 = vmatpush1.msra.mxu0 0.0
          %4600 = vmatprep.subr.mxu0 0.0
          %4601 = vmatpush1.msra.mxu0 0.0
          %4602 = vmatprep.subr.mxu0 0.0
          %4603 = vmatpush1.msra.mxu0 0.0
          %4604 = vmatprep.subr.mxu0 0.0
          %4605 = vmatpush1.msra.mxu0 0.0
          %4606 = vmatprep.subr.mxu0 0.0
          %4607 = vmatpush1.msra.mxu0 0.0
          %4608 = vmatprep.subr.mxu0 0.0
          %4609 = vmatpush1.msra.mxu0 0.0
          %4610 = vmatprep.subr.mxu0 0.0
          %4611 = vmatpush1.msra.mxu0 0.0
          %4612 = vmatprep.subr.mxu0 0.0
          %4613 = vmatpush1.msra.mxu0 0.0
          %4614 = vmatprep.subr.mxu0 0.0
          %4615 = vmatpush1.msra.mxu0 0.0
          %4616 = vmatprep.mubr.f32.mxu0 0.0
          %4617 = vmatmul.mubr.f32.gmra.mrb[0].mxu0 %v4204
          %v4618 = vpop.f32.mrb[0].mxu0
          %v4619 = vadd.f32 %v4547, %v4618
          %v4620 = vpop.f32.mrb[0].mxu0
          %4621 = vmatprep.mubr.f32.mxu0 0.0
          %4622 = vmatmul.mubr.f32.gmra.mrb[0].mxu0 %v4207
          %v4623 = vpop.f32.mrb[0].mxu0
          %v4624 = vadd.f32 %v4547, %v4623
          %v4625 = vpop.f32.mrb[0].mxu0
          %4626 = vmatprep.mubr.f32.mxu0 0.0
          %4627 = vmatmul.mubr.f32.gmra.mrb[0].mxu0 %v4210
          %v4628 = vpop.f32.mrb[0].mxu0
          %v4629 = vadd.f32 %v4547, %v4628
          %v4630 = vpop.f32.mrb[0].mxu0
          %4631 = vmatprep.mubr.f32.mxu0 0.0
          %4632 = vmatmul.mubr.f32.gmra.mrb[0].mxu0 %v4213
          %v4633 = vpop.f32.mrb[0].mxu0
          %v4634 = vadd.f32 %v4547, %v4633
          %v4635 = vpop.f32.mrb[0].mxu0
          %4636 = vdwg.mxu0
          %v4637 = vxor.u32 %v4619, 2147483648
          %v4638 = vxor.u32 %v4624, 2147483648
          %v4639 = vxor.u32 %v4629, 2147483648
          %v4640 = vxor.u32 %v4634, 2147483648
          %v4641 = vmul.f32 %v4637, 1.442695
          %v4642 = vpow.pop %v4641
          %v4643 = vmul.f32 %v4638, 1.442695
          %v4644 = vpow.pop %v4643
          %v4645 = vmul.f32 %v4639, 1.442695
          %v4646 = vpow.pop %v4645
          %v4647 = vmul.f32 %v4640, 1.442695
          %v4648 = vpow.pop %v4647
          %v4649 = vadd.f32 %v4642, 1.0
          %v4650 = vadd.f32 %v4644, 1.0
          %v4651 = vadd.f32 %v4646, 1.0
          %v4652 = vadd.f32 %v4648, 1.0
          %v4653 = vrcp.pop %v4649
          %v4654 = vmul.f32 1.0, %v4653
          %v4655 = vrcp.pop %v4650
          %v4656 = vmul.f32 1.0, %v4655
          %v4657 = vrcp.pop %v4651
          %v4658 = vmul.f32 1.0, %v4657
          %v4659 = vrcp.pop %v4652
          %v4660 = vmul.f32 1.0, %v4659
          %v4661 = vld [vmem:[%s35] sm:$0xff]
          %v4662 = vld [vmem:[%s35 + $0x8] sm:$0xff]
          %v4663 = vld [vmem:[%s35 + $0x10] sm:$0xff]
          %v4664 = vld [vmem:[%s35 + $0x18] sm:$0xff]
          %v4665 = vld [vmem:[%s35 + $0x20] sm:$0x7]
          %v4667 = vsel %vm4215, %v4665, 0
          %4669 = vmatprep.subr.mxu0 0.0
          %4670 = vmatpush1.msra.mxu0 %v4661
          %4671 = vmatprep.subr.mxu0 0.0
          %4672 = vmatpush1.msra.mxu0 %v4662
          %4673 = vmatprep.subr.mxu0 0.0
          %4674 = vmatpush1.msra.mxu0 %v4663
          %4675 = vmatprep.subr.mxu0 0.0
          %4676 = vmatpush1.msra.mxu0 %v4664
          %4677 = vmatprep.subr.mxu0 0.0
          %4678 = vmatpush1.msra.mxu0 %v4667
          %4679 = vmatprep.subr.mxu0 0.0
          %4680 = vmatpush1.msra.mxu0 0.0
          %4681 = vmatprep.subr.mxu0 0.0
          %4682 = vmatpush1.msra.mxu0 0.0
          %4683 = vmatprep.subr.mxu0 0.0
          %4684 = vmatpush1.msra.mxu0 0.0
          %4685 = vmatprep.subr.mxu0 0.0
          %4686 = vmatpush1.msra.mxu0 0.0
          %4687 = vmatprep.subr.mxu0 0.0
          %4688 = vmatpush1.msra.mxu0 0.0
          %4689 = vmatprep.subr.mxu0 0.0
          %4690 = vmatpush1.msra.mxu0 0.0
          %4691 = vmatprep.subr.mxu0 0.0
          %4692 = vmatpush1.msra.mxu0 0.0
          %4693 = vmatprep.subr.mxu0 0.0
          %4694 = vmatpush1.msra.mxu0 0.0
          %4695 = vmatprep.subr.mxu0 0.0
          %4696 = vmatpush1.msra.mxu0 0.0
          %4697 = vmatprep.subr.mxu0 0.0
          %4698 = vmatpush1.msra.mxu0 0.0
          %4699 = vmatprep.subr.mxu0 0.0
          %4700 = vmatpush1.msra.mxu0 0.0
          %4701 = vmatprep.subr.mxu0 0.0
          %4702 = vmatpush1.msra.mxu0 0.0
          %4703 = vmatprep.subr.mxu0 0.0
          %4704 = vmatpush1.msra.mxu0 0.0
          %4705 = vmatprep.subr.mxu0 0.0
          %4706 = vmatpush1.msra.mxu0 0.0
          %4707 = vmatprep.subr.mxu0 0.0
          %4708 = vmatpush1.msra.mxu0 0.0
          %4709 = vmatprep.subr.mxu0 0.0
          %4710 = vmatpush1.msra.mxu0 0.0
          %4711 = vmatprep.subr.mxu0 0.0
          %4712 = vmatpush1.msra.mxu0 0.0
          %4713 = vmatprep.subr.mxu0 0.0
          %4714 = vmatpush1.msra.mxu0 0.0
          %4715 = vmatprep.subr.mxu0 0.0
          %4716 = vmatpush1.msra.mxu0 0.0
          %4717 = vmatprep.subr.mxu0 0.0
          %4718 = vmatpush1.msra.mxu0 0.0
          %4719 = vmatprep.subr.mxu0 0.0
          %4720 = vmatpush1.msra.mxu0 0.0
          %4721 = vmatprep.subr.mxu0 0.0
          %4722 = vmatpush1.msra.mxu0 0.0
          %4723 = vmatprep.subr.mxu0 0.0
          %4724 = vmatpush1.msra.mxu0 0.0
          %4725 = vmatprep.subr.mxu0 0.0
          %4726 = vmatpush1.msra.mxu0 0.0
          %4727 = vmatprep.subr.mxu0 0.0
          %4728 = vmatpush1.msra.mxu0 0.0
          %4729 = vmatprep.subr.mxu0 0.0
          %4730 = vmatpush1.msra.mxu0 0.0
          %4731 = vmatprep.subr.mxu0 0.0
          %4732 = vmatpush1.msra.mxu0 0.0
          %4733 = vmatprep.mubr.f32.mxu0 0.0
          %4734 = vmatmul.mubr.f32.gmra.mrb[0].mxu0 %v4204
          %v4735 = vpop.f32.mrb[0].mxu0
          %v4736 = vadd.f32 0.0, %v4735
          %v4737 = vpop.f32.mrb[0].mxu0
          %4738 = vmatprep.mubr.f32.mxu0 0.0
          %4739 = vmatmul.mubr.f32.gmra.mrb[0].mxu0 %v4207
          %v4740 = vpop.f32.mrb[0].mxu0
          %v4741 = vadd.f32 0.0, %v4740
          %v4742 = vpop.f32.mrb[0].mxu0
          %4743 = vmatprep.mubr.f32.mxu0 0.0
          %4744 = vmatmul.mubr.f32.gmra.mrb[0].mxu0 %v4210
          %v4745 = vpop.f32.mrb[0].mxu0
          %v4746 = vadd.f32 0.0, %v4745
          %v4747 = vpop.f32.mrb[0].mxu0
          %4748 = vmatprep.mubr.f32.mxu0 0.0
          %4749 = vmatmul.mubr.f32.gmra.mrb[0].mxu0 %v4213
          %v4750 = vpop.f32.mrb[0].mxu0
          %v4751 = vadd.f32 0.0, %v4750
          %v4752 = vpop.f32.mrb[0].mxu0
          %4753 = vdwg.mxu0
          %v4754 = vmul.f32 %v4519, %v4654
          %v4755 = vmul.f32 %v4524, %v4656
          %v4756 = vmul.f32 %v4529, %v4658
          %v4757 = vmul.f32 %v4534, %v4660
          %v4758 = vadd.f32 %v4754, %v4736
          %v4759 = vadd.f32 %v4755, %v4741
          %v4760 = vadd.f32 %v4756, %v4746
          %v4761 = vadd.f32 %v4757, %v4751
          %v4762 = vld [vmem:[#allocation17] sm:$0xff]
          %v4763 = vld [vmem:[#allocation17 + $0x8] sm:$0xff]
          %v4764 = vld [vmem:[#allocation18] sm:$0x1]
          %v4766 = vlaneseq
          %v4767 = vshrl.u32 %v4766, 7
          %v4768 = vsub.s32 0, %v4767
          %v4769 = vrot.slane %v4764, %v4768
          %vm4771 = vcmask 130048
          %v4773 = vsel %vm4771, %v4758, 0
          %v4776 = vsel %vm4771, %v4759, 0
          %v4779 = vsel %vm4771, %v4760, 0
          %v4782 = vsel %vm4771, %v4761, 0
          %4784 = vmatprep.subr.mxu0 0.0
          %4785 = vmatpush1.msra.mxu0 %v4762
          %4786 = vmatprep.subr.mxu0 0.0
          %4787 = vmatpush1.msra.mxu0 %v4763
          %4788 = vmatprep.subr.mxu0 0.0
          %4789 = vmatpush1.msra.mxu0 0.0
          %4790 = vmatprep.subr.mxu0 0.0
          %4791 = vmatpush1.msra.mxu0 0.0
          %4792 = vmatprep.subr.mxu0 0.0
          %4793 = vmatpush1.msra.mxu0 0.0
          %4794 = vmatprep.subr.mxu0 0.0
          %4795 = vmatpush1.msra.mxu0 0.0
          %4796 = vmatprep.subr.mxu0 0.0
          %4797 = vmatpush1.msra.mxu0 0.0
          %4798 = vmatprep.subr.mxu0 0.0
          %4799 = vmatpush1.msra.mxu0 0.0
          %4800 = vmatprep.subr.mxu0 0.0
          %4801 = vmatpush1.msra.mxu0 0.0
          %4802 = vmatprep.subr.mxu0 0.0
          %4803 = vmatpush1.msra.mxu0 0.0
          %4804 = vmatprep.subr.mxu0 0.0
          %4805 = vmatpush1.msra.mxu0 0.0
          %4806 = vmatprep.subr.mxu0 0.0
          %4807 = vmatpush1.msra.mxu0 0.0
          %4808 = vmatprep.subr.mxu0 0.0
          %4809 = vmatpush1.msra.mxu0 0.0
          %4810 = vmatprep.subr.mxu0 0.0
          %4811 = vmatpush1.msra.mxu0 0.0
          %4812 = vmatprep.subr.mxu0 0.0
          %4813 = vmatpush1.msra.mxu0 0.0
          %4814 = vmatprep.subr.mxu0 0.0
          %4815 = vmatpush1.msra.mxu0 0.0
          %4816 = vmatprep.subr.mxu0 0.0
          %4817 = vmatpush1.msra.mxu0 0.0
          %4818 = vmatprep.subr.mxu0 0.0
          %4819 = vmatpush1.msra.mxu0 0.0
          %4820 = vmatprep.subr.mxu0 0.0
          %4821 = vmatpush1.msra.mxu0 0.0
          %4822 = vmatprep.subr.mxu0 0.0
          %4823 = vmatpush1.msra.mxu0 0.0
          %4824 = vmatprep.subr.mxu0 0.0
          %4825 = vmatpush1.msra.mxu0 0.0
          %4826 = vmatprep.subr.mxu0 0.0
          %4827 = vmatpush1.msra.mxu0 0.0
          %4828 = vmatprep.subr.mxu0 0.0
          %4829 = vmatpush1.msra.mxu0 0.0
          %4830 = vmatprep.subr.mxu0 0.0
          %4831 = vmatpush1.msra.mxu0 0.0
          %4832 = vmatprep.subr.mxu0 0.0
          %4833 = vmatpush1.msra.mxu0 0.0
          %4834 = vmatprep.subr.mxu0 0.0
          %4835 = vmatpush1.msra.mxu0 0.0
          %4836 = vmatprep.subr.mxu0 0.0
          %4837 = vmatpush1.msra.mxu0 0.0
          %4838 = vmatprep.subr.mxu0 0.0
          %4839 = vmatpush1.msra.mxu0 0.0
          %4840 = vmatprep.subr.mxu0 0.0
          %4841 = vmatpush1.msra.mxu0 0.0
          %4842 = vmatprep.subr.mxu0 0.0
          %4843 = vmatpush1.msra.mxu0 0.0
          %4844 = vmatprep.subr.mxu0 0.0
          %4845 = vmatpush1.msra.mxu0 0.0
          %4846 = vmatprep.subr.mxu0 0.0
          %4847 = vmatpush1.msra.mxu0 0.0
          %4848 = vmatprep.mubr.f32.mxu0 0.0
          %4849 = vmatmul.mubr.f32.gmra.mrb[0].mxu0 %v4773
          %v4850 = vpop.f32.mrb[0].mxu0
          %v4851 = vadd.f32 %v4769, %v4850
          %v4852 = vpop.f32.mrb[0].mxu0
          %4853 = vmatprep.mubr.f32.mxu0 0.0
          %4854 = vmatmul.mubr.f32.gmra.mrb[0].mxu0 %v4776
          %v4855 = vpop.f32.mrb[0].mxu0
          %v4856 = vadd.f32 %v4769, %v4855
          %v4857 = vpop.f32.mrb[0].mxu0
          %4858 = vmatprep.mubr.f32.mxu0 0.0
          %4859 = vmatmul.mubr.f32.gmra.mrb[0].mxu0 %v4779
          %v4860 = vpop.f32.mrb[0].mxu0
          %v4861 = vadd.f32 %v4769, %v4860
          %v4862 = vpop.f32.mrb[0].mxu0
          %4863 = vmatprep.mubr.f32.mxu0 0.0
          %4864 = vmatmul.mubr.f32.gmra.mrb[0].mxu0 %v4782
          %v4865 = vpop.f32.mrb[0].mxu0
          %v4866 = vadd.f32 %v4769, %v4865
          %v4867 = vpop.f32.mrb[0].mxu0
          %4868 = vdwg.mxu0
          %v4869 = vld [vmem:[%s41] sm:$0xff]
          %v4870 = vld [vmem:[%s41 + $0x8] sm:$0xff]
          %v4871 = vld [vmem:[%s41 + $0x10] sm:$0xff]
          %v4872 = vld [vmem:[%s41 + $0x18] sm:$0xff]
          %v4873 = vld [vmem:[%s41 + $0x20] sm:$0x7]
          %v4874 = vld [vmem:[#allocation20] sm:$0x1]
          %v4876 = vlaneseq
          %v4877 = vshrl.u32 %v4876, 7
          %v4878 = vsub.s32 0, %v4877
          %v4879 = vrot.slane %v4874, %v4878
          %v4882 = vsel %vm4215, %v4873, 0
          %4884 = vmatprep.subr.mxu0 0.0
          %4885 = vmatpush1.msra.mxu0 %v4869
          %4886 = vmatprep.subr.mxu0 0.0
          %4887 = vmatpush1.msra.mxu0 %v4870
          %4888 = vmatprep.subr.mxu0 0.0
          %4889 = vmatpush1.msra.mxu0 %v4871
          %4890 = vmatprep.subr.mxu0 0.0
          %4891 = vmatpush1.msra.mxu0 %v4872
          %4892 = vmatprep.subr.mxu0 0.0
          %4893 = vmatpush1.msra.mxu0 %v4882
          %4894 = vmatprep.subr.mxu0 0.0
          %4895 = vmatpush1.msra.mxu0 0.0
          %4896 = vmatprep.subr.mxu0 0.0
          %4897 = vmatpush1.msra.mxu0 0.0
          %4898 = vmatprep.subr.mxu0 0.0
          %4899 = vmatpush1.msra.mxu0 0.0
          %4900 = vmatprep.subr.mxu0 0.0
          %4901 = vmatpush1.msra.mxu0 0.0
          %4902 = vmatprep.subr.mxu0 0.0
          %4903 = vmatpush1.msra.mxu0 0.0
          %4904 = vmatprep.subr.mxu0 0.0
          %4905 = vmatpush1.msra.mxu0 0.0
          %4906 = vmatprep.subr.mxu0 0.0
          %4907 = vmatpush1.msra.mxu0 0.0
          %4908 = vmatprep.subr.mxu0 0.0
          %4909 = vmatpush1.msra.mxu0 0.0
          %4910 = vmatprep.subr.mxu0 0.0
          %4911 = vmatpush1.msra.mxu0 0.0
          %4912 = vmatprep.subr.mxu0 0.0
          %4913 = vmatpush1.msra.mxu0 0.0
          %4914 = vmatprep.subr.mxu0 0.0
          %4915 = vmatpush1.msra.mxu0 0.0
          %4916 = vmatprep.subr.mxu0 0.0
          %4917 = vmatpush1.msra.mxu0 0.0
          %4918 = vmatprep.subr.mxu0 0.0
          %4919 = vmatpush1.msra.mxu0 0.0
          %4920 = vmatprep.subr.mxu0 0.0
          %4921 = vmatpush1.msra.mxu0 0.0
          %4922 = vmatprep.subr.mxu0 0.0
          %4923 = vmatpush1.msra.mxu0 0.0
          %4924 = vmatprep.subr.mxu0 0.0
          %4925 = vmatpush1.msra.mxu0 0.0
          %4926 = vmatprep.subr.mxu0 0.0
          %4927 = vmatpush1.msra.mxu0 0.0
          %4928 = vmatprep.subr.mxu0 0.0
          %4929 = vmatpush1.msra.mxu0 0.0
          %4930 = vmatprep.subr.mxu0 0.0
          %4931 = vmatpush1.msra.mxu0 0.0
          %4932 = vmatprep.subr.mxu0 0.0
          %4933 = vmatpush1.msra.mxu0 0.0
          %4934 = vmatprep.subr.mxu0 0.0
          %4935 = vmatpush1.msra.mxu0 0.0
          %4936 = vmatprep.subr.mxu0 0.0
          %4937 = vmatpush1.msra.mxu0 0.0
          %4938 = vmatprep.subr.mxu0 0.0
          %4939 = vmatpush1.msra.mxu0 0.0
          %4940 = vmatprep.subr.mxu0 0.0
          %4941 = vmatpush1.msra.mxu0 0.0
          %4942 = vmatprep.subr.mxu0 0.0
          %4943 = vmatpush1.msra.mxu0 0.0
          %4944 = vmatprep.subr.mxu0 0.0
          %4945 = vmatpush1.msra.mxu0 0.0
          %4946 = vmatprep.subr.mxu0 0.0
          %4947 = vmatpush1.msra.mxu0 0.0
          %4948 = vmatprep.mubr.f32.mxu0 0.0
          %4949 = vmatmul.mubr.f32.gmra.mrb[0].mxu0 %v4204
          %v4950 = vpop.f32.mrb[0].mxu0
          %v4951 = vadd.f32 %v4879, %v4950
          %v4952 = vpop.f32.mrb[0].mxu0
          %4953 = vmatprep.mubr.f32.mxu0 0.0
          %4954 = vmatmul.mubr.f32.gmra.mrb[0].mxu0 %v4207
          %v4955 = vpop.f32.mrb[0].mxu0
          %v4956 = vadd.f32 %v4879, %v4955
          %v4957 = vpop.f32.mrb[0].mxu0
          %4958 = vmatprep.mubr.f32.mxu0 0.0
          %4959 = vmatmul.mubr.f32.gmra.mrb[0].mxu0 %v4210
          %v4960 = vpop.f32.mrb[0].mxu0
          %v4961 = vadd.f32 %v4879, %v4960
          %v4962 = vpop.f32.mrb[0].mxu0
          %4963 = vmatprep.mubr.f32.mxu0 0.0
          %4964 = vmatmul.mubr.f32.gmra.mrb[0].mxu0 %v4213
          %v4965 = vpop.f32.mrb[0].mxu0
          %v4966 = vadd.f32 %v4879, %v4965
          %v4967 = vpop.f32.mrb[0].mxu0
          %4968 = vdwg.mxu0
          %v4969 = vxor.u32 %v4951, 2147483648
          %v4970 = vxor.u32 %v4956, 2147483648
          %v4971 = vxor.u32 %v4961, 2147483648
          %v4972 = vxor.u32 %v4966, 2147483648
          %v4973 = vmul.f32 %v4969, 1.442695
          %v4974 = vpow.pop %v4973
          %v4975 = vmul.f32 %v4970, 1.442695
          %v4976 = vpow.pop %v4975
          %v4977 = vmul.f32 %v4971, 1.442695
          %v4978 = vpow.pop %v4977
          %v4979 = vmul.f32 %v4972, 1.442695
          %v4980 = vpow.pop %v4979
          %v4981 = vadd.f32 %v4974, 1.0
          %v4982 = vadd.f32 %v4976, 1.0
          %v4983 = vadd.f32 %v4978, 1.0
          %v4984 = vadd.f32 %v4980, 1.0
          %v4985 = vrcp.pop %v4981
          %v4986 = vmul.f32 1.0, %v4985
          %v4987 = vrcp.pop %v4982
          %v4988 = vmul.f32 1.0, %v4987
          %v4989 = vrcp.pop %v4983
          %v4990 = vmul.f32 1.0, %v4989
          %v4991 = vrcp.pop %v4984
          %v4992 = vmul.f32 1.0, %v4991
          %v4993 = vld [vmem:[#allocation21] sm:$0xff]
          %v4994 = vld [vmem:[#allocation21 + $0x8] sm:$0xff]
          %v4995 = vld [vmem:[#allocation21 + $0x10] sm:$0xff]
          %v4996 = vld [vmem:[#allocation21 + $0x18] sm:$0xff]
          %v4997 = vld [vmem:[#allocation21 + $0x20] sm:$0x7]
          %v4999 = vsel %vm4215, %v4997, 0
          %5001 = vmatprep.subr.mxu0 0.0
          %5002 = vmatpush1.msra.mxu0 %v4993
          %5003 = vmatprep.subr.mxu0 0.0
          %5004 = vmatpush1.msra.mxu0 %v4994
          %5005 = vmatprep.subr.mxu0 0.0
          %5006 = vmatpush1.msra.mxu0 %v4995
          %5007 = vmatprep.subr.mxu0 0.0
          %5008 = vmatpush1.msra.mxu0 %v4996
          %5009 = vmatprep.subr.mxu0 0.0
          %5010 = vmatpush1.msra.mxu0 %v4999
          %5011 = vmatprep.subr.mxu0 0.0
          %5012 = vmatpush1.msra.mxu0 0.0
          %5013 = vmatprep.subr.mxu0 0.0
          %5014 = vmatpush1.msra.mxu0 0.0
          %5015 = vmatprep.subr.mxu0 0.0
          %5016 = vmatpush1.msra.mxu0 0.0
          %5017 = vmatprep.subr.mxu0 0.0
          %5018 = vmatpush1.msra.mxu0 0.0
          %5019 = vmatprep.subr.mxu0 0.0
          %5020 = vmatpush1.msra.mxu0 0.0
          %5021 = vmatprep.subr.mxu0 0.0
          %5022 = vmatpush1.msra.mxu0 0.0
          %5023 = vmatprep.subr.mxu0 0.0
          %5024 = vmatpush1.msra.mxu0 0.0
          %5025 = vmatprep.subr.mxu0 0.0
          %5026 = vmatpush1.msra.mxu0 0.0
          %5027 = vmatprep.subr.mxu0 0.0
          %5028 = vmatpush1.msra.mxu0 0.0
          %5029 = vmatprep.subr.mxu0 0.0
          %5030 = vmatpush1.msra.mxu0 0.0
          %5031 = vmatprep.subr.mxu0 0.0
          %5032 = vmatpush1.msra.mxu0 0.0
          %5033 = vmatprep.subr.mxu0 0.0
          %5034 = vmatpush1.msra.mxu0 0.0
          %5035 = vmatprep.subr.mxu0 0.0
          %5036 = vmatpush1.msra.mxu0 0.0
          %5037 = vmatprep.subr.mxu0 0.0
          %5038 = vmatpush1.msra.mxu0 0.0
          %5039 = vmatprep.subr.mxu0 0.0
          %5040 = vmatpush1.msra.mxu0 0.0
          %5041 = vmatprep.subr.mxu0 0.0
          %5042 = vmatpush1.msra.mxu0 0.0
          %5043 = vmatprep.subr.mxu0 0.0
          %5044 = vmatpush1.msra.mxu0 0.0
          %5045 = vmatprep.subr.mxu0 0.0
          %5046 = vmatpush1.msra.mxu0 0.0
          %5047 = vmatprep.subr.mxu0 0.0
          %5048 = vmatpush1.msra.mxu0 0.0
          %5049 = vmatprep.subr.mxu0 0.0
          %5050 = vmatpush1.msra.mxu0 0.0
          %5051 = vmatprep.subr.mxu0 0.0
          %5052 = vmatpush1.msra.mxu0 0.0
          %5053 = vmatprep.subr.mxu0 0.0
          %5054 = vmatpush1.msra.mxu0 0.0
          %5055 = vmatprep.subr.mxu0 0.0
          %5056 = vmatpush1.msra.mxu0 0.0
          %5057 = vmatprep.subr.mxu0 0.0
          %5058 = vmatpush1.msra.mxu0 0.0
          %5059 = vmatprep.subr.mxu0 0.0
          %5060 = vmatpush1.msra.mxu0 0.0
          %5061 = vmatprep.subr.mxu0 0.0
          %5062 = vmatpush1.msra.mxu0 0.0
          %5063 = vmatprep.subr.mxu0 0.0
          %5064 = vmatpush1.msra.mxu0 0.0
          %5065 = vmatprep.mubr.f32.mxu0 0.0
          %5066 = vmatmul.mubr.f32.gmra.mrb[0].mxu0 %v4204
          %v5067 = vpop.f32.mrb[0].mxu0
          %v5068 = vadd.f32 0.0, %v5067
          %v5069 = vpop.f32.mrb[0].mxu0
          %5070 = vmatprep.mubr.f32.mxu0 0.0
          %5071 = vmatmul.mubr.f32.gmra.mrb[0].mxu0 %v4207
          %v5072 = vpop.f32.mrb[0].mxu0
          %v5073 = vadd.f32 0.0, %v5072
          %v5074 = vpop.f32.mrb[0].mxu0
          %5075 = vmatprep.mubr.f32.mxu0 0.0
          %5076 = vmatmul.mubr.f32.gmra.mrb[0].mxu0 %v4210
          %v5077 = vpop.f32.mrb[0].mxu0
          %v5078 = vadd.f32 0.0, %v5077
          %v5079 = vpop.f32.mrb[0].mxu0
          %5080 = vmatprep.mubr.f32.mxu0 0.0
          %5081 = vmatmul.mubr.f32.gmra.mrb[0].mxu0 %v4213
          %v5082 = vpop.f32.mrb[0].mxu0
          %v5083 = vadd.f32 0.0, %v5082
          %v5084 = vpop.f32.mrb[0].mxu0
          %5085 = vdwg.mxu0
          %v5086 = vmul.f32 %v4851, %v4986
          %v5087 = vmul.f32 %v4856, %v4988
          %v5088 = vmul.f32 %v4861, %v4990
          %v5089 = vmul.f32 %v4866, %v4992
          %v5090 = vadd.f32 %v5086, %v5068
          %v5091 = vadd.f32 %v5087, %v5073
          %v5092 = vadd.f32 %v5088, %v5078
          %v5093 = vadd.f32 %v5089, %v5083
          %5094 = vst [vmem:[#allocation26] sm:$0xff] %v5090
          %5095 = vst [vmem:[#allocation26 + $0x8] sm:$0xff] %v5091
          %5096 = vst [vmem:[#allocation26 + $0x10] sm:$0xff] %v5092
          %5097 = vst [vmem:[#allocation26 + $0x18] sm:$0xff] %v5093
        $region228: #{tpu_custom_call.1} parent=159 // pred_fallthru
          _
        // Predicated region
        $region229: #{tpu_custom_call.1} parent=159 // pred_check
          %p5098 = pneg %p898
        $region230: #{tpu_custom_call.1} parent=159 // pred_check_branch
          %5100 = sbr.rel (%p5098) target = $region232
        $region231: #{tpu_custom_call.1} parent=159 // pred_region
          %s5102 = ssub.s32 512, 512
          %5103 = vsyncadd [#allocation5], %s5102
          %s5104 = sshll.u32 [#allocation26], 4
          %s5105 = int_to_ptr.vmem [resolvable:$true] %s5104
          %5110 = dma.vmem_to_hbm [thread:$0]  %s5105, 512, %s71, [#allocation5], 128, 128, 8
        $region232: #{tpu_custom_call.1} parent=159 // pred_fallthru
          _
        // Predicated region
        $region233: #{tpu_custom_call.1} parent=159 // pred_check
          %p5111 = pneg %p898
        $region234: #{tpu_custom_call.1} parent=159 // pred_check_branch
          %5113 = sbr.rel (%p5111) target = $region236
        $region235: #{tpu_custom_call.1} parent=159 // pred_region
          %5114 = dma.done [#allocation5], 512
        $region236: #{tpu_custom_call.1} parent=159 // pred_fallthru
          _
      $region160: #{tpu_custom_call.1} parent=5 // pred_fallthru
        _
      %p5115 = scmp.le.s32.totalorder 2, %s85
      // Predicated region
      $region237: #{tpu_custom_call.1} parent=5 // pred_check
        %p5116 = pneg %p5115
      $region238: #{tpu_custom_call.1} parent=5 // pred_check_branch
        %5118 = sbr.rel (%p5116) target = $region240
      $region239: #{tpu_custom_call.1} parent=5 // pred_region
        %s5119 = ssub.s32 %s85, 2
      $region240: #{tpu_custom_call.1} parent=5 // pred_fallthru
        _
    $region6: #{tpu_custom_call.1} parent=1 // loop_footer
      %s89 = sadd.s32 1, %s85
    $region7: #{tpu_custom_call.1} parent=1 // loop_footer_branch
      %84 = sbr.rel target = $region3
    $region8: #{tpu_custom_call.1} parent=1 // loop_exit
      _
    %5120 = vsyncpa [#allocation4], 1
    %s5121 = scalar_lea.sflag [#allocation4], 1
    %5122 = vsyncpa %s5121, 1
    %5123 = vsyncpa [#allocation7], 1
    %5124 = vsyncpa [#allocation10], 1
    %5125 = vsyncpa [#allocation13], 1
    %5126 = vsyncpa [#allocation16], 1
    %5127 = vsyncpa [#allocation19], 1
    %5128 = vsyncpa [#allocation22], 1
    %5129 = vsyncpa [#allocation5], 1
    %s5130 = scalar_lea.sflag [#allocation5], 1
    %5131 = vsyncpa %s5130, 1

</llo_original>
